<compile_context>
chip_gen: v5e
topology: v5e:2x2
jax: 0.10.0
libtpu: 0.0.40
codegen_flags: <defaults>
</compile_context>

<pallas_src>
import functools

import jax
import jax.numpy as jnp
from jax import lax
from jax.experimental import pallas as pl
from jax.experimental.pallas import tpu as pltpu

_LANE = 128
_SUBLANE = 8


def _round_up(x, m):
    return ((x + m - 1) // m) * m


def _cdiv(a, b):
    return (a + b - 1) // b


@functools.lru_cache(maxsize=None)
def _tpu_budget():
    """(vmem_limit_bytes, max_m_tile) chosen per TPU generation."""
    try:
        cap = int(pltpu.get_tpu_info().vmem_capacity_bytes)
    except Exception:
        cap = 64 * 1024 * 1024
    if cap >= 128 * 1024 * 1024:      # v5e / v6e: plenty of VMEM -> bigger tiles
        return 64 * 1024 * 1024, 1024
    return 32 * 1024 * 1024, 512      # v7x (64 MiB physical) / unknown


def _choose_tk(k):
    """K-tile size: full K for small K, else a 2048-ish divisor."""
    if k <= 2048:
        return k
    for tk in (2048, 1024, 512, 256, 128):
        if k % tk == 0:
            return tk
    return k


# ----------------------------- Pallas kernels --------------------------------
def _gemm_stats_kernel(p_ref, w_ref, o_ref, s1_ref, s2_ref, acc_ref):
    """K-tiled GEMM (bf16 in, f32 VMEM accumulator) + per-channel sum / sumsq.

    Grid: (m_group, co_tile, m_tile, k_tile); the last two axes are reductions
    (the output block and the stats blocks stay resident across them).  Bias is
    intentionally omitted: BN mean subtraction cancels it exactly, and it keeps
    zero-padded M rows at exactly zero so they contribute nothing to the stats.
    """
    i = pl.program_id(2)          # M tile inside this M group
    kk = pl.program_id(3)         # K tile

    @pl.when(kk == 0)
    def _():
        acc_ref[...] = jnp.zeros_like(acc_ref)

    acc_ref[...] += jnp.dot(p_ref[...], w_ref[...],
                            preferred_element_type=jnp.float32)

    @pl.when((i == 0) & (kk == 0))
    def _():
        s1_ref[...] = jnp.zeros_like(s1_ref)
        s2_ref[...] = jnp.zeros_like(s2_ref)

    @pl.when(kk == pl.num_programs(3) - 1)
    def _():
        acc = acc_ref[...]
        o_ref[...] = acc.astype(o_ref.dtype)          # bf16 store (halved HBM)
        # TODO(synk): if the VPU/XLU ever becomes the binding slot at d=128,
        # compute the channel sum as a ones-row MXU matmul instead.
        s1_ref[...] += jnp.sum(acc, axis=0, keepdims=True)
        s2_ref[...] += jnp.sum(acc * acc, axis=0, keepdims=True)


def _gemm_bias_kernel(p_ref, w_ref, b_ref, o_ref, acc_ref, *, do_relu):
    """K-tiled GEMM + bias (+ ReLU) for layers without BatchNorm."""
    kk = pl.program_id(2)

    @pl.when(kk == 0)
    def _():
        acc_ref[...] = jnp.zeros_like(acc_ref)

    acc_ref[...] += jnp.dot(p_ref[...], w_ref[...],
                            preferred_element_type=jnp.float32)

    @pl.when(kk == pl.num_programs(2) - 1)
    def _():
        acc = acc_ref[...] + b_ref[...]
        if do_relu:
            acc = jnp.maximum(acc, 0.0)
        o_ref[...] = acc.astype(o_ref.dtype)


# ------------------------------- im2col glue ---------------------------------
def _im2col_nhwc(x, kh, kw, stride, pad):
    """x: (N, H, W, Ci) -> patches (N*OH*OW, kh*kw*Ci), OH, OW.

    Column order is (kh, kw, ci), matching w.transpose(2, 3, 1, 0).reshape(K, Co).
    `x` is already bf16, so the materialized patch slab is bf16.
    """
    n, h, w, ci = x.shape
    xp = jnp.pad(x, ((0, 0), (pad, pad), (pad, pad), (0, 0))) if pad else x
    oh = (h + 2 * pad - kh) // stride + 1
    ow = (w + 2 * pad - kw) // stride + 1
    cols = []
    for i in range(kh):
        for j in range(kw):
            cols.append(xp[:, i:i + stride * oh:stride, j:j + stride * ow:stride, :])
    p = jnp.stack(cols, axis=3)                       # (N, OH, OW, kh*kw, Ci)
    return p.reshape(n * oh * ow, kh * kw * ci), oh, ow


# ------------------------- fused conv layer wrapper ---------------------------
def conv_bn_relu(x, w, b, gamma, beta, *, stride, pad, do_bn, do_relu, eps=1e-5):
    """x: (N, H, W, Ci) NHWC; w: (Co, Ci, Kh, Kw) PyTorch layout.

    Returns NHWC bf16 for Pallas layers (the next layer consumes bf16 anyway);
    the tiny-GEMM fallback (conv5) returns f32.
    """
    n = x.shape[0]
    co, ci, kh, kw = w.shape
    x = x.astype(jnp.bfloat16)
    patches, oh, ow = _im2col_nhwc(x, kh, kw, stride, pad)
    m, k = patches.shape

    w2 = jnp.transpose(w, (2, 3, 1, 0)).reshape(k, co)

    # ---- tiny-GEMM fallback (e.g. conv5: M == batch): plain XLA is faster ----
    if m < 16:
        out = jnp.dot(patches.astype(jnp.float32), w2.astype(jnp.float32),
                      preferred_element_type=jnp.float32) + b[None, :]
        if do_bn:
            mean = jnp.mean(out, axis=0, keepdims=True)
            var = jnp.mean(jnp.square(out - mean), axis=0, keepdims=True)
            out = (out - mean) * lax.rsqrt(var + eps) * gamma[None, :] + beta[None, :]
        if do_relu:
            out = jnp.maximum(out, 0.0)
        return out.reshape(n, oh, ow, co)

    vmem_limit, tm_max = _tpu_budget()

    # ---- tiling: K never padded, Co padded to a lane multiple ----------------
    co_pad = _round_up(co, _LANE)
    if co_pad <= 1024:
        tco = co_pad                 # single Co tile: patches streamed exactly once
    elif co_pad % 256 == 0:
        tco = 256
    else:
        tco = _LANE
    n_co = co_pad // tco

    tk = _choose_tk(k)
    n_k = k // tk

    tm = min(tm_max, _round_up(m, _SUBLANE))
    n_m = _cdiv(m, tm)
    n_g = 2 if (do_bn and n_m >= 2) else 1     # megacore split of the stats GEMM (v7x)
    nm_g = _cdiv(n_m, n_g)
    m_pad = n_g * nm_g * tm

    patches_p = jnp.pad(patches, ((0, m_pad - m), (0, 0)))            # bf16
    w_p = jnp.pad(w2, ((0, 0), (0, co_pad - co))).astype(jnp.bfloat16)

    if do_bn:
        conv_out, s1, s2 = pl.pallas_call(
            _gemm_stats_kernel,
            out_shape=(
                jax.ShapeDtypeStruct((m_pad, co_pad), jnp.bfloat16),
                jax.ShapeDtypeStruct((n_g, _SUBLANE, co_pad), jnp.float32),
                jax.ShapeDtypeStruct((n_g, _SUBLANE, co_pad), jnp.float32),
            ),
            grid=(n_g, n_co, nm_g, n_k),
            in_specs=[
                pl.BlockSpec((tm, tk), lambda g, j, i, kk: (g * nm_g + i, kk)),
                pl.BlockSpec((tk, tco), lambda g, j, i, kk: (kk, j)),
            ],
            out_specs=(
                pl.BlockSpec((tm, tco), lambda g, j, i, kk: (g * nm_g + i, j)),
                pl.BlockSpec((1, _SUBLANE, tco), lambda g, j, i, kk: (g, 0, j)),
                pl.BlockSpec((1, _SUBLANE, tco), lambda g, j, i, kk: (g, 0, j)),
            ),
            scratch_shapes=[pltpu.VMEM((tm, tco), jnp.float32)],
            compiler_params=pltpu.CompilerParams(
                dimension_semantics=("parallel", "parallel", "arbitrary", "arbitrary"),
                vmem_limit_bytes=vmem_limit),
        )(patches_p, w_p)

        # Training-mode BN (batch stats over the real M rows, biased variance)
        # folded into one per-channel scale/shift in XLA; the elementwise apply
        # (+ReLU +bf16 cast) fuses into the next layer's im2col, so no second
        # Pallas pass / extra HBM round-trip is needed.  Padded M rows
        # contributed exactly zero to s1/s2 (no bias in-kernel).
        s1t = jnp.sum(s1[:, 0, :], axis=0)[:co]
        s2t = jnp.sum(s2[:, 0, :], axis=0)[:co]
        mean = s1t / m
        var = jnp.maximum(s2t / m - mean * mean, 0.0)
        scale = gamma * lax.rsqrt(var + eps)
        shift = beta - mean * scale
        out = conv_out[:m, :co].astype(jnp.float32) * scale[None, :] + shift[None, :]
        if do_relu:
            out = jnp.maximum(out, 0.0)
        out = out.astype(jnp.bfloat16)
    else:
        b_p = jnp.pad(b.astype(jnp.float32), (0, co_pad - co)).reshape(1, co_pad)
        out = pl.pallas_call(
            functools.partial(_gemm_bias_kernel, do_relu=do_relu),
            out_shape=jax.ShapeDtypeStruct((m_pad, co_pad), jnp.bfloat16),
            grid=(n_co, n_m, n_k),
            in_specs=[
                pl.BlockSpec((tm, tk), lambda j, i, kk: (i, kk)),
                pl.BlockSpec((tk, tco), lambda j, i, kk: (kk, j)),
                pl.BlockSpec((1, tco), lambda j, i, kk: (0, j)),
            ],
            out_specs=pl.BlockSpec((tm, tco), lambda j, i, kk: (i, j)),
            scratch_shapes=[pltpu.VMEM((tm, tco), jnp.float32)],
            compiler_params=pltpu.CompilerParams(
                dimension_semantics=("parallel", "parallel", "arbitrary"),
                vmem_limit_bytes=vmem_limit),
        )(patches_p, w_p, b_p)
        out = out[:m, :co]

    return out.reshape(n, oh, ow, co)


# ------------------------- encoder params / forward ---------------------------
def init_encoder_params(key, d=8, n_global=128, std=0.02):
    """Deterministic init matching encoder.__init__ shapes (normal_init style:
    conv weights ~ N(0, std), conv biases zero; BN gamma=1, beta=0)."""
    specs = [
        (d,        3,     4, 4),   # conv1
        (2 * d,    d,     4, 4),   # conv2
        (4 * d,    2 * d, 4, 4),   # conv3
        (8 * d,    4 * d, 4, 4),   # conv4
        (n_global, 8 * d, 4, 4),   # conv5
    ]
    params = []
    for s in specs:
        key, sub = jax.random.split(key)
        w = std * jax.random.normal(sub, s, dtype=jnp.float32)
        b = jnp.zeros((s[0],), jnp.float32)
        gamma = jnp.ones((s[0],), jnp.float32)
        beta = jnp.zeros((s[0],), jnp.float32)
        params.append((w, b, gamma, beta))
    return params


def encoder_forward(params, x):
    # x: (N, 3, H, W) NCHW float32 (PyTorch convention).
    x = jnp.transpose(x, (0, 2, 3, 1))   # -> NHWC, kept end-to-end
    x = conv_bn_relu(x, *params[0], stride=2, pad=1, do_bn=True,  do_relu=True)
    x = conv_bn_relu(x, *params[1], stride=2, pad=1, do_bn=True,  do_relu=True)
    x = conv_bn_relu(x, *params[2], stride=2, pad=0, do_bn=True,  do_relu=True)
    x = conv_bn_relu(x, *params[3], stride=2, pad=0, do_bn=False, do_relu=True)
    x = conv_bn_relu(x, *params[4], stride=1, pad=0, do_bn=False, do_relu=False)
    # back to NCHW once, at the end; final output in f32 like the PyTorch module
    return jnp.transpose(x, (0, 3, 1, 2)).astype(jnp.float32)


if __name__ == "__main__":
    key = jax.random.PRNGKey(0)
    kp, kx = jax.random.split(key)

    d = 8            # small "d" (module default is 128); channel ratios preserved
    n_global = 128   # module-level constant n_global
    params = init_encoder_params(kp, d=d, n_global=n_global)

    # 88x88 is the smallest square input for which every conv in the stack is
    # valid (final spatial size 1x1):  88 -> 44 -> 22 -> 10 -> 4 -> 1.
    x = jax.random.normal(kx, (2, 3, 88, 88), dtype=jnp.float32)

    fwd = jax.jit(encoder_forward)
    y = fwd(params, x)
    y = jax.block_until_ready(y)
    assert y.shape == (2, n_global, 1, 1), y.shape
    assert y.dtype == jnp.float32
    assert bool(jnp.all(jnp.isfinite(y)))
    print("KERNEL_OK")
</pallas_src>

<mosaic_0001>
module attributes {stable_mosaic.version = 11 : i64} {
  func.func @_gemm_stats_kernel(%arg0: i32, %arg1: i32, %arg2: i32, %arg3: i32, %arg4: memref<512x48xbf16, #tpu.memory_space<vmem>>, %arg5: memref<48x128xbf16, #tpu.memory_space<vmem>>, %arg6: memref<512x128xbf16, #tpu.memory_space<vmem>>, %arg7: memref<1x8x128xf32, #tpu.memory_space<vmem>>, %arg8: memref<1x8x128xf32, #tpu.memory_space<vmem>>, %arg9: memref<512x128xf32, #tpu.memory_space<vmem>>) attributes {dimension_semantics = [#tpu.dimension_semantics<parallel>, #tpu.dimension_semantics<parallel>, #tpu.dimension_semantics<arbitrary>, #tpu.dimension_semantics<arbitrary>], iteration_bounds = array<i64: 2, 1, 4, 1>, scalar_prefetch = 0 : i64, scratch_operands = 1 : i64, tpu.core_type = #tpu.core_type<tc>, window_params = [{transform_indices = @transform_0, window_bounds = array<i64: 512, 48>}, {transform_indices = @transform_1, window_bounds = array<i64: 48, 128>}, {transform_indices = @transform_2, window_bounds = array<i64: 512, 128>}, {transform_indices = @transform_3, window_bounds = array<i64: 1, 8, 128>}, {transform_indices = @transform_4, window_bounds = array<i64: 1, 8, 128>}]} {
    %c0_i32 = arith.constant 0 : i32
    %0 = arith.cmpi eq, %arg3, %c0_i32 : i32
    %1 = arith.extui %0 : i1 to i32
    %c0_i32_0 = arith.constant 0 : i32
    %2 = arith.cmpi ne, %1, %c0_i32_0 : i32
    scf.if %2 {
      %cst_13 = arith.constant 0.000000e+00 : f32
      %17 = vector.broadcast %cst_13 : f32 to vector<512x128xf32>
      %c0_14 = arith.constant 0 : index
      %c0_15 = arith.constant 0 : index
      %18 = vector.load %arg9[%c0_14, %c0_15] : memref<512x128xf32, #tpu.memory_space<vmem>>, vector<512x128xf32>
      tpu.vector_store %arg9[%c0_14, %c0_15], %17 {strides = array<i32>} : memref<512x128xf32, #tpu.memory_space<vmem>>, vector<512x128xf32>,
    } else {
    }
    %c0 = arith.constant 0 : index
    %c0_1 = arith.constant 0 : index
    %3 = vector.load %arg9[%c0, %c0_1] : memref<512x128xf32, #tpu.memory_space<vmem>>, vector<512x128xf32>
    %c0_2 = arith.constant 0 : index
    %c0_3 = arith.constant 0 : index
    %4 = vector.load %arg4[%c0_2, %c0_3] : memref<512x48xbf16, #tpu.memory_space<vmem>>, vector<512x48xbf16>
    %c0_4 = arith.constant 0 : index
    %c0_5 = arith.constant 0 : index
    %5 = vector.load %arg5[%c0_4, %c0_5] : memref<48x128xbf16, #tpu.memory_space<vmem>>, vector<48x128xbf16>
    %cst = arith.constant dense<0.000000e+00> : vector<512x128xf32>
    %6 = tpu.matmul %4, %5, %cst {dimension_numbers = #tpu.dot_dimension_numbers<[1], [0], [0], [1], [0, 0, 1, 1], [], []>} : vector<512x48xbf16>, vector<48x128xbf16>, vector<512x128xf32> -> vector<512x128xf32>
    %7 = arith.addf %3, %6 : vector<512x128xf32>
    %c0_6 = arith.constant 0 : index
    %c0_7 = arith.constant 0 : index
    %8 = vector.load %arg9[%c0_6, %c0_7] : memref<512x128xf32, #tpu.memory_space<vmem>>, vector<512x128xf32>
    tpu.vector_store %arg9[%c0_6, %c0_7], %7 {strides = array<i32>} : memref<512x128xf32, #tpu.memory_space<vmem>>, vector<512x128xf32>,
    %c0_i32_8 = arith.constant 0 : i32
    %9 = arith.cmpi eq, %arg2, %c0_i32_8 : i32
    %c0_i32_9 = arith.constant 0 : i32
    %10 = arith.cmpi eq, %arg3, %c0_i32_9 : i32
    %11 = arith.andi %9, %10 : i1
    %12 = arith.extui %11 : i1 to i32
    %c0_i32_10 = arith.constant 0 : i32
    %13 = arith.cmpi ne, %12, %c0_i32_10 : i32
    scf.if %13 {
      %cst_13 = arith.constant 0.000000e+00 : f32
      %17 = vector.broadcast %cst_13 : f32 to vector<1x8x128xf32>
      %c0_14 = arith.constant 0 : index
      %c0_15 = arith.constant 0 : index
      %c0_16 = arith.constant 0 : index
      %18 = vector.load %arg7[%c0_14, %c0_15, %c0_16] : memref<1x8x128xf32, #tpu.memory_space<vmem>>, vector<1x8x128xf32>
      tpu.vector_store %arg7[%c0_14, %c0_15, %c0_16], %17 {strides = array<i32>} : memref<1x8x128xf32, #tpu.memory_space<vmem>>, vector<1x8x128xf32>,
      %cst_17 = arith.constant 0.000000e+00 : f32
      %19 = vector.broadcast %cst_17 : f32 to vector<1x8x128xf32>
      %c0_18 = arith.constant 0 : index
      %c0_19 = arith.constant 0 : index
      %c0_20 = arith.constant 0 : index
      %20 = vector.load %arg8[%c0_18, %c0_19, %c0_20] : memref<1x8x128xf32, #tpu.memory_space<vmem>>, vector<1x8x128xf32>
      tpu.vector_store %arg8[%c0_18, %c0_19, %c0_20], %19 {strides = array<i32>} : memref<1x8x128xf32, #tpu.memory_space<vmem>>, vector<1x8x128xf32>,
    } else {
    }
    %c0_i32_11 = arith.constant 0 : i32
    %14 = arith.cmpi eq, %arg3, %c0_i32_11 : i32
    %15 = arith.extui %14 : i1 to i32
    %c0_i32_12 = arith.constant 0 : i32
    %16 = arith.cmpi ne, %15, %c0_i32_12 : i32
    scf.if %16 {
      %c0_13 = arith.constant 0 : index
      %c0_14 = arith.constant 0 : index
      %17 = vector.load %arg9[%c0_13, %c0_14] : memref<512x128xf32, #tpu.memory_space<vmem>>, vector<512x128xf32>
      %18 = arith.truncf %17 : vector<512x128xf32> to vector<512x128xbf16>
      %c0_15 = arith.constant 0 : index
      %c0_16 = arith.constant 0 : index
      %19 = vector.load %arg6[%c0_15, %c0_16] : memref<512x128xbf16, #tpu.memory_space<vmem>>, vector<512x128xbf16>
      tpu.vector_store %arg6[%c0_15, %c0_16], %18 {strides = array<i32>} : memref<512x128xbf16, #tpu.memory_space<vmem>>, vector<512x128xbf16>,
      %c0_17 = arith.constant 0 : index
      %c0_18 = arith.constant 0 : index
      %c0_19 = arith.constant 0 : index
      %20 = vector.load %arg7[%c0_17, %c0_18, %c0_19] : memref<1x8x128xf32, #tpu.memory_space<vmem>>, vector<1x8x128xf32>
      %cst_20 = arith.constant dense<0.000000e+00> : vector<128xf32>
      %21 = vector.multi_reduction <add>, %17, %cst_20 [0] : vector<512x128xf32> to vector<128xf32>
      %22 = vector.shape_cast %21 : vector<128xf32> to vector<1x128xf32>
      %23 = vector.shape_cast %22 : vector<1x128xf32> to vector<1x1x128xf32>
      %24 = vector.broadcast %23 : vector<1x1x128xf32> to vector<1x8x128xf32>
      %25 = arith.addf %20, %24 : vector<1x8x128xf32>
      %c0_21 = arith.constant 0 : index
      %c0_22 = arith.constant 0 : index
      %c0_23 = arith.constant 0 : index
      %26 = vector.load %arg7[%c0_21, %c0_22, %c0_23] : memref<1x8x128xf32, #tpu.memory_space<vmem>>, vector<1x8x128xf32>
      tpu.vector_store %arg7[%c0_21, %c0_22, %c0_23], %25 {strides = array<i32>} : memref<1x8x128xf32, #tpu.memory_space<vmem>>, vector<1x8x128xf32>,
      %c0_24 = arith.constant 0 : index
      %c0_25 = arith.constant 0 : index
      %c0_26 = arith.constant 0 : index
      %27 = vector.load %arg8[%c0_24, %c0_25, %c0_26] : memref<1x8x128xf32, #tpu.memory_space<vmem>>, vector<1x8x128xf32>
      %28 = arith.mulf %17, %17 : vector<512x128xf32>
      %cst_27 = arith.constant dense<0.000000e+00> : vector<128xf32>
      %29 = vector.multi_reduction <add>, %28, %cst_27 [0] : vector<512x128xf32> to vector<128xf32>
      %30 = vector.shape_cast %29 : vector<128xf32> to vector<1x128xf32>
      %31 = vector.shape_cast %30 : vector<1x128xf32> to vector<1x1x128xf32>
      %32 = vector.broadcast %31 : vector<1x1x128xf32> to vector<1x8x128xf32>
      %33 = arith.addf %27, %32 : vector<1x8x128xf32>
      %c0_28 = arith.constant 0 : index
      %c0_29 = arith.constant 0 : index
      %c0_30 = arith.constant 0 : index
      %34 = vector.load %arg8[%c0_28, %c0_29, %c0_30] : memref<1x8x128xf32, #tpu.memory_space<vmem>>, vector<1x8x128xf32>
      tpu.vector_store %arg8[%c0_28, %c0_29, %c0_30], %33 {strides = array<i32>} : memref<1x8x128xf32, #tpu.memory_space<vmem>>, vector<1x8x128xf32>,
    } else {
    }
    return
  }
  func.func @transform_0(%arg0: i32, %arg1: i32, %arg2: i32, %arg3: i32) -> (i32, i32) {
    %c4_i32 = arith.constant 4 : i32
    %0 = arith.muli %arg0, %c4_i32 : i32
    %1 = arith.addi %0, %arg2 : i32
    %c0_i32 = arith.constant 0 : i32
    return %1, %arg3 : i32, i32
  }
  func.func @transform_1(%arg0: i32, %arg1: i32, %arg2: i32, %arg3: i32) -> (i32, i32) {
    %c0_i32 = arith.constant 0 : i32
    return %arg3, %arg1 : i32, i32
  }
  func.func @transform_2(%arg0: i32, %arg1: i32, %arg2: i32, %arg3: i32) -> (i32, i32) {
    %c4_i32 = arith.constant 4 : i32
    %0 = arith.muli %arg0, %c4_i32 : i32
    %1 = arith.addi %0, %arg2 : i32
    %c0_i32 = arith.constant 0 : i32
    return %1, %arg1 : i32, i32
  }
  func.func @transform_3(%arg0: i32, %arg1: i32, %arg2: i32, %arg3: i32) -> (i32, i32, i32) {
    %c0_i32 = arith.constant 0 : i32
    %c0_i32_0 = arith.constant 0 : i32
    return %arg0, %c0_i32, %arg1 : i32, i32, i32
  }
  func.func @transform_4(%arg0: i32, %arg1: i32, %arg2: i32, %arg3: i32) -> (i32, i32, i32) {
    %c0_i32 = arith.constant 0 : i32
    %c0_i32_0 = arith.constant 0 : i32
    return %arg0, %c0_i32, %arg1 : i32, i32, i32
  }
}

module attributes {stable_mosaic.version = 11 : i64} {
  func.func @_gemm_stats_kernel(%arg0: i32, %arg1: i32, %arg2: i32, %arg3: i32, %arg4: memref<512x128xbf16, #tpu.memory_space<vmem>>, %arg5: memref<128x128xbf16, #tpu.memory_space<vmem>>, %arg6: memref<512x128xbf16, #tpu.memory_space<vmem>>, %arg7: memref<1x8x128xf32, #tpu.memory_space<vmem>>, %arg8: memref<1x8x128xf32, #tpu.memory_space<vmem>>, %arg9: memref<512x128xf32, #tpu.memory_space<vmem>>) attributes {dimension_semantics = [#tpu.dimension_semantics<parallel>, #tpu.dimension_semantics<parallel>, #tpu.dimension_semantics<arbitrary>, #tpu.dimension_semantics<arbitrary>], iteration_bounds = array<i64: 2, 1, 1, 1>, scalar_prefetch = 0 : i64, scratch_operands = 1 : i64, tpu.core_type = #tpu.core_type<tc>, window_params = [{transform_indices = @transform_0, window_bounds = array<i64: 512, 128>}, {transform_indices = @transform_1, window_bounds = array<i64: 128, 128>}, {transform_indices = @transform_2, window_bounds = array<i64: 512, 128>}, {transform_indices = @transform_3, window_bounds = array<i64: 1, 8, 128>}, {transform_indices = @transform_4, window_bounds = array<i64: 1, 8, 128>}]} {
    %c0_i32 = arith.constant 0 : i32
    %0 = arith.cmpi eq, %arg3, %c0_i32 : i32
    %1 = arith.extui %0 : i1 to i32
    %c0_i32_0 = arith.constant 0 : i32
    %2 = arith.cmpi ne, %1, %c0_i32_0 : i32
    scf.if %2 {
      %cst_13 = arith.constant 0.000000e+00 : f32
      %17 = vector.broadcast %cst_13 : f32 to vector<512x128xf32>
      %c0_14 = arith.constant 0 : index
      %c0_15 = arith.constant 0 : index
      %18 = vector.load %arg9[%c0_14, %c0_15] : memref<512x128xf32, #tpu.memory_space<vmem>>, vector<512x128xf32>
      tpu.vector_store %arg9[%c0_14, %c0_15], %17 {strides = array<i32>} : memref<512x128xf32, #tpu.memory_space<vmem>>, vector<512x128xf32>,
    } else {
    }
    %c0 = arith.constant 0 : index
    %c0_1 = arith.constant 0 : index
    %3 = vector.load %arg9[%c0, %c0_1] : memref<512x128xf32, #tpu.memory_space<vmem>>, vector<512x128xf32>
    %c0_2 = arith.constant 0 : index
    %c0_3 = arith.constant 0 : index
    %4 = vector.load %arg4[%c0_2, %c0_3] : memref<512x128xbf16, #tpu.memory_space<vmem>>, vector<512x128xbf16>
    %c0_4 = arith.constant 0 : index
    %c0_5 = arith.constant 0 : index
    %5 = vector.load %arg5[%c0_4, %c0_5] : memref<128x128xbf16, #tpu.memory_space<vmem>>, vector<128x128xbf16>
    %cst = arith.constant dense<0.000000e+00> : vector<512x128xf32>
    %6 = tpu.matmul %4, %5, %cst {dimension_numbers = #tpu.dot_dimension_numbers<[1], [0], [0], [1], [0, 0, 1, 1], [], []>} : vector<512x128xbf16>, vector<128x128xbf16>, vector<512x128xf32> -> vector<512x128xf32>
    %7 = arith.addf %3, %6 : vector<512x128xf32>
    %c0_6 = arith.constant 0 : index
    %c0_7 = arith.constant 0 : index
    %8 = vector.load %arg9[%c0_6, %c0_7] : memref<512x128xf32, #tpu.memory_space<vmem>>, vector<512x128xf32>
    tpu.vector_store %arg9[%c0_6, %c0_7], %7 {strides = array<i32>} : memref<512x128xf32, #tpu.memory_space<vmem>>, vector<512x128xf32>,
    %c0_i32_8 = arith.constant 0 : i32
    %9 = arith.cmpi eq, %arg2, %c0_i32_8 : i32
    %c0_i32_9 = arith.constant 0 : i32
    %10 = arith.cmpi eq, %arg3, %c0_i32_9 : i32
    %11 = arith.andi %9, %10 : i1
    %12 = arith.extui %11 : i1 to i32
    %c0_i32_10 = arith.constant 0 : i32
    %13 = arith.cmpi ne, %12, %c0_i32_10 : i32
    scf.if %13 {
      %cst_13 = arith.constant 0.000000e+00 : f32
      %17 = vector.broadcast %cst_13 : f32 to vector<1x8x128xf32>
      %c0_14 = arith.constant 0 : index
      %c0_15 = arith.constant 0 : index
      %c0_16 = arith.constant 0 : index
      %18 = vector.load %arg7[%c0_14, %c0_15, %c0_16] : memref<1x8x128xf32, #tpu.memory_space<vmem>>, vector<1x8x128xf32>
      tpu.vector_store %arg7[%c0_14, %c0_15, %c0_16], %17 {strides = array<i32>} : memref<1x8x128xf32, #tpu.memory_space<vmem>>, vector<1x8x128xf32>,
      %cst_17 = arith.constant 0.000000e+00 : f32
      %19 = vector.broadcast %cst_17 : f32 to vector<1x8x128xf32>
      %c0_18 = arith.constant 0 : index
      %c0_19 = arith.constant 0 : index
      %c0_20 = arith.constant 0 : index
      %20 = vector.load %arg8[%c0_18, %c0_19, %c0_20] : memref<1x8x128xf32, #tpu.memory_space<vmem>>, vector<1x8x128xf32>
      tpu.vector_store %arg8[%c0_18, %c0_19, %c0_20], %19 {strides = array<i32>} : memref<1x8x128xf32, #tpu.memory_space<vmem>>, vector<1x8x128xf32>,
    } else {
    }
    %c0_i32_11 = arith.constant 0 : i32
    %14 = arith.cmpi eq, %arg3, %c0_i32_11 : i32
    %15 = arith.extui %14 : i1 to i32
    %c0_i32_12 = arith.constant 0 : i32
    %16 = arith.cmpi ne, %15, %c0_i32_12 : i32
    scf.if %16 {
      %c0_13 = arith.constant 0 : index
      %c0_14 = arith.constant 0 : index
      %17 = vector.load %arg9[%c0_13, %c0_14] : memref<512x128xf32, #tpu.memory_space<vmem>>, vector<512x128xf32>
      %18 = arith.truncf %17 : vector<512x128xf32> to vector<512x128xbf16>
      %c0_15 = arith.constant 0 : index
      %c0_16 = arith.constant 0 : index
      %19 = vector.load %arg6[%c0_15, %c0_16] : memref<512x128xbf16, #tpu.memory_space<vmem>>, vector<512x128xbf16>
      tpu.vector_store %arg6[%c0_15, %c0_16], %18 {strides = array<i32>} : memref<512x128xbf16, #tpu.memory_space<vmem>>, vector<512x128xbf16>,
      %c0_17 = arith.constant 0 : index
      %c0_18 = arith.constant 0 : index
      %c0_19 = arith.constant 0 : index
      %20 = vector.load %arg7[%c0_17, %c0_18, %c0_19] : memref<1x8x128xf32, #tpu.memory_space<vmem>>, vector<1x8x128xf32>
      %cst_20 = arith.constant dense<0.000000e+00> : vector<128xf32>
      %21 = vector.multi_reduction <add>, %17, %cst_20 [0] : vector<512x128xf32> to vector<128xf32>
      %22 = vector.shape_cast %21 : vector<128xf32> to vector<1x128xf32>
      %23 = vector.shape_cast %22 : vector<1x128xf32> to vector<1x1x128xf32>
      %24 = vector.broadcast %23 : vector<1x1x128xf32> to vector<1x8x128xf32>
      %25 = arith.addf %20, %24 : vector<1x8x128xf32>
      %c0_21 = arith.constant 0 : index
      %c0_22 = arith.constant 0 : index
      %c0_23 = arith.constant 0 : index
      %26 = vector.load %arg7[%c0_21, %c0_22, %c0_23] : memref<1x8x128xf32, #tpu.memory_space<vmem>>, vector<1x8x128xf32>
      tpu.vector_store %arg7[%c0_21, %c0_22, %c0_23], %25 {strides = array<i32>} : memref<1x8x128xf32, #tpu.memory_space<vmem>>, vector<1x8x128xf32>,
      %c0_24 = arith.constant 0 : index
      %c0_25 = arith.constant 0 : index
      %c0_26 = arith.constant 0 : index
      %27 = vector.load %arg8[%c0_24, %c0_25, %c0_26] : memref<1x8x128xf32, #tpu.memory_space<vmem>>, vector<1x8x128xf32>
      %28 = arith.mulf %17, %17 : vector<512x128xf32>
      %cst_27 = arith.constant dense<0.000000e+00> : vector<128xf32>
      %29 = vector.multi_reduction <add>, %28, %cst_27 [0] : vector<512x128xf32> to vector<128xf32>
      %30 = vector.shape_cast %29 : vector<128xf32> to vector<1x128xf32>
      %31 = vector.shape_cast %30 : vector<1x128xf32> to vector<1x1x128xf32>
      %32 = vector.broadcast %31 : vector<1x1x128xf32> to vector<1x8x128xf32>
      %33 = arith.addf %27, %32 : vector<1x8x128xf32>
      %c0_28 = arith.constant 0 : index
      %c0_29 = arith.constant 0 : index
      %c0_30 = arith.constant 0 : index
      %34 = vector.load %arg8[%c0_28, %c0_29, %c0_30] : memref<1x8x128xf32, #tpu.memory_space<vmem>>, vector<1x8x128xf32>
      tpu.vector_store %arg8[%c0_28, %c0_29, %c0_30], %33 {strides = array<i32>} : memref<1x8x128xf32, #tpu.memory_space<vmem>>, vector<1x8x128xf32>,
    } else {
    }
    return
  }
  func.func @transform_0(%arg0: i32, %arg1: i32, %arg2: i32, %arg3: i32) -> (i32, i32) {
    %c1_i32 = arith.constant 1 : i32
    %0 = arith.muli %arg0, %c1_i32 : i32
    %1 = arith.addi %0, %arg2 : i32
    %c0_i32 = arith.constant 0 : i32
    return %1, %arg3 : i32, i32
  }
  func.func @transform_1(%arg0: i32, %arg1: i32, %arg2: i32, %arg3: i32) -> (i32, i32) {
    %c0_i32 = arith.constant 0 : i32
    return %arg3, %arg1 : i32, i32
  }
  func.func @transform_2(%arg0: i32, %arg1: i32, %arg2: i32, %arg3: i32) -> (i32, i32) {
    %c1_i32 = arith.constant 1 : i32
    %0 = arith.muli %arg0, %c1_i32 : i32
    %1 = arith.addi %0, %arg2 : i32
    %c0_i32 = arith.constant 0 : i32
    return %1, %arg1 : i32, i32
  }
  func.func @transform_3(%arg0: i32, %arg1: i32, %arg2: i32, %arg3: i32) -> (i32, i32, i32) {
    %c0_i32 = arith.constant 0 : i32
    %c0_i32_0 = arith.constant 0 : i32
    return %arg0, %c0_i32, %arg1 : i32, i32, i32
  }
  func.func @transform_4(%arg0: i32, %arg1: i32, %arg2: i32, %arg3: i32) -> (i32, i32, i32) {
    %c0_i32 = arith.constant 0 : i32
    %c0_i32_0 = arith.constant 0 : i32
    return %arg0, %c0_i32, %arg1 : i32, i32, i32
  }
}

module attributes {stable_mosaic.version = 11 : i64} {
  func.func @_gemm_stats_kernel(%arg0: i32, %arg1: i32, %arg2: i32, %arg3: i32, %arg4: memref<200x256xbf16, #tpu.memory_space<vmem>>, %arg5: memref<256x128xbf16, #tpu.memory_space<vmem>>, %arg6: memref<200x128xbf16, #tpu.memory_space<vmem>>, %arg7: memref<1x8x128xf32, #tpu.memory_space<vmem>>, %arg8: memref<1x8x128xf32, #tpu.memory_space<vmem>>, %arg9: memref<200x128xf32, #tpu.memory_space<vmem>>) attributes {dimension_semantics = [#tpu.dimension_semantics<parallel>, #tpu.dimension_semantics<parallel>, #tpu.dimension_semantics<arbitrary>, #tpu.dimension_semantics<arbitrary>], iteration_bounds = array<i64: 1, 1, 1, 1>, scalar_prefetch = 0 : i64, scratch_operands = 1 : i64, tpu.core_type = #tpu.core_type<tc>, window_params = [{transform_indices = @transform_0, window_bounds = array<i64: 200, 256>}, {transform_indices = @transform_1, window_bounds = array<i64: 256, 128>}, {transform_indices = @transform_2, window_bounds = array<i64: 200, 128>}, {transform_indices = @transform_3, window_bounds = array<i64: 1, 8, 128>}, {transform_indices = @transform_4, window_bounds = array<i64: 1, 8, 128>}]} {
    %c0_i32 = arith.constant 0 : i32
    %0 = arith.cmpi eq, %arg3, %c0_i32 : i32
    %1 = arith.extui %0 : i1 to i32
    %c0_i32_0 = arith.constant 0 : i32
    %2 = arith.cmpi ne, %1, %c0_i32_0 : i32
    scf.if %2 {
      %cst_13 = arith.constant 0.000000e+00 : f32
      %17 = vector.broadcast %cst_13 : f32 to vector<200x128xf32>
      %c0_14 = arith.constant 0 : index
      %c0_15 = arith.constant 0 : index
      %18 = vector.load %arg9[%c0_14, %c0_15] : memref<200x128xf32, #tpu.memory_space<vmem>>, vector<200x128xf32>
      tpu.vector_store %arg9[%c0_14, %c0_15], %17 {strides = array<i32>} : memref<200x128xf32, #tpu.memory_space<vmem>>, vector<200x128xf32>,
    } else {
    }
    %c0 = arith.constant 0 : index
    %c0_1 = arith.constant 0 : index
    %3 = vector.load %arg9[%c0, %c0_1] : memref<200x128xf32, #tpu.memory_space<vmem>>, vector<200x128xf32>
    %c0_2 = arith.constant 0 : index
    %c0_3 = arith.constant 0 : index
    %4 = vector.load %arg4[%c0_2, %c0_3] : memref<200x256xbf16, #tpu.memory_space<vmem>>, vector<200x256xbf16>
    %c0_4 = arith.constant 0 : index
    %c0_5 = arith.constant 0 : index
    %5 = vector.load %arg5[%c0_4, %c0_5] : memref<256x128xbf16, #tpu.memory_space<vmem>>, vector<256x128xbf16>
    %cst = arith.constant dense<0.000000e+00> : vector<200x128xf32>
    %6 = tpu.matmul %4, %5, %cst {dimension_numbers = #tpu.dot_dimension_numbers<[1], [0], [0], [1], [0, 0, 1, 1], [], []>} : vector<200x256xbf16>, vector<256x128xbf16>, vector<200x128xf32> -> vector<200x128xf32>
    %7 = arith.addf %3, %6 : vector<200x128xf32>
    %c0_6 = arith.constant 0 : index
    %c0_7 = arith.constant 0 : index
    %8 = vector.load %arg9[%c0_6, %c0_7] : memref<200x128xf32, #tpu.memory_space<vmem>>, vector<200x128xf32>
    tpu.vector_store %arg9[%c0_6, %c0_7], %7 {strides = array<i32>} : memref<200x128xf32, #tpu.memory_space<vmem>>, vector<200x128xf32>,
    %c0_i32_8 = arith.constant 0 : i32
    %9 = arith.cmpi eq, %arg2, %c0_i32_8 : i32
    %c0_i32_9 = arith.constant 0 : i32
    %10 = arith.cmpi eq, %arg3, %c0_i32_9 : i32
    %11 = arith.andi %9, %10 : i1
    %12 = arith.extui %11 : i1 to i32
    %c0_i32_10 = arith.constant 0 : i32
    %13 = arith.cmpi ne, %12, %c0_i32_10 : i32
    scf.if %13 {
      %cst_13 = arith.constant 0.000000e+00 : f32
      %17 = vector.broadcast %cst_13 : f32 to vector<1x8x128xf32>
      %c0_14 = arith.constant 0 : index
      %c0_15 = arith.constant 0 : index
      %c0_16 = arith.constant 0 : index
      %18 = vector.load %arg7[%c0_14, %c0_15, %c0_16] : memref<1x8x128xf32, #tpu.memory_space<vmem>>, vector<1x8x128xf32>
      tpu.vector_store %arg7[%c0_14, %c0_15, %c0_16], %17 {strides = array<i32>} : memref<1x8x128xf32, #tpu.memory_space<vmem>>, vector<1x8x128xf32>,
      %cst_17 = arith.constant 0.000000e+00 : f32
      %19 = vector.broadcast %cst_17 : f32 to vector<1x8x128xf32>
      %c0_18 = arith.constant 0 : index
      %c0_19 = arith.constant 0 : index
      %c0_20 = arith.constant 0 : index
      %20 = vector.load %arg8[%c0_18, %c0_19, %c0_20] : memref<1x8x128xf32, #tpu.memory_space<vmem>>, vector<1x8x128xf32>
      tpu.vector_store %arg8[%c0_18, %c0_19, %c0_20], %19 {strides = array<i32>} : memref<1x8x128xf32, #tpu.memory_space<vmem>>, vector<1x8x128xf32>,
    } else {
    }
    %c0_i32_11 = arith.constant 0 : i32
    %14 = arith.cmpi eq, %arg3, %c0_i32_11 : i32
    %15 = arith.extui %14 : i1 to i32
    %c0_i32_12 = arith.constant 0 : i32
    %16 = arith.cmpi ne, %15, %c0_i32_12 : i32
    scf.if %16 {
      %c0_13 = arith.constant 0 : index
      %c0_14 = arith.constant 0 : index
      %17 = vector.load %arg9[%c0_13, %c0_14] : memref<200x128xf32, #tpu.memory_space<vmem>>, vector<200x128xf32>
      %18 = arith.truncf %17 : vector<200x128xf32> to vector<200x128xbf16>
      %c0_15 = arith.constant 0 : index
      %c0_16 = arith.constant 0 : index
      %19 = vector.load %arg6[%c0_15, %c0_16] : memref<200x128xbf16, #tpu.memory_space<vmem>>, vector<200x128xbf16>
      tpu.vector_store %arg6[%c0_15, %c0_16], %18 {strides = array<i32>} : memref<200x128xbf16, #tpu.memory_space<vmem>>, vector<200x128xbf16>,
      %c0_17 = arith.constant 0 : index
      %c0_18 = arith.constant 0 : index
      %c0_19 = arith.constant 0 : index
      %20 = vector.load %arg7[%c0_17, %c0_18, %c0_19] : memref<1x8x128xf32, #tpu.memory_space<vmem>>, vector<1x8x128xf32>
      %cst_20 = arith.constant dense<0.000000e+00> : vector<128xf32>
      %21 = vector.multi_reduction <add>, %17, %cst_20 [0] : vector<200x128xf32> to vector<128xf32>
      %22 = vector.shape_cast %21 : vector<128xf32> to vector<1x128xf32>
      %23 = vector.shape_cast %22 : vector<1x128xf32> to vector<1x1x128xf32>
      %24 = vector.broadcast %23 : vector<1x1x128xf32> to vector<1x8x128xf32>
      %25 = arith.addf %20, %24 : vector<1x8x128xf32>
      %c0_21 = arith.constant 0 : index
      %c0_22 = arith.constant 0 : index
      %c0_23 = arith.constant 0 : index
      %26 = vector.load %arg7[%c0_21, %c0_22, %c0_23] : memref<1x8x128xf32, #tpu.memory_space<vmem>>, vector<1x8x128xf32>
      tpu.vector_store %arg7[%c0_21, %c0_22, %c0_23], %25 {strides = array<i32>} : memref<1x8x128xf32, #tpu.memory_space<vmem>>, vector<1x8x128xf32>,
      %c0_24 = arith.constant 0 : index
      %c0_25 = arith.constant 0 : index
      %c0_26 = arith.constant 0 : index
      %27 = vector.load %arg8[%c0_24, %c0_25, %c0_26] : memref<1x8x128xf32, #tpu.memory_space<vmem>>, vector<1x8x128xf32>
      %28 = arith.mulf %17, %17 : vector<200x128xf32>
      %cst_27 = arith.constant dense<0.000000e+00> : vector<128xf32>
      %29 = vector.multi_reduction <add>, %28, %cst_27 [0] : vector<200x128xf32> to vector<128xf32>
      %30 = vector.shape_cast %29 : vector<128xf32> to vector<1x128xf32>
      %31 = vector.shape_cast %30 : vector<1x128xf32> to vector<1x1x128xf32>
      %32 = vector.broadcast %31 : vector<1x1x128xf32> to vector<1x8x128xf32>
      %33 = arith.addf %27, %32 : vector<1x8x128xf32>
      %c0_28 = arith.constant 0 : index
      %c0_29 = arith.constant 0 : index
      %c0_30 = arith.constant 0 : index
      %34 = vector.load %arg8[%c0_28, %c0_29, %c0_30] : memref<1x8x128xf32, #tpu.memory_space<vmem>>, vector<1x8x128xf32>
      tpu.vector_store %arg8[%c0_28, %c0_29, %c0_30], %33 {strides = array<i32>} : memref<1x8x128xf32, #tpu.memory_space<vmem>>, vector<1x8x128xf32>,
    } else {
    }
    return
  }
  func.func @transform_0(%arg0: i32, %arg1: i32, %arg2: i32, %arg3: i32) -> (i32, i32) {
    %c1_i32 = arith.constant 1 : i32
    %0 = arith.muli %arg0, %c1_i32 : i32
    %1 = arith.addi %0, %arg2 : i32
    %c0_i32 = arith.constant 0 : i32
    return %1, %arg3 : i32, i32
  }
  func.func @transform_1(%arg0: i32, %arg1: i32, %arg2: i32, %arg3: i32) -> (i32, i32) {
    %c0_i32 = arith.constant 0 : i32
    return %arg3, %arg1 : i32, i32
  }
  func.func @transform_2(%arg0: i32, %arg1: i32, %arg2: i32, %arg3: i32) -> (i32, i32) {
    %c1_i32 = arith.constant 1 : i32
    %0 = arith.muli %arg0, %c1_i32 : i32
    %1 = arith.addi %0, %arg2 : i32
    %c0_i32 = arith.constant 0 : i32
    return %1, %arg1 : i32, i32
  }
  func.func @transform_3(%arg0: i32, %arg1: i32, %arg2: i32, %arg3: i32) -> (i32, i32, i32) {
    %c0_i32 = arith.constant 0 : i32
    %c0_i32_0 = arith.constant 0 : i32
    return %arg0, %c0_i32, %arg1 : i32, i32, i32
  }
  func.func @transform_4(%arg0: i32, %arg1: i32, %arg2: i32, %arg3: i32) -> (i32, i32, i32) {
    %c0_i32 = arith.constant 0 : i32
    %c0_i32_0 = arith.constant 0 : i32
    return %arg0, %c0_i32, %arg1 : i32, i32, i32
  }
}

module attributes {stable_mosaic.version = 11 : i64} {
  func.func @_gemm_bias_kernel(%arg0: i32, %arg1: i32, %arg2: i32, %arg3: memref<32x512xbf16, #tpu.memory_space<vmem>>, %arg4: memref<512x128xbf16, #tpu.memory_space<vmem>>, %arg5: memref<1x128xf32, #tpu.memory_space<vmem>>, %arg6: memref<32x128xbf16, #tpu.memory_space<vmem>>, %arg7: memref<32x128xf32, #tpu.memory_space<vmem>>) attributes {dimension_semantics = [#tpu.dimension_semantics<parallel>, #tpu.dimension_semantics<parallel>, #tpu.dimension_semantics<arbitrary>], iteration_bounds = array<i64: 1, 1, 1>, scalar_prefetch = 0 : i64, scratch_operands = 1 : i64, tpu.core_type = #tpu.core_type<tc>, window_params = [{transform_indices = @transform_0, window_bounds = array<i64: 32, 512>}, {transform_indices = @transform_1, window_bounds = array<i64: 512, 128>}, {transform_indices = @transform_2, window_bounds = array<i64: 1, 128>}, {transform_indices = @transform_3, window_bounds = array<i64: 32, 128>}]} {
    %c0_i32 = arith.constant 0 : i32
    %0 = arith.cmpi eq, %arg2, %c0_i32 : i32
    %1 = arith.extui %0 : i1 to i32
    %c0_i32_0 = arith.constant 0 : i32
    %2 = arith.cmpi ne, %1, %c0_i32_0 : i32
    scf.if %2 {
      %cst_10 = arith.constant 0.000000e+00 : f32
      %12 = vector.broadcast %cst_10 : f32 to vector<32x128xf32>
      %c0_11 = arith.constant 0 : index
      %c0_12 = arith.constant 0 : index
      %13 = vector.load %arg7[%c0_11, %c0_12] : memref<32x128xf32, #tpu.memory_space<vmem>>, vector<32x128xf32>
      tpu.vector_store %arg7[%c0_11, %c0_12], %12 {strides = array<i32>} : memref<32x128xf32, #tpu.memory_space<vmem>>, vector<32x128xf32>,
    } else {
    }
    %c0 = arith.constant 0 : index
    %c0_1 = arith.constant 0 : index
    %3 = vector.load %arg7[%c0, %c0_1] : memref<32x128xf32, #tpu.memory_space<vmem>>, vector<32x128xf32>
    %c0_2 = arith.constant 0 : index
    %c0_3 = arith.constant 0 : index
    %4 = vector.load %arg3[%c0_2, %c0_3] : memref<32x512xbf16, #tpu.memory_space<vmem>>, vector<32x512xbf16>
    %c0_4 = arith.constant 0 : index
    %c0_5 = arith.constant 0 : index
    %5 = vector.load %arg4[%c0_4, %c0_5] : memref<512x128xbf16, #tpu.memory_space<vmem>>, vector<512x128xbf16>
    %cst = arith.constant dense<0.000000e+00> : vector<32x128xf32>
    %6 = tpu.matmul %4, %5, %cst {dimension_numbers = #tpu.dot_dimension_numbers<[1], [0], [0], [1], [0, 0, 1, 1], [], []>} : vector<32x512xbf16>, vector<512x128xbf16>, vector<32x128xf32> -> vector<32x128xf32>
    %7 = arith.addf %3, %6 : vector<32x128xf32>
    %c0_6 = arith.constant 0 : index
    %c0_7 = arith.constant 0 : index
    %8 = vector.load %arg7[%c0_6, %c0_7] : memref<32x128xf32, #tpu.memory_space<vmem>>, vector<32x128xf32>
    tpu.vector_store %arg7[%c0_6, %c0_7], %7 {strides = array<i32>} : memref<32x128xf32, #tpu.memory_space<vmem>>, vector<32x128xf32>,
    %c0_i32_8 = arith.constant 0 : i32
    %9 = arith.cmpi eq, %arg2, %c0_i32_8 : i32
    %10 = arith.extui %9 : i1 to i32
    %c0_i32_9 = arith.constant 0 : i32
    %11 = arith.cmpi ne, %10, %c0_i32_9 : i32
    scf.if %11 {
      %c0_10 = arith.constant 0 : index
      %c0_11 = arith.constant 0 : index
      %12 = vector.load %arg7[%c0_10, %c0_11] : memref<32x128xf32, #tpu.memory_space<vmem>>, vector<32x128xf32>
      %c0_12 = arith.constant 0 : index
      %c0_13 = arith.constant 0 : index
      %13 = vector.load %arg5[%c0_12, %c0_13] : memref<1x128xf32, #tpu.memory_space<vmem>>, vector<1x128xf32>
      %14 = vector.broadcast %13 : vector<1x128xf32> to vector<32x128xf32>
      %15 = arith.addf %12, %14 : vector<32x128xf32>
      %cst_14 = arith.constant 0.000000e+00 : f32
      %16 = vector.broadcast %cst_14 : f32 to vector<32x128xf32>
      %17 = arith.maximumf %15, %16 : vector<32x128xf32>
      %18 = arith.truncf %17 : vector<32x128xf32> to vector<32x128xbf16>
      %c0_15 = arith.constant 0 : index
      %c0_16 = arith.constant 0 : index
      %19 = vector.load %arg6[%c0_15, %c0_16] : memref<32x128xbf16, #tpu.memory_space<vmem>>, vector<32x128xbf16>
      tpu.vector_store %arg6[%c0_15, %c0_16], %18 {strides = array<i32>} : memref<32x128xbf16, #tpu.memory_space<vmem>>, vector<32x128xbf16>,
    } else {
    }
    return
  }
  func.func @transform_0(%arg0: i32, %arg1: i32, %arg2: i32) -> (i32, i32) {
    %c0_i32 = arith.constant 0 : i32
    return %arg1, %arg2 : i32, i32
  }
  func.func @transform_1(%arg0: i32, %arg1: i32, %arg2: i32) -> (i32, i32) {
    %c0_i32 = arith.constant 0 : i32
    return %arg2, %arg0 : i32, i32
  }
  func.func @transform_2(%arg0: i32, %arg1: i32, %arg2: i32) -> (i32, i32) {
    %c0_i32 = arith.constant 0 : i32
    %c0_i32_0 = arith.constant 0 : i32
    return %c0_i32, %arg0 : i32, i32
  }
  func.func @transform_3(%arg0: i32, %arg1: i32, %arg2: i32) -> (i32, i32) {
    %c0_i32 = arith.constant 0 : i32
    return %arg1, %arg0 : i32, i32
  }
}

</mosaic_0001>

<llo_original>
// kernel: encoder_forward.4
$region0: #{encoder_forward.4}
  #allocation0 [shape = 'u32[]', space=smem, size = 0x4, offset = 0x4, fixed_abs, tag = 'smem constant byte address 0x4 - core index']
  #allocation1 [shape = 'u32[72,128]{1,0:T(1,128)}', space=vmem, size = 0x9000, scoped, tag = 'internal scratch']
  #allocation2 [shape = 'f32[512,128]{1,0:T(8,128)}', space=vmem, size = 0x40000, scoped, tag = 'scratch operand']
  %s0 = inlined_call_operand.vmem [shape: bf16[4096,48], index: 0, kind: input, shape index: {}]
  %s1 = inlined_call_operand.vmem [shape: bf16[48,128], index: 1, kind: input, shape index: {}]
  %s2 = inlined_call_operand.vmem [shape: bf16[4096,128], index: 2, kind: output, shape index: {0}]
  %s3 = inlined_call_operand.vmem [shape: f32[2,8,128], index: 3, kind: output, shape index: {1}]
  %s4 = inlined_call_operand.vmem [shape: f32[2,8,128], index: 4, kind: output, shape index: {2}]
  %5 = xla_tuple %s2, %s3, %s4
  %s6 = sld [smem:[#allocation0]]
  $region69: #{encoder_forward.4} parent=0
    _
  %s8 = ssub.s32 1, %s6
  %s9 = scalar_select 0, %s8, %s6
  loop: start=0, step=1, limit=10
  $region2: #{encoder_forward.4} parent=0 // loop_pre_header
    _
  $region3: #{encoder_forward.4} parent=0 // loop_header
    %s11 = sphi 0, %s15
    %p12 = scmp.ge.s32.totalorder %s11, 10
    %s18 = sphi 0, %s44
    %s19 = sphi 0, %s40
    %s20 = sphi 0, %s36
    %s21 = sphi 0, %s32
    %s22 = sphi 0, %s18
    %s23 = sphi 0, %s19
    %s24 = sphi 0, %s20
    %s25 = sphi 0, %s21
    %s26 = sphi 0, %s22
    %s27 = sphi 0, %s23
    %s28 = sphi 0, %s24
    %s29 = sphi 0, %s25
    %s53 = sphi 0, %s55
    %s56 = sphi 0, %s53
    %s57 = sphi 0, %s56
    %s73 = sphi 0, %s57
    %s81 = sphi 0, %s83
    %s84 = sphi 0, %s81
    %s85 = sphi 0, %s84
    %s101 = sphi 0, %s85
    %s113 = sphi 0, %s115
    %s116 = sphi 0, %s113
    %s117 = sphi 0, %s116
    %s133 = sphi 0, %s117
    %s141 = sphi 0, %s143
    %s144 = sphi 0, %s141
    %s145 = sphi 0, %s144
    %s161 = sphi 0, %s145
    %s169 = sphi 0, %s171
    %s172 = sphi 0, %s169
    %s173 = sphi 0, %s172
    %s189 = sphi 0, %s173
  $region4: #{encoder_forward.4} parent=0 // loop_header_branch
    %14 = sbr.rel (%p12) target = $region8
  $region5: #{encoder_forward.4} parent=0 // loop_body
    %s16 = ssub.s32 %s11, 1
    %s17 = ssub.s32 %s11, 2
    %s30 = sadd.s32 1, %s21
    %p31 = scmp.ge.s32.totalorder %s30, 1
    %s32 = scalar_select %p31, 0, %s30
    %s33 = sadd.s32 1, %s20
    %s34 = scalar_select %p31, %s33, %s20
    %p35 = scmp.ge.s32.totalorder %s34, 4
    %s36 = scalar_select %p35, 0, %s34
    %s37 = sadd.s32 1, %s19
    %s38 = scalar_select %p35, %s37, %s19
    %p39 = scmp.ge.s32.totalorder %s38, 1
    %s40 = scalar_select %p39, 0, %s38
    %s41 = sadd.s32 1, %s18
    %s42 = scalar_select %p39, %s41, %s18
    %p43 = scmp.ge.s32.totalorder %s42, 2
    %s44 = scalar_select %p43, 0, %s42
    %s45 = smul.u32 %s18, 4
    %s46 = sadd.s32 %s45, %s20
    %s47 = smul.u32 %s44, 4
    %s48 = sadd.s32 %s47, %s36
    %s49 = ssub.s32 %s46, %s48
    %s50 = ssub.s32 %s21, %s32
    %s51 = sor.u32 %s49, %s50
    %p52 = scmp.eq.s32.totalorder %s51, 0
    %s54 = sadd.s32 %s53, 1
    %s55 = scalar_select %p52, %s53, %s54
    %p58 = pneg %p52
    %p59 = scmp.eq.s32.totalorder %s11, 7
    %p60 = por %p58, %p59
    %p61 = scmp.ne.s32.totalorder %s53, %s56
    %p62 = scmp.eq.s32.totalorder %s11, 0
    %p63 = por %p61, %p62
    %p64 = scmp.ne.s32.totalorder %s53, %s56
    %p65 = scmp.eq.s32.totalorder %s16, 7
    %p66 = por %p64, %p65
    %p67 = scmp.ne.s32.totalorder %s56, %s57
    %p68 = scmp.eq.s32.totalorder %s16, 0
    %p69 = por %p67, %p68
    %p70 = scmp.ne.s32.totalorder %s56, %s57
    %p71 = scmp.eq.s32.totalorder %s17, 7
    %p72 = por %p70, %p71
    %p74 = scmp.ne.s32.totalorder %s57, %s73
    %p75 = scmp.eq.s32.totalorder %s17, 0
    %p76 = por %p74, %p75
    %s77 = ssub.s32 %s21, %s32
    %s78 = ssub.s32 %s19, %s40
    %s79 = sor.u32 %s77, %s78
    %p80 = scmp.eq.s32.totalorder %s79, 0
    %s82 = sadd.s32 %s81, 1
    %s83 = scalar_select %p80, %s81, %s82
    %p86 = pneg %p80
    %p87 = scmp.eq.s32.totalorder %s11, 7
    %p88 = por %p86, %p87
    %p89 = scmp.ne.s32.totalorder %s81, %s84
    %p90 = scmp.eq.s32.totalorder %s11, 0
    %p91 = por %p89, %p90
    %p92 = scmp.ne.s32.totalorder %s81, %s84
    %p93 = scmp.eq.s32.totalorder %s16, 7
    %p94 = por %p92, %p93
    %p95 = scmp.ne.s32.totalorder %s84, %s85
    %p96 = scmp.eq.s32.totalorder %s16, 0
    %p97 = por %p95, %p96
    %p98 = scmp.ne.s32.totalorder %s84, %s85
    %p99 = scmp.eq.s32.totalorder %s17, 7
    %p100 = por %p98, %p99
    %p102 = scmp.ne.s32.totalorder %s85, %s101
    %p103 = scmp.eq.s32.totalorder %s17, 0
    %p104 = por %p102, %p103
    %s105 = smul.u32 %s18, 4
    %s106 = sadd.s32 %s105, %s20
    %s107 = smul.u32 %s44, 4
    %s108 = sadd.s32 %s107, %s36
    %s109 = ssub.s32 %s106, %s108
    %s110 = ssub.s32 %s19, %s40
    %s111 = sor.u32 %s109, %s110
    %p112 = scmp.eq.s32.totalorder %s111, 0
    %s114 = sadd.s32 %s113, 1
    %s115 = scalar_select %p112, %s113, %s114
    %p118 = pneg %p112
    %p119 = scmp.eq.s32.totalorder %s11, 7
    %p120 = por %p118, %p119
    %p121 = scmp.ne.s32.totalorder %s113, %s116
    %p122 = scmp.eq.s32.totalorder %s11, 0
    %p123 = por %p121, %p122
    %p124 = scmp.ne.s32.totalorder %s113, %s116
    %p125 = scmp.eq.s32.totalorder %s16, 7
    %p126 = por %p124, %p125
    %p127 = scmp.ne.s32.totalorder %s116, %s117
    %p128 = scmp.eq.s32.totalorder %s16, 0
    %p129 = por %p127, %p128
    %p130 = scmp.ne.s32.totalorder %s116, %s117
    %p131 = scmp.eq.s32.totalorder %s17, 7
    %p132 = por %p130, %p131
    %p134 = scmp.ne.s32.totalorder %s117, %s133
    %p135 = scmp.eq.s32.totalorder %s17, 0
    %p136 = por %p134, %p135
    %s137 = ssub.s32 %s18, %s44
    %s138 = ssub.s32 %s19, %s40
    %s139 = sor.u32 %s137, %s138
    %p140 = scmp.eq.s32.totalorder %s139, 0
    %s142 = sadd.s32 %s141, 1
    %s143 = scalar_select %p140, %s141, %s142
    %p146 = pneg %p140
    %p147 = scmp.eq.s32.totalorder %s11, 7
    %p148 = por %p146, %p147
    %p149 = scmp.ne.s32.totalorder %s141, %s144
    %p150 = scmp.eq.s32.totalorder %s11, 0
    %p151 = por %p149, %p150
    %p152 = scmp.ne.s32.totalorder %s141, %s144
    %p153 = scmp.eq.s32.totalorder %s16, 7
    %p154 = por %p152, %p153
    %p155 = scmp.ne.s32.totalorder %s144, %s145
    %p156 = scmp.eq.s32.totalorder %s16, 0
    %p157 = por %p155, %p156
    %p158 = scmp.ne.s32.totalorder %s144, %s145
    %p159 = scmp.eq.s32.totalorder %s17, 7
    %p160 = por %p158, %p159
    %p162 = scmp.ne.s32.totalorder %s145, %s161
    %p163 = scmp.eq.s32.totalorder %s17, 0
    %p164 = por %p162, %p163
    %s165 = ssub.s32 %s18, %s44
    %s166 = ssub.s32 %s19, %s40
    %s167 = sor.u32 %s165, %s166
    %p168 = scmp.eq.s32.totalorder %s167, 0
    %s170 = sadd.s32 %s169, 1
    %s171 = scalar_select %p168, %s169, %s170
    %p174 = pneg %p168
    %p175 = scmp.eq.s32.totalorder %s11, 7
    %p176 = por %p174, %p175
    %p177 = scmp.ne.s32.totalorder %s169, %s172
    %p178 = scmp.eq.s32.totalorder %s11, 0
    %p179 = por %p177, %p178
    %p180 = scmp.ne.s32.totalorder %s169, %s172
    %p181 = scmp.eq.s32.totalorder %s16, 7
    %p182 = por %p180, %p181
    %p183 = scmp.ne.s32.totalorder %s172, %s173
    %p184 = scmp.eq.s32.totalorder %s16, 0
    %p185 = por %p183, %p184
    %p186 = scmp.ne.s32.totalorder %s172, %s173
    %p187 = scmp.eq.s32.totalorder %s17, 7
    %p188 = por %p186, %p187
    %p190 = scmp.ne.s32.totalorder %s173, %s189
    %p191 = scmp.eq.s32.totalorder %s17, 0
    %p192 = por %p190, %p191
    %p193 = scmp.le.s32.totalorder 1, %s11
    %p194 = scmp.lt.s32.totalorder %s11, 9
    %p195 = pnand %p193, %p194
    %p196 = pneg %p195
    // Predicated region
    $region9: #{encoder_forward.4} parent=5 // pred_check
      _
    $region10: #{encoder_forward.4} parent=5 // pred_check_branch
      %198 = sbr.rel (%p195) target = $region12
    $region11: #{encoder_forward.4} parent=5 // pred_region
      %s199 = ssub.s32 %s11, 1
      // Predicated region
      $region13: #{encoder_forward.4} parent=11 // pred_check
        %p200 = pneg %p97
      $region14: #{encoder_forward.4} parent=11 // pred_check_branch
        %202 = sbr.rel (%p200) target = $region16
      $region15: #{encoder_forward.4} parent=11 // pred_region
        %s203 = smul.u32 6, %s25
        %p204 = scmp.lt.s32.totalorder %s203, 5
        %s205 = scalar_select %p204, %s203, 5
        %p206 = scmp.lt.s32.totalorder %s23, 0
        %s207 = scalar_select %p206, %s23, 0
        %s208 = sadd.s32 %s207, %s205
        %s209 = smul.addr %s208, 4
        %s210 = scalar_lea.vmem %s1, %s209
        %s211 = smul.u32 6, %s25
      $region16: #{encoder_forward.4} parent=11 // pred_fallthru
        _
    $region12: #{encoder_forward.4} parent=5 // pred_fallthru
      _
    %p212 = scmp.lt.s32.totalorder %s11, 8
    // Predicated region
    $region17: #{encoder_forward.4} parent=5 // pred_check
      %p213 = pneg %p212
    $region18: #{encoder_forward.4} parent=5 // pred_check_branch
      %215 = sbr.rel (%p213) target = $region20
    $region19: #{encoder_forward.4} parent=5 // pred_region
      // Predicated region
      $region21: #{encoder_forward.4} parent=19 // pred_check
        %p216 = pneg %p63
      $region22: #{encoder_forward.4} parent=19 // pred_check_branch
        %218 = sbr.rel (%p216) target = $region24
      $region23: #{encoder_forward.4} parent=19 // pred_region
        %s219 = smul.u32 %s18, 4
        %s220 = sadd.s32 %s219, %s20
        %s221 = smul.u32 64, %s220
        %p222 = scmp.lt.s32.totalorder %s221, 511
        %s223 = scalar_select %p222, %s221, 511
        %p224 = scmp.lt.s32.totalorder %s21, 0
        %s225 = scalar_select %p224, %s21, 0
        %s226 = sadd.s32 %s225, %s223
        %s227 = smul.addr %s226, 4
        %s228 = scalar_lea.vmem %s0, %s227
        %s229 = smul.u32 %s18, 4
        %s230 = sadd.s32 %s229, %s20
        %s231 = smul.u32 64, %s230
      $region24: #{encoder_forward.4} parent=19 // pred_fallthru
        _
    $region20: #{encoder_forward.4} parent=5 // pred_fallthru
      _
    %p232 = scmp.le.s32.totalorder 1, %s11
    %p233 = scmp.lt.s32.totalorder %s11, 9
    %p234 = pnand %p232, %p233
    %p235 = pneg %p234
    // Predicated region
    $region25: #{encoder_forward.4} parent=5 // pred_check
      _
    $region26: #{encoder_forward.4} parent=5 // pred_check_branch
      %237 = sbr.rel (%p234) target = $region28
    $region27: #{encoder_forward.4} parent=5 // pred_region
      %s238 = ssub.s32 %s11, 1
      %s239 = smul.u32 %s22, 4
      %s240 = sadd.s32 %s239, %s24
      %s241 = smul.u32 64, %s240
      %p242 = scmp.lt.s32.totalorder %s241, 511
      %s243 = scalar_select %p242, %s241, 511
      %p244 = scmp.lt.s32.totalorder %s25, 0
      %s245 = scalar_select %p244, %s25, 0
      %s246 = sadd.s32 %s245, %s243
      %s247 = smul.addr %s246, 4
      %s248 = scalar_lea.vmem %s0, %s247
      %p249 = pneg %p69
      %p250 = pneg %p66
      %s251 = smul.u32 6, %s25
      %p252 = scmp.lt.s32.totalorder %s251, 5
      %s253 = scalar_select %p252, %s251, 5
      %p254 = scmp.lt.s32.totalorder %s23, 0
      %s255 = scalar_select %p254, %s23, 0
      %s256 = sadd.s32 %s255, %s253
      %s257 = smul.addr %s256, 4
      %s258 = scalar_lea.vmem %s1, %s257
      %p259 = pneg %p97
      %p260 = pneg %p94
      %p261 = pneg %p129
      %p262 = pneg %p126
      %s263 = smul.u32 %s22, 4
      %s264 = sadd.s32 %s263, %s24
      %s265 = smul.u32 64, %s264
      %p266 = scmp.lt.s32.totalorder %s265, 511
      %s267 = scalar_select %p266, %s265, 511
      %p268 = scmp.lt.s32.totalorder %s23, 0
      %s269 = scalar_select %p268, %s23, 0
      %s270 = sadd.s32 %s269, %s267
      %s271 = smul.addr %s270, 4
      %s272 = scalar_lea.vmem %s2, %s271
      %p273 = pneg %p157
      %p274 = pneg %p154
      %p275 = scmp.lt.s32.totalorder %s22, 1
      %s276 = scalar_select %p275, %s22, 1
      %p277 = scmp.lt.s32.totalorder %s23, 0
      %s278 = scalar_select %p277, %s23, 0
      %s279 = sadd.s32 %s278, %s276
      %s280 = smul.addr %s279, 8
      %s281 = scalar_lea.vmem %s3, %s280
      %p282 = pneg %p185
      %p283 = pneg %p182
      %p284 = scmp.lt.s32.totalorder %s22, 1
      %s285 = scalar_select %p284, %s22, 1
      %p286 = scmp.lt.s32.totalorder %s23, 0
      %s287 = scalar_select %p286, %s23, 0
      %s288 = sadd.s32 %s287, %s285
      %s289 = smul.addr %s288, 8
      %s290 = scalar_lea.vmem %s4, %s289
      %s291 = smul.u32 %s22, 4
      %s292 = sadd.s32 %s291, %s24
      %s293 = smul.u32 64, %s292
      %p294 = scmp.lt.s32.totalorder %s293, 511
      %s295 = scalar_select %p294, %s293, 511
      %p296 = scmp.lt.s32.totalorder %s25, 0
      %s297 = scalar_select %p296, %s25, 0
      %s298 = sadd.s32 %s297, %s295
      %s299 = smul.addr %s298, 4
      %s300 = scalar_lea.vmem %s0, %s299
      %s301 = smul.u32 %s22, 4
      %s302 = sadd.s32 %s301, %s24
      %s303 = smul.u32 64, %s302
      %s304 = smul.u32 6, %s25
      %p305 = scmp.lt.s32.totalorder %s304, 5
      %s306 = scalar_select %p305, %s304, 5
      %p307 = scmp.lt.s32.totalorder %s23, 0
      %s308 = scalar_select %p307, %s23, 0
      %s309 = sadd.s32 %s308, %s306
      %s310 = smul.addr %s309, 4
      %s311 = scalar_lea.vmem %s1, %s310
      %s312 = smul.u32 6, %s25
      %s313 = smul.u32 %s22, 4
      %s314 = sadd.s32 %s313, %s24
      %s315 = smul.u32 64, %s314
      %p316 = scmp.lt.s32.totalorder %s315, 511
      %s317 = scalar_select %p316, %s315, 511
      %p318 = scmp.lt.s32.totalorder %s23, 0
      %s319 = scalar_select %p318, %s23, 0
      %s320 = sadd.s32 %s319, %s317
      %s321 = smul.addr %s320, 4
      %s322 = scalar_lea.vmem %s2, %s321
      %s323 = smul.u32 %s22, 4
      %s324 = sadd.s32 %s323, %s24
      %s325 = smul.u32 64, %s324
      %p326 = scmp.lt.s32.totalorder %s22, 1
      %s327 = scalar_select %p326, %s22, 1
      %p328 = scmp.lt.s32.totalorder %s23, 0
      %s329 = scalar_select %p328, %s23, 0
      %s330 = sadd.s32 %s329, %s327
      %s331 = smul.addr %s330, 8
      %s332 = scalar_lea.vmem %s3, %s331
      %p333 = scmp.lt.s32.totalorder %s22, 1
      %s334 = scalar_select %p333, %s22, 1
      %p335 = scmp.lt.s32.totalorder %s23, 0
      %s336 = scalar_select %p335, %s23, 0
      %s337 = sadd.s32 %s336, %s334
      %s338 = smul.addr %s337, 8
      %s339 = scalar_lea.vmem %s4, %s338
      %p341 = scmp.eq.s32.totalorder %s25, 0
      // Predicated region
      $region29: #{encoder_forward.4} parent=27 // pred_check
        %p342 = pneg %p341
      $region30: #{encoder_forward.4} parent=27 // pred_check_branch
        %344 = sbr.rel (%p342) target = $region32
      $region31: #{encoder_forward.4} parent=27 // pred_region
        %345 = vst [vmem:[#allocation2] sm:$0xff] 0.0
        %346 = vst [vmem:[#allocation2 + $0x8] sm:$0xff] 0.0
        %347 = vst [vmem:[#allocation2 + $0x10] sm:$0xff] 0.0
        %348 = vst [vmem:[#allocation2 + $0x18] sm:$0xff] 0.0
        %349 = vst [vmem:[#allocation2 + $0x20] sm:$0xff] 0.0
        %350 = vst [vmem:[#allocation2 + $0x28] sm:$0xff] 0.0
        %351 = vst [vmem:[#allocation2 + $0x30] sm:$0xff] 0.0
        %352 = vst [vmem:[#allocation2 + $0x38] sm:$0xff] 0.0
        %353 = vst [vmem:[#allocation2 + $0x40] sm:$0xff] 0.0
        %354 = vst [vmem:[#allocation2 + $0x48] sm:$0xff] 0.0
        %355 = vst [vmem:[#allocation2 + $0x50] sm:$0xff] 0.0
        %356 = vst [vmem:[#allocation2 + $0x58] sm:$0xff] 0.0
        %357 = vst [vmem:[#allocation2 + $0x60] sm:$0xff] 0.0
        %358 = vst [vmem:[#allocation2 + $0x68] sm:$0xff] 0.0
        %359 = vst [vmem:[#allocation2 + $0x70] sm:$0xff] 0.0
        %360 = vst [vmem:[#allocation2 + $0x78] sm:$0xff] 0.0
        %361 = vst [vmem:[#allocation2 + $0x80] sm:$0xff] 0.0
        %362 = vst [vmem:[#allocation2 + $0x88] sm:$0xff] 0.0
        %363 = vst [vmem:[#allocation2 + $0x90] sm:$0xff] 0.0
        %364 = vst [vmem:[#allocation2 + $0x98] sm:$0xff] 0.0
        %365 = vst [vmem:[#allocation2 + $0xa0] sm:$0xff] 0.0
        %366 = vst [vmem:[#allocation2 + $0xa8] sm:$0xff] 0.0
        %367 = vst [vmem:[#allocation2 + $0xb0] sm:$0xff] 0.0
        %368 = vst [vmem:[#allocation2 + $0xb8] sm:$0xff] 0.0
        %369 = vst [vmem:[#allocation2 + $0xc0] sm:$0xff] 0.0
        %370 = vst [vmem:[#allocation2 + $0xc8] sm:$0xff] 0.0
        %371 = vst [vmem:[#allocation2 + $0xd0] sm:$0xff] 0.0
        %372 = vst [vmem:[#allocation2 + $0xd8] sm:$0xff] 0.0
        %373 = vst [vmem:[#allocation2 + $0xe0] sm:$0xff] 0.0
        %374 = vst [vmem:[#allocation2 + $0xe8] sm:$0xff] 0.0
        %375 = vst [vmem:[#allocation2 + $0xf0] sm:$0xff] 0.0
        %376 = vst [vmem:[#allocation2 + $0xf8] sm:$0xff] 0.0
        %377 = vst [vmem:[#allocation2 + $0x100] sm:$0xff] 0.0
        %378 = vst [vmem:[#allocation2 + $0x108] sm:$0xff] 0.0
        %379 = vst [vmem:[#allocation2 + $0x110] sm:$0xff] 0.0
        %380 = vst [vmem:[#allocation2 + $0x118] sm:$0xff] 0.0
        %381 = vst [vmem:[#allocation2 + $0x120] sm:$0xff] 0.0
        %382 = vst [vmem:[#allocation2 + $0x128] sm:$0xff] 0.0
        %383 = vst [vmem:[#allocation2 + $0x130] sm:$0xff] 0.0
        %384 = vst [vmem:[#allocation2 + $0x138] sm:$0xff] 0.0
        %385 = vst [vmem:[#allocation2 + $0x140] sm:$0xff] 0.0
        %386 = vst [vmem:[#allocation2 + $0x148] sm:$0xff] 0.0
        %387 = vst [vmem:[#allocation2 + $0x150] sm:$0xff] 0.0
        %388 = vst [vmem:[#allocation2 + $0x158] sm:$0xff] 0.0
        %389 = vst [vmem:[#allocation2 + $0x160] sm:$0xff] 0.0
        %390 = vst [vmem:[#allocation2 + $0x168] sm:$0xff] 0.0
        %391 = vst [vmem:[#allocation2 + $0x170] sm:$0xff] 0.0
        %392 = vst [vmem:[#allocation2 + $0x178] sm:$0xff] 0.0
        %393 = vst [vmem:[#allocation2 + $0x180] sm:$0xff] 0.0
        %394 = vst [vmem:[#allocation2 + $0x188] sm:$0xff] 0.0
        %395 = vst [vmem:[#allocation2 + $0x190] sm:$0xff] 0.0
        %396 = vst [vmem:[#allocation2 + $0x198] sm:$0xff] 0.0
        %397 = vst [vmem:[#allocation2 + $0x1a0] sm:$0xff] 0.0
        %398 = vst [vmem:[#allocation2 + $0x1a8] sm:$0xff] 0.0
        %399 = vst [vmem:[#allocation2 + $0x1b0] sm:$0xff] 0.0
        %400 = vst [vmem:[#allocation2 + $0x1b8] sm:$0xff] 0.0
        %401 = vst [vmem:[#allocation2 + $0x1c0] sm:$0xff] 0.0
        %402 = vst [vmem:[#allocation2 + $0x1c8] sm:$0xff] 0.0
        %403 = vst [vmem:[#allocation2 + $0x1d0] sm:$0xff] 0.0
        %404 = vst [vmem:[#allocation2 + $0x1d8] sm:$0xff] 0.0
        %405 = vst [vmem:[#allocation2 + $0x1e0] sm:$0xff] 0.0
        %406 = vst [vmem:[#allocation2 + $0x1e8] sm:$0xff] 0.0
        %407 = vst [vmem:[#allocation2 + $0x1f0] sm:$0xff] 0.0
        %408 = vst [vmem:[#allocation2 + $0x1f8] sm:$0xff] 0.0
      $region32: #{encoder_forward.4} parent=27 // pred_fallthru
        _
      %v409 = vld [vmem:[#allocation2] sm:$0xff]
      %v410 = vld [vmem:[#allocation2 + $0x8] sm:$0xff]
      %v411 = vld [vmem:[#allocation2 + $0x10] sm:$0xff]
      %v412 = vld [vmem:[#allocation2 + $0x18] sm:$0xff]
      %v413 = vld [vmem:[#allocation2 + $0x20] sm:$0xff]
      %v414 = vld [vmem:[#allocation2 + $0x28] sm:$0xff]
      %v415 = vld [vmem:[#allocation2 + $0x30] sm:$0xff]
      %v416 = vld [vmem:[#allocation2 + $0x38] sm:$0xff]
      %v417 = vld [vmem:[#allocation2 + $0x40] sm:$0xff]
      %v418 = vld [vmem:[#allocation2 + $0x48] sm:$0xff]
      %v419 = vld [vmem:[#allocation2 + $0x50] sm:$0xff]
      %v420 = vld [vmem:[#allocation2 + $0x58] sm:$0xff]
      %v421 = vld [vmem:[#allocation2 + $0x60] sm:$0xff]
      %v422 = vld [vmem:[#allocation2 + $0x68] sm:$0xff]
      %v423 = vld [vmem:[#allocation2 + $0x70] sm:$0xff]
      %v424 = vld [vmem:[#allocation2 + $0x78] sm:$0xff]
      %v425 = vld [vmem:[#allocation2 + $0x80] sm:$0xff]
      %v426 = vld [vmem:[#allocation2 + $0x88] sm:$0xff]
      %v427 = vld [vmem:[#allocation2 + $0x90] sm:$0xff]
      %v428 = vld [vmem:[#allocation2 + $0x98] sm:$0xff]
      %v429 = vld [vmem:[#allocation2 + $0xa0] sm:$0xff]
      %v430 = vld [vmem:[#allocation2 + $0xa8] sm:$0xff]
      %v431 = vld [vmem:[#allocation2 + $0xb0] sm:$0xff]
      %v432 = vld [vmem:[#allocation2 + $0xb8] sm:$0xff]
      %v433 = vld [vmem:[#allocation2 + $0xc0] sm:$0xff]
      %v434 = vld [vmem:[#allocation2 + $0xc8] sm:$0xff]
      %v435 = vld [vmem:[#allocation2 + $0xd0] sm:$0xff]
      %v436 = vld [vmem:[#allocation2 + $0xd8] sm:$0xff]
      %v437 = vld [vmem:[#allocation2 + $0xe0] sm:$0xff]
      %v438 = vld [vmem:[#allocation2 + $0xe8] sm:$0xff]
      %v439 = vld [vmem:[#allocation2 + $0xf0] sm:$0xff]
      %v440 = vld [vmem:[#allocation2 + $0xf8] sm:$0xff]
      %v441 = vld [vmem:[#allocation2 + $0x100] sm:$0xff]
      %v442 = vld [vmem:[#allocation2 + $0x108] sm:$0xff]
      %v443 = vld [vmem:[#allocation2 + $0x110] sm:$0xff]
      %v444 = vld [vmem:[#allocation2 + $0x118] sm:$0xff]
      %v445 = vld [vmem:[#allocation2 + $0x120] sm:$0xff]
      %v446 = vld [vmem:[#allocation2 + $0x128] sm:$0xff]
      %v447 = vld [vmem:[#allocation2 + $0x130] sm:$0xff]
      %v448 = vld [vmem:[#allocation2 + $0x138] sm:$0xff]
      %v449 = vld [vmem:[#allocation2 + $0x140] sm:$0xff]
      %v450 = vld [vmem:[#allocation2 + $0x148] sm:$0xff]
      %v451 = vld [vmem:[#allocation2 + $0x150] sm:$0xff]
      %v452 = vld [vmem:[#allocation2 + $0x158] sm:$0xff]
      %v453 = vld [vmem:[#allocation2 + $0x160] sm:$0xff]
      %v454 = vld [vmem:[#allocation2 + $0x168] sm:$0xff]
      %v455 = vld [vmem:[#allocation2 + $0x170] sm:$0xff]
      %v456 = vld [vmem:[#allocation2 + $0x178] sm:$0xff]
      %v457 = vld [vmem:[#allocation2 + $0x180] sm:$0xff]
      %v458 = vld [vmem:[#allocation2 + $0x188] sm:$0xff]
      %v459 = vld [vmem:[#allocation2 + $0x190] sm:$0xff]
      %v460 = vld [vmem:[#allocation2 + $0x198] sm:$0xff]
      %v461 = vld [vmem:[#allocation2 + $0x1a0] sm:$0xff]
      %v462 = vld [vmem:[#allocation2 + $0x1a8] sm:$0xff]
      %v463 = vld [vmem:[#allocation2 + $0x1b0] sm:$0xff]
      %v464 = vld [vmem:[#allocation2 + $0x1b8] sm:$0xff]
      %v465 = vld [vmem:[#allocation2 + $0x1c0] sm:$0xff]
      %v466 = vld [vmem:[#allocation2 + $0x1c8] sm:$0xff]
      %v467 = vld [vmem:[#allocation2 + $0x1d0] sm:$0xff]
      %v468 = vld [vmem:[#allocation2 + $0x1d8] sm:$0xff]
      %v469 = vld [vmem:[#allocation2 + $0x1e0] sm:$0xff]
      %v470 = vld [vmem:[#allocation2 + $0x1e8] sm:$0xff]
      %v471 = vld [vmem:[#allocation2 + $0x1f0] sm:$0xff]
      %v472 = vld [vmem:[#allocation2 + $0x1f8] sm:$0xff]
      %v473 = vld [vmem:[%s300] sm:$0xf]
      %v474 = vld [vmem:[%s300 + $0x4] sm:$0xf]
      %v475 = vld [vmem:[%s300 + $0x8] sm:$0xf]
      %v476 = vld [vmem:[%s300 + $0xc] sm:$0xf]
      %v477 = vld [vmem:[%s300 + $0x10] sm:$0xf]
      %v478 = vld [vmem:[%s300 + $0x14] sm:$0xf]
      %v479 = vld [vmem:[%s300 + $0x18] sm:$0xf]
      %v480 = vld [vmem:[%s300 + $0x1c] sm:$0xf]
      %v481 = vld [vmem:[%s300 + $0x20] sm:$0xf]
      %v482 = vld [vmem:[%s300 + $0x24] sm:$0xf]
      %v483 = vld [vmem:[%s300 + $0x28] sm:$0xf]
      %v484 = vld [vmem:[%s300 + $0x2c] sm:$0xf]
      %v485 = vld [vmem:[%s300 + $0x30] sm:$0xf]
      %v486 = vld [vmem:[%s300 + $0x34] sm:$0xf]
      %v487 = vld [vmem:[%s300 + $0x38] sm:$0xf]
      %v488 = vld [vmem:[%s300 + $0x3c] sm:$0xf]
      %v489 = vld [vmem:[%s300 + $0x40] sm:$0xf]
      %v490 = vld [vmem:[%s300 + $0x44] sm:$0xf]
      %v491 = vld [vmem:[%s300 + $0x48] sm:$0xf]
      %v492 = vld [vmem:[%s300 + $0x4c] sm:$0xf]
      %v493 = vld [vmem:[%s300 + $0x50] sm:$0xf]
      %v494 = vld [vmem:[%s300 + $0x54] sm:$0xf]
      %v495 = vld [vmem:[%s300 + $0x58] sm:$0xf]
      %v496 = vld [vmem:[%s300 + $0x5c] sm:$0xf]
      %v497 = vld [vmem:[%s300 + $0x60] sm:$0xf]
      %v498 = vld [vmem:[%s300 + $0x64] sm:$0xf]
      %v499 = vld [vmem:[%s300 + $0x68] sm:$0xf]
      %v500 = vld [vmem:[%s300 + $0x6c] sm:$0xf]
      %v501 = vld [vmem:[%s300 + $0x70] sm:$0xf]
      %v502 = vld [vmem:[%s300 + $0x74] sm:$0xf]
      %v503 = vld [vmem:[%s300 + $0x78] sm:$0xf]
      %v504 = vld [vmem:[%s300 + $0x7c] sm:$0xf]
      %v505 = vld [vmem:[%s300 + $0x80] sm:$0xf]
      %v506 = vld [vmem:[%s300 + $0x84] sm:$0xf]
      %v507 = vld [vmem:[%s300 + $0x88] sm:$0xf]
      %v508 = vld [vmem:[%s300 + $0x8c] sm:$0xf]
      %v509 = vld [vmem:[%s300 + $0x90] sm:$0xf]
      %v510 = vld [vmem:[%s300 + $0x94] sm:$0xf]
      %v511 = vld [vmem:[%s300 + $0x98] sm:$0xf]
      %v512 = vld [vmem:[%s300 + $0x9c] sm:$0xf]
      %v513 = vld [vmem:[%s300 + $0xa0] sm:$0xf]
      %v514 = vld [vmem:[%s300 + $0xa4] sm:$0xf]
      %v515 = vld [vmem:[%s300 + $0xa8] sm:$0xf]
      %v516 = vld [vmem:[%s300 + $0xac] sm:$0xf]
      %v517 = vld [vmem:[%s300 + $0xb0] sm:$0xf]
      %v518 = vld [vmem:[%s300 + $0xb4] sm:$0xf]
      %v519 = vld [vmem:[%s300 + $0xb8] sm:$0xf]
      %v520 = vld [vmem:[%s300 + $0xbc] sm:$0xf]
      %v521 = vld [vmem:[%s300 + $0xc0] sm:$0xf]
      %v522 = vld [vmem:[%s300 + $0xc4] sm:$0xf]
      %v523 = vld [vmem:[%s300 + $0xc8] sm:$0xf]
      %v524 = vld [vmem:[%s300 + $0xcc] sm:$0xf]
      %v525 = vld [vmem:[%s300 + $0xd0] sm:$0xf]
      %v526 = vld [vmem:[%s300 + $0xd4] sm:$0xf]
      %v527 = vld [vmem:[%s300 + $0xd8] sm:$0xf]
      %v528 = vld [vmem:[%s300 + $0xdc] sm:$0xf]
      %v529 = vld [vmem:[%s300 + $0xe0] sm:$0xf]
      %v530 = vld [vmem:[%s300 + $0xe4] sm:$0xf]
      %v531 = vld [vmem:[%s300 + $0xe8] sm:$0xf]
      %v532 = vld [vmem:[%s300 + $0xec] sm:$0xf]
      %v533 = vld [vmem:[%s300 + $0xf0] sm:$0xf]
      %v534 = vld [vmem:[%s300 + $0xf4] sm:$0xf]
      %v535 = vld [vmem:[%s300 + $0xf8] sm:$0xf]
      %v536 = vld [vmem:[%s300 + $0xfc] sm:$0xf]
      %v537 = vld [vmem:[%s311] sm:$0xf]
      %v538 = vld [vmem:[%s311 + $0x4] sm:$0xf]
      %v539 = vld [vmem:[%s311 + $0x8] sm:$0xf]
      %v540 = vld [vmem:[%s311 + $0xc] sm:$0xf]
      %v541 = vld [vmem:[%s311 + $0x10] sm:$0xf]
      %v542 = vld [vmem:[%s311 + $0x14] sm:$0xf]
      %v607 = vunpack.c.l.b16 %v473
      %v608 = vunpack.c.l.b16 %v474
      %v609 = vunpack.c.l.b16 %v475
      %v610 = vunpack.c.l.b16 %v476
      %v611 = vunpack.c.l.b16 %v477
      %v612 = vunpack.c.l.b16 %v478
      %v613 = vunpack.c.l.b16 %v479
      %v614 = vunpack.c.l.b16 %v480
      %v615 = vunpack.c.l.b16 %v481
      %v616 = vunpack.c.l.b16 %v482
      %v617 = vunpack.c.l.b16 %v483
      %v618 = vunpack.c.l.b16 %v484
      %v619 = vunpack.c.l.b16 %v485
      %v620 = vunpack.c.l.b16 %v486
      %v621 = vunpack.c.l.b16 %v487
      %v622 = vunpack.c.l.b16 %v488
      %v623 = vunpack.c.l.b16 %v489
      %v624 = vunpack.c.l.b16 %v490
      %v625 = vunpack.c.l.b16 %v491
      %v626 = vunpack.c.l.b16 %v492
      %v627 = vunpack.c.l.b16 %v493
      %v628 = vunpack.c.l.b16 %v494
      %v629 = vunpack.c.l.b16 %v495
      %v630 = vunpack.c.l.b16 %v496
      %v631 = vunpack.c.l.b16 %v497
      %v632 = vunpack.c.l.b16 %v498
      %v633 = vunpack.c.l.b16 %v499
      %v634 = vunpack.c.l.b16 %v500
      %v635 = vunpack.c.l.b16 %v501
      %v636 = vunpack.c.l.b16 %v502
      %v637 = vunpack.c.l.b16 %v503
      %v638 = vunpack.c.l.b16 %v504
      %v639 = vunpack.c.l.b16 %v505
      %v640 = vunpack.c.l.b16 %v506
      %v641 = vunpack.c.l.b16 %v507
      %v642 = vunpack.c.l.b16 %v508
      %v643 = vunpack.c.l.b16 %v509
      %v644 = vunpack.c.l.b16 %v510
      %v645 = vunpack.c.l.b16 %v511
      %v646 = vunpack.c.l.b16 %v512
      %v647 = vunpack.c.l.b16 %v513
      %v648 = vunpack.c.l.b16 %v514
      %v649 = vunpack.c.l.b16 %v515
      %v650 = vunpack.c.l.b16 %v516
      %v651 = vunpack.c.l.b16 %v517
      %v652 = vunpack.c.l.b16 %v518
      %v653 = vunpack.c.l.b16 %v519
      %v654 = vunpack.c.l.b16 %v520
      %v655 = vunpack.c.l.b16 %v521
      %v656 = vunpack.c.l.b16 %v522
      %v657 = vunpack.c.l.b16 %v523
      %v658 = vunpack.c.l.b16 %v524
      %v659 = vunpack.c.l.b16 %v525
      %v660 = vunpack.c.l.b16 %v526
      %v661 = vunpack.c.l.b16 %v527
      %v662 = vunpack.c.l.b16 %v528
      %v663 = vunpack.c.l.b16 %v529
      %v664 = vunpack.c.l.b16 %v530
      %v665 = vunpack.c.l.b16 %v531
      %v666 = vunpack.c.l.b16 %v532
      %v667 = vunpack.c.l.b16 %v533
      %v668 = vunpack.c.l.b16 %v534
      %v669 = vunpack.c.l.b16 %v535
      %v670 = vunpack.c.l.b16 %v536
      %v671 = vpack.c.b16 %v608, %v607
      %v672 = vpack.c.b16 %v610, %v609
      %v673 = vpack.c.b16 %v612, %v611
      %v674 = vpack.c.b16 %v614, %v613
      %v675 = vpack.c.b16 %v616, %v615
      %v676 = vpack.c.b16 %v618, %v617
      %v677 = vpack.c.b16 %v620, %v619
      %v678 = vpack.c.b16 %v622, %v621
      %v679 = vpack.c.b16 %v624, %v623
      %v680 = vpack.c.b16 %v626, %v625
      %v681 = vpack.c.b16 %v628, %v627
      %v682 = vpack.c.b16 %v630, %v629
      %v683 = vpack.c.b16 %v632, %v631
      %v684 = vpack.c.b16 %v634, %v633
      %v685 = vpack.c.b16 %v636, %v635
      %v686 = vpack.c.b16 %v638, %v637
      %v687 = vpack.c.b16 %v640, %v639
      %v688 = vpack.c.b16 %v642, %v641
      %v689 = vpack.c.b16 %v644, %v643
      %v690 = vpack.c.b16 %v646, %v645
      %v691 = vpack.c.b16 %v648, %v647
      %v692 = vpack.c.b16 %v650, %v649
      %v693 = vpack.c.b16 %v652, %v651
      %v694 = vpack.c.b16 %v654, %v653
      %v695 = vpack.c.b16 %v656, %v655
      %v696 = vpack.c.b16 %v658, %v657
      %v697 = vpack.c.b16 %v660, %v659
      %v698 = vpack.c.b16 %v662, %v661
      %v699 = vpack.c.b16 %v664, %v663
      %v700 = vpack.c.b16 %v666, %v665
      %v701 = vpack.c.b16 %v668, %v667
      %v702 = vpack.c.b16 %v670, %v669
      %v709 = vunpack.c.l.b16 %v537
      %v710 = vunpack.c.l.b16 %v538
      %v711 = vunpack.c.l.b16 %v539
      %v712 = vunpack.c.l.b16 %v540
      %v713 = vunpack.c.l.b16 %v541
      %v714 = vunpack.c.l.b16 %v542
      %v715 = vpack.c.b16 %v710, %v709
      %v716 = vpack.c.b16 %v712, %v711
      %v717 = vpack.c.b16 %v714, %v713
      %vm721 = vcmask 392192
      %v723 = vsel %vm721, %v671, 0
      %v726 = vsel %vm721, %v672, 0
      %v729 = vsel %vm721, %v673, 0
      %v732 = vsel %vm721, %v674, 0
      %v735 = vsel %vm721, %v675, 0
      %v738 = vsel %vm721, %v676, 0
      %v741 = vsel %vm721, %v677, 0
      %v744 = vsel %vm721, %v678, 0
      %v747 = vsel %vm721, %v679, 0
      %v750 = vsel %vm721, %v680, 0
      %v753 = vsel %vm721, %v681, 0
      %v756 = vsel %vm721, %v682, 0
      %v759 = vsel %vm721, %v683, 0
      %v762 = vsel %vm721, %v684, 0
      %v765 = vsel %vm721, %v685, 0
      %v768 = vsel %vm721, %v686, 0
      %v771 = vsel %vm721, %v687, 0
      %v774 = vsel %vm721, %v688, 0
      %v777 = vsel %vm721, %v689, 0
      %v780 = vsel %vm721, %v690, 0
      %v783 = vsel %vm721, %v691, 0
      %v786 = vsel %vm721, %v692, 0
      %v789 = vsel %vm721, %v693, 0
      %v792 = vsel %vm721, %v694, 0
      %v795 = vsel %vm721, %v695, 0
      %v798 = vsel %vm721, %v696, 0
      %v801 = vsel %vm721, %v697, 0
      %v804 = vsel %vm721, %v698, 0
      %v807 = vsel %vm721, %v699, 0
      %v810 = vsel %vm721, %v700, 0
      %v813 = vsel %vm721, %v701, 0
      %v816 = vsel %vm721, %v702, 0
      %818 = vmatpush.bf16.msra.mxu0 0
      %819 = vmatpush.bf16.msra.mxu0 0
      %820 = vmatpush.bf16.msra.mxu0 0
      %821 = vmatpush.bf16.msra.mxu0 0
      %822 = vmatpush.bf16.msra.mxu0 0
      %823 = vmatpush.bf16.msra.mxu0 %v717
      %824 = vmatpush.bf16.msra.mxu0 %v716
      %825 = vmatpush.bf16.msra.mxu0 %v715
      %826 = vmatmul.bf16.gmra.mxu0 %v723
      %v827 = vpop.f32.mrf.mxu0
      %v828 = vadd.f32 0.0, %v827
      %v829 = vpop.f32.mrf.mxu0
      %v830 = vadd.f32 0.0, %v829
      %831 = vmatmul.bf16.gmra.mxu0 %v726
      %v832 = vpop.f32.mrf.mxu0
      %v833 = vadd.f32 0.0, %v832
      %v834 = vpop.f32.mrf.mxu0
      %v835 = vadd.f32 0.0, %v834
      %836 = vmatmul.bf16.gmra.mxu0 %v729
      %v837 = vpop.f32.mrf.mxu0
      %v838 = vadd.f32 0.0, %v837
      %v839 = vpop.f32.mrf.mxu0
      %v840 = vadd.f32 0.0, %v839
      %841 = vmatmul.bf16.gmra.mxu0 %v732
      %v842 = vpop.f32.mrf.mxu0
      %v843 = vadd.f32 0.0, %v842
      %v844 = vpop.f32.mrf.mxu0
      %v845 = vadd.f32 0.0, %v844
      %846 = vmatmul.bf16.gmra.mxu0 %v735
      %v847 = vpop.f32.mrf.mxu0
      %v848 = vadd.f32 0.0, %v847
      %v849 = vpop.f32.mrf.mxu0
      %v850 = vadd.f32 0.0, %v849
      %851 = vmatmul.bf16.gmra.mxu0 %v738
      %v852 = vpop.f32.mrf.mxu0
      %v853 = vadd.f32 0.0, %v852
      %v854 = vpop.f32.mrf.mxu0
      %v855 = vadd.f32 0.0, %v854
      %856 = vmatmul.bf16.gmra.mxu0 %v741
      %v857 = vpop.f32.mrf.mxu0
      %v858 = vadd.f32 0.0, %v857
      %v859 = vpop.f32.mrf.mxu0
      %v860 = vadd.f32 0.0, %v859
      %861 = vmatmul.bf16.gmra.mxu0 %v744
      %v862 = vpop.f32.mrf.mxu0
      %v863 = vadd.f32 0.0, %v862
      %v864 = vpop.f32.mrf.mxu0
      %v865 = vadd.f32 0.0, %v864
      %866 = vmatmul.bf16.gmra.mxu0 %v747
      %v867 = vpop.f32.mrf.mxu0
      %v868 = vadd.f32 0.0, %v867
      %v869 = vpop.f32.mrf.mxu0
      %v870 = vadd.f32 0.0, %v869
      %871 = vmatmul.bf16.gmra.mxu0 %v750
      %v872 = vpop.f32.mrf.mxu0
      %v873 = vadd.f32 0.0, %v872
      %v874 = vpop.f32.mrf.mxu0
      %v875 = vadd.f32 0.0, %v874
      %876 = vmatmul.bf16.gmra.mxu0 %v753
      %v877 = vpop.f32.mrf.mxu0
      %v878 = vadd.f32 0.0, %v877
      %v879 = vpop.f32.mrf.mxu0
      %v880 = vadd.f32 0.0, %v879
      %881 = vmatmul.bf16.gmra.mxu0 %v756
      %v882 = vpop.f32.mrf.mxu0
      %v883 = vadd.f32 0.0, %v882
      %v884 = vpop.f32.mrf.mxu0
      %v885 = vadd.f32 0.0, %v884
      %886 = vmatmul.bf16.gmra.mxu0 %v759
      %v887 = vpop.f32.mrf.mxu0
      %v888 = vadd.f32 0.0, %v887
      %v889 = vpop.f32.mrf.mxu0
      %v890 = vadd.f32 0.0, %v889
      %891 = vmatmul.bf16.gmra.mxu0 %v762
      %v892 = vpop.f32.mrf.mxu0
      %v893 = vadd.f32 0.0, %v892
      %v894 = vpop.f32.mrf.mxu0
      %v895 = vadd.f32 0.0, %v894
      %896 = vmatmul.bf16.gmra.mxu0 %v765
      %v897 = vpop.f32.mrf.mxu0
      %v898 = vadd.f32 0.0, %v897
      %v899 = vpop.f32.mrf.mxu0
      %v900 = vadd.f32 0.0, %v899
      %901 = vmatmul.bf16.gmra.mxu0 %v768
      %v902 = vpop.f32.mrf.mxu0
      %v903 = vadd.f32 0.0, %v902
      %v904 = vpop.f32.mrf.mxu0
      %v905 = vadd.f32 0.0, %v904
      %906 = vmatmul.bf16.gmra.mxu0 %v771
      %v907 = vpop.f32.mrf.mxu0
      %v908 = vadd.f32 0.0, %v907
      %v909 = vpop.f32.mrf.mxu0
      %v910 = vadd.f32 0.0, %v909
      %911 = vmatmul.bf16.gmra.mxu0 %v774
      %v912 = vpop.f32.mrf.mxu0
      %v913 = vadd.f32 0.0, %v912
      %v914 = vpop.f32.mrf.mxu0
      %v915 = vadd.f32 0.0, %v914
      %916 = vmatmul.bf16.gmra.mxu0 %v777
      %v917 = vpop.f32.mrf.mxu0
      %v918 = vadd.f32 0.0, %v917
      %v919 = vpop.f32.mrf.mxu0
      %v920 = vadd.f32 0.0, %v919
      %921 = vmatmul.bf16.gmra.mxu0 %v780
      %v922 = vpop.f32.mrf.mxu0
      %v923 = vadd.f32 0.0, %v922
      %v924 = vpop.f32.mrf.mxu0
      %v925 = vadd.f32 0.0, %v924
      %926 = vmatmul.bf16.gmra.mxu0 %v783
      %v927 = vpop.f32.mrf.mxu0
      %v928 = vadd.f32 0.0, %v927
      %v929 = vpop.f32.mrf.mxu0
      %v930 = vadd.f32 0.0, %v929
      %931 = vmatmul.bf16.gmra.mxu0 %v786
      %v932 = vpop.f32.mrf.mxu0
      %v933 = vadd.f32 0.0, %v932
      %v934 = vpop.f32.mrf.mxu0
      %v935 = vadd.f32 0.0, %v934
      %936 = vmatmul.bf16.gmra.mxu0 %v789
      %v937 = vpop.f32.mrf.mxu0
      %v938 = vadd.f32 0.0, %v937
      %v939 = vpop.f32.mrf.mxu0
      %v940 = vadd.f32 0.0, %v939
      %941 = vmatmul.bf16.gmra.mxu0 %v792
      %v942 = vpop.f32.mrf.mxu0
      %v943 = vadd.f32 0.0, %v942
      %v944 = vpop.f32.mrf.mxu0
      %v945 = vadd.f32 0.0, %v944
      %946 = vmatmul.bf16.gmra.mxu0 %v795
      %v947 = vpop.f32.mrf.mxu0
      %v948 = vadd.f32 0.0, %v947
      %v949 = vpop.f32.mrf.mxu0
      %v950 = vadd.f32 0.0, %v949
      %951 = vmatmul.bf16.gmra.mxu0 %v798
      %v952 = vpop.f32.mrf.mxu0
      %v953 = vadd.f32 0.0, %v952
      %v954 = vpop.f32.mrf.mxu0
      %v955 = vadd.f32 0.0, %v954
      %956 = vmatmul.bf16.gmra.mxu0 %v801
      %v957 = vpop.f32.mrf.mxu0
      %v958 = vadd.f32 0.0, %v957
      %v959 = vpop.f32.mrf.mxu0
      %v960 = vadd.f32 0.0, %v959
      %961 = vmatmul.bf16.gmra.mxu0 %v804
      %v962 = vpop.f32.mrf.mxu0
      %v963 = vadd.f32 0.0, %v962
      %v964 = vpop.f32.mrf.mxu0
      %v965 = vadd.f32 0.0, %v964
      %966 = vmatmul.bf16.gmra.mxu0 %v807
      %v967 = vpop.f32.mrf.mxu0
      %v968 = vadd.f32 0.0, %v967
      %v969 = vpop.f32.mrf.mxu0
      %v970 = vadd.f32 0.0, %v969
      %971 = vmatmul.bf16.gmra.mxu0 %v810
      %v972 = vpop.f32.mrf.mxu0
      %v973 = vadd.f32 0.0, %v972
      %v974 = vpop.f32.mrf.mxu0
      %v975 = vadd.f32 0.0, %v974
      %976 = vmatmul.bf16.gmra.mxu0 %v813
      %v977 = vpop.f32.mrf.mxu0
      %v978 = vadd.f32 0.0, %v977
      %v979 = vpop.f32.mrf.mxu0
      %v980 = vadd.f32 0.0, %v979
      %981 = vmatmul.bf16.gmra.mxu0 %v816
      %v982 = vpop.f32.mrf.mxu0
      %v983 = vadd.f32 0.0, %v982
      %v984 = vpop.f32.mrf.mxu0
      %v985 = vadd.f32 0.0, %v984
      %986 = vdwg.mxu0
      %v987 = vadd.f32 %v409, %v828
      %v988 = vadd.f32 %v410, %v830
      %v989 = vadd.f32 %v411, %v833
      %v990 = vadd.f32 %v412, %v835
      %v991 = vadd.f32 %v413, %v838
      %v992 = vadd.f32 %v414, %v840
      %v993 = vadd.f32 %v415, %v843
      %v994 = vadd.f32 %v416, %v845
      %v995 = vadd.f32 %v417, %v848
      %v996 = vadd.f32 %v418, %v850
      %v997 = vadd.f32 %v419, %v853
      %v998 = vadd.f32 %v420, %v855
      %v999 = vadd.f32 %v421, %v858
      %v1000 = vadd.f32 %v422, %v860
      %v1001 = vadd.f32 %v423, %v863
      %v1002 = vadd.f32 %v424, %v865
      %v1003 = vadd.f32 %v425, %v868
      %v1004 = vadd.f32 %v426, %v870
      %v1005 = vadd.f32 %v427, %v873
      %v1006 = vadd.f32 %v428, %v875
      %v1007 = vadd.f32 %v429, %v878
      %v1008 = vadd.f32 %v430, %v880
      %v1009 = vadd.f32 %v431, %v883
      %v1010 = vadd.f32 %v432, %v885
      %v1011 = vadd.f32 %v433, %v888
      %v1012 = vadd.f32 %v434, %v890
      %v1013 = vadd.f32 %v435, %v893
      %v1014 = vadd.f32 %v436, %v895
      %v1015 = vadd.f32 %v437, %v898
      %v1016 = vadd.f32 %v438, %v900
      %v1017 = vadd.f32 %v439, %v903
      %v1018 = vadd.f32 %v440, %v905
      %v1019 = vadd.f32 %v441, %v908
      %v1020 = vadd.f32 %v442, %v910
      %v1021 = vadd.f32 %v443, %v913
      %v1022 = vadd.f32 %v444, %v915
      %v1023 = vadd.f32 %v445, %v918
      %v1024 = vadd.f32 %v446, %v920
      %v1025 = vadd.f32 %v447, %v923
      %v1026 = vadd.f32 %v448, %v925
      %v1027 = vadd.f32 %v449, %v928
      %v1028 = vadd.f32 %v450, %v930
      %v1029 = vadd.f32 %v451, %v933
      %v1030 = vadd.f32 %v452, %v935
      %v1031 = vadd.f32 %v453, %v938
      %v1032 = vadd.f32 %v454, %v940
      %v1033 = vadd.f32 %v455, %v943
      %v1034 = vadd.f32 %v456, %v945
      %v1035 = vadd.f32 %v457, %v948
      %v1036 = vadd.f32 %v458, %v950
      %v1037 = vadd.f32 %v459, %v953
      %v1038 = vadd.f32 %v460, %v955
      %v1039 = vadd.f32 %v461, %v958
      %v1040 = vadd.f32 %v462, %v960
      %v1041 = vadd.f32 %v463, %v963
      %v1042 = vadd.f32 %v464, %v965
      %v1043 = vadd.f32 %v465, %v968
      %v1044 = vadd.f32 %v466, %v970
      %v1045 = vadd.f32 %v467, %v973
      %v1046 = vadd.f32 %v468, %v975
      %v1047 = vadd.f32 %v469, %v978
      %v1048 = vadd.f32 %v470, %v980
      %v1049 = vadd.f32 %v471, %v983
      %v1050 = vadd.f32 %v472, %v985
      %1051 = vst [vmem:[#allocation2] sm:$0xff] %v987
      %1052 = vst [vmem:[#allocation2 + $0x8] sm:$0xff] %v988
      %1053 = vst [vmem:[#allocation2 + $0x10] sm:$0xff] %v989
      %1054 = vst [vmem:[#allocation2 + $0x18] sm:$0xff] %v990
      %1055 = vst [vmem:[#allocation2 + $0x20] sm:$0xff] %v991
      %1056 = vst [vmem:[#allocation2 + $0x28] sm:$0xff] %v992
      %1057 = vst [vmem:[#allocation2 + $0x30] sm:$0xff] %v993
      %1058 = vst [vmem:[#allocation2 + $0x38] sm:$0xff] %v994
      %1059 = vst [vmem:[#allocation2 + $0x40] sm:$0xff] %v995
      %1060 = vst [vmem:[#allocation2 + $0x48] sm:$0xff] %v996
      %1061 = vst [vmem:[#allocation2 + $0x50] sm:$0xff] %v997
      %1062 = vst [vmem:[#allocation2 + $0x58] sm:$0xff] %v998
      %1063 = vst [vmem:[#allocation2 + $0x60] sm:$0xff] %v999
      %1064 = vst [vmem:[#allocation2 + $0x68] sm:$0xff] %v1000
      %1065 = vst [vmem:[#allocation2 + $0x70] sm:$0xff] %v1001
      %1066 = vst [vmem:[#allocation2 + $0x78] sm:$0xff] %v1002
      %1067 = vst [vmem:[#allocation2 + $0x80] sm:$0xff] %v1003
      %1068 = vst [vmem:[#allocation2 + $0x88] sm:$0xff] %v1004
      %1069 = vst [vmem:[#allocation2 + $0x90] sm:$0xff] %v1005
      %1070 = vst [vmem:[#allocation2 + $0x98] sm:$0xff] %v1006
      %1071 = vst [vmem:[#allocation2 + $0xa0] sm:$0xff] %v1007
      %1072 = vst [vmem:[#allocation2 + $0xa8] sm:$0xff] %v1008
      %1073 = vst [vmem:[#allocation2 + $0xb0] sm:$0xff] %v1009
      %1074 = vst [vmem:[#allocation2 + $0xb8] sm:$0xff] %v1010
      %1075 = vst [vmem:[#allocation2 + $0xc0] sm:$0xff] %v1011
      %1076 = vst [vmem:[#allocation2 + $0xc8] sm:$0xff] %v1012
      %1077 = vst [vmem:[#allocation2 + $0xd0] sm:$0xff] %v1013
      %1078 = vst [vmem:[#allocation2 + $0xd8] sm:$0xff] %v1014
      %1079 = vst [vmem:[#allocation2 + $0xe0] sm:$0xff] %v1015
      %1080 = vst [vmem:[#allocation2 + $0xe8] sm:$0xff] %v1016
      %1081 = vst [vmem:[#allocation2 + $0xf0] sm:$0xff] %v1017
      %1082 = vst [vmem:[#allocation2 + $0xf8] sm:$0xff] %v1018
      %1083 = vst [vmem:[#allocation2 + $0x100] sm:$0xff] %v1019
      %1084 = vst [vmem:[#allocation2 + $0x108] sm:$0xff] %v1020
      %1085 = vst [vmem:[#allocation2 + $0x110] sm:$0xff] %v1021
      %1086 = vst [vmem:[#allocation2 + $0x118] sm:$0xff] %v1022
      %1087 = vst [vmem:[#allocation2 + $0x120] sm:$0xff] %v1023
      %1088 = vst [vmem:[#allocation2 + $0x128] sm:$0xff] %v1024
      %1089 = vst [vmem:[#allocation2 + $0x130] sm:$0xff] %v1025
      %1090 = vst [vmem:[#allocation2 + $0x138] sm:$0xff] %v1026
      %1091 = vst [vmem:[#allocation2 + $0x140] sm:$0xff] %v1027
      %1092 = vst [vmem:[#allocation2 + $0x148] sm:$0xff] %v1028
      %1093 = vst [vmem:[#allocation2 + $0x150] sm:$0xff] %v1029
      %1094 = vst [vmem:[#allocation2 + $0x158] sm:$0xff] %v1030
      %1095 = vst [vmem:[#allocation2 + $0x160] sm:$0xff] %v1031
      %1096 = vst [vmem:[#allocation2 + $0x168] sm:$0xff] %v1032
      %1097 = vst [vmem:[#allocation2 + $0x170] sm:$0xff] %v1033
      %1098 = vst [vmem:[#allocation2 + $0x178] sm:$0xff] %v1034
      %1099 = vst [vmem:[#allocation2 + $0x180] sm:$0xff] %v1035
      %1100 = vst [vmem:[#allocation2 + $0x188] sm:$0xff] %v1036
      %1101 = vst [vmem:[#allocation2 + $0x190] sm:$0xff] %v1037
      %1102 = vst [vmem:[#allocation2 + $0x198] sm:$0xff] %v1038
      %1103 = vst [vmem:[#allocation2 + $0x1a0] sm:$0xff] %v1039
      %1104 = vst [vmem:[#allocation2 + $0x1a8] sm:$0xff] %v1040
      %1105 = vst [vmem:[#allocation2 + $0x1b0] sm:$0xff] %v1041
      %1106 = vst [vmem:[#allocation2 + $0x1b8] sm:$0xff] %v1042
      %1107 = vst [vmem:[#allocation2 + $0x1c0] sm:$0xff] %v1043
      %1108 = vst [vmem:[#allocation2 + $0x1c8] sm:$0xff] %v1044
      %1109 = vst [vmem:[#allocation2 + $0x1d0] sm:$0xff] %v1045
      %1110 = vst [vmem:[#allocation2 + $0x1d8] sm:$0xff] %v1046
      %1111 = vst [vmem:[#allocation2 + $0x1e0] sm:$0xff] %v1047
      %1112 = vst [vmem:[#allocation2 + $0x1e8] sm:$0xff] %v1048
      %1113 = vst [vmem:[#allocation2 + $0x1f0] sm:$0xff] %v1049
      %1114 = vst [vmem:[#allocation2 + $0x1f8] sm:$0xff] %v1050
      %p1115 = scmp.eq.s32.totalorder %s24, 0
      %p1116 = pnand %p1115, %p341
      %p1117 = pneg %p1116
      // Predicated region
      $region33: #{encoder_forward.4} parent=27 // pred_check
        _
      $region34: #{encoder_forward.4} parent=27 // pred_check_branch
        %1119 = sbr.rel (%p1116) target = $region36
      $region35: #{encoder_forward.4} parent=27 // pred_region
        %1120 = vst [vmem:[%s332] sm:$0xff] 0.0
        %1121 = vst [vmem:[%s339] sm:$0xff] 0.0
      $region36: #{encoder_forward.4} parent=27 // pred_fallthru
        _
      // Predicated region
      $region37: #{encoder_forward.4} parent=27 // pred_check
        %p1122 = pneg %p341
      $region38: #{encoder_forward.4} parent=27 // pred_check_branch
        %1124 = sbr.rel (%p1122) target = $region40
      $region39: #{encoder_forward.4} parent=27 // pred_region
        %v1125 = vld [vmem:[#allocation2] sm:$0xff]
        %v1126 = vld [vmem:[#allocation2 + $0x8] sm:$0xff]
        %v1127 = vld [vmem:[#allocation2 + $0x10] sm:$0xff]
        %v1128 = vld [vmem:[#allocation2 + $0x18] sm:$0xff]
        %v1129 = vld [vmem:[#allocation2 + $0x20] sm:$0xff]
        %v1130 = vld [vmem:[#allocation2 + $0x28] sm:$0xff]
        %v1131 = vld [vmem:[#allocation2 + $0x30] sm:$0xff]
        %v1132 = vld [vmem:[#allocation2 + $0x38] sm:$0xff]
        %v1133 = vld [vmem:[#allocation2 + $0x40] sm:$0xff]
        %v1134 = vld [vmem:[#allocation2 + $0x48] sm:$0xff]
        %v1135 = vld [vmem:[#allocation2 + $0x50] sm:$0xff]
        %v1136 = vld [vmem:[#allocation2 + $0x58] sm:$0xff]
        %v1137 = vld [vmem:[#allocation2 + $0x60] sm:$0xff]
        %v1138 = vld [vmem:[#allocation2 + $0x68] sm:$0xff]
        %v1139 = vld [vmem:[#allocation2 + $0x70] sm:$0xff]
        %v1140 = vld [vmem:[#allocation2 + $0x78] sm:$0xff]
        %v1141 = vld [vmem:[#allocation2 + $0x80] sm:$0xff]
        %v1142 = vld [vmem:[#allocation2 + $0x88] sm:$0xff]
        %v1143 = vld [vmem:[#allocation2 + $0x90] sm:$0xff]
        %v1144 = vld [vmem:[#allocation2 + $0x98] sm:$0xff]
        %v1145 = vld [vmem:[#allocation2 + $0xa0] sm:$0xff]
        %v1146 = vld [vmem:[#allocation2 + $0xa8] sm:$0xff]
        %v1147 = vld [vmem:[#allocation2 + $0xb0] sm:$0xff]
        %v1148 = vld [vmem:[#allocation2 + $0xb8] sm:$0xff]
        %v1149 = vld [vmem:[#allocation2 + $0xc0] sm:$0xff]
        %v1150 = vld [vmem:[#allocation2 + $0xc8] sm:$0xff]
        %v1151 = vld [vmem:[#allocation2 + $0xd0] sm:$0xff]
        %v1152 = vld [vmem:[#allocation2 + $0xd8] sm:$0xff]
        %v1153 = vld [vmem:[#allocation2 + $0xe0] sm:$0xff]
        %v1154 = vld [vmem:[#allocation2 + $0xe8] sm:$0xff]
        %v1155 = vld [vmem:[#allocation2 + $0xf0] sm:$0xff]
        %v1156 = vld [vmem:[#allocation2 + $0xf8] sm:$0xff]
        %v1157 = vld [vmem:[#allocation2 + $0x100] sm:$0xff]
        %v1158 = vld [vmem:[#allocation2 + $0x108] sm:$0xff]
        %v1159 = vld [vmem:[#allocation2 + $0x110] sm:$0xff]
        %v1160 = vld [vmem:[#allocation2 + $0x118] sm:$0xff]
        %v1161 = vld [vmem:[#allocation2 + $0x120] sm:$0xff]
        %v1162 = vld [vmem:[#allocation2 + $0x128] sm:$0xff]
        %v1163 = vld [vmem:[#allocation2 + $0x130] sm:$0xff]
        %v1164 = vld [vmem:[#allocation2 + $0x138] sm:$0xff]
        %v1165 = vld [vmem:[#allocation2 + $0x140] sm:$0xff]
        %v1166 = vld [vmem:[#allocation2 + $0x148] sm:$0xff]
        %v1167 = vld [vmem:[#allocation2 + $0x150] sm:$0xff]
        %v1168 = vld [vmem:[#allocation2 + $0x158] sm:$0xff]
        %v1169 = vld [vmem:[#allocation2 + $0x160] sm:$0xff]
        %v1170 = vld [vmem:[#allocation2 + $0x168] sm:$0xff]
        %v1171 = vld [vmem:[#allocation2 + $0x170] sm:$0xff]
        %v1172 = vld [vmem:[#allocation2 + $0x178] sm:$0xff]
        %v1173 = vld [vmem:[#allocation2 + $0x180] sm:$0xff]
        %v1174 = vld [vmem:[#allocation2 + $0x188] sm:$0xff]
        %v1175 = vld [vmem:[#allocation2 + $0x190] sm:$0xff]
        %v1176 = vld [vmem:[#allocation2 + $0x198] sm:$0xff]
        %v1177 = vld [vmem:[#allocation2 + $0x1a0] sm:$0xff]
        %v1178 = vld [vmem:[#allocation2 + $0x1a8] sm:$0xff]
        %v1179 = vld [vmem:[#allocation2 + $0x1b0] sm:$0xff]
        %v1180 = vld [vmem:[#allocation2 + $0x1b8] sm:$0xff]
        %v1181 = vld [vmem:[#allocation2 + $0x1c0] sm:$0xff]
        %v1182 = vld [vmem:[#allocation2 + $0x1c8] sm:$0xff]
        %v1183 = vld [vmem:[#allocation2 + $0x1d0] sm:$0xff]
        %v1184 = vld [vmem:[#allocation2 + $0x1d8] sm:$0xff]
        %v1185 = vld [vmem:[#allocation2 + $0x1e0] sm:$0xff]
        %v1186 = vld [vmem:[#allocation2 + $0x1e8] sm:$0xff]
        %v1187 = vld [vmem:[#allocation2 + $0x1f0] sm:$0xff]
        %v1188 = vld [vmem:[#allocation2 + $0x1f8] sm:$0xff]
        %v1189 = vpack.c.bf16 %v1125, %v1125
        %v1190 = vpack.c.bf16 %v1126, %v1126
        %v1191 = vpack.c.bf16 %v1127, %v1127
        %v1192 = vpack.c.bf16 %v1128, %v1128
        %v1193 = vpack.c.bf16 %v1129, %v1129
        %v1194 = vpack.c.bf16 %v1130, %v1130
        %v1195 = vpack.c.bf16 %v1131, %v1131
        %v1196 = vpack.c.bf16 %v1132, %v1132
        %v1197 = vpack.c.bf16 %v1133, %v1133
        %v1198 = vpack.c.bf16 %v1134, %v1134
        %v1199 = vpack.c.bf16 %v1135, %v1135
        %v1200 = vpack.c.bf16 %v1136, %v1136
        %v1201 = vpack.c.bf16 %v1137, %v1137
        %v1202 = vpack.c.bf16 %v1138, %v1138
        %v1203 = vpack.c.bf16 %v1139, %v1139
        %v1204 = vpack.c.bf16 %v1140, %v1140
        %v1205 = vpack.c.bf16 %v1141, %v1141
        %v1206 = vpack.c.bf16 %v1142, %v1142
        %v1207 = vpack.c.bf16 %v1143, %v1143
        %v1208 = vpack.c.bf16 %v1144, %v1144
        %v1209 = vpack.c.bf16 %v1145, %v1145
        %v1210 = vpack.c.bf16 %v1146, %v1146
        %v1211 = vpack.c.bf16 %v1147, %v1147
        %v1212 = vpack.c.bf16 %v1148, %v1148
        %v1213 = vpack.c.bf16 %v1149, %v1149
        %v1214 = vpack.c.bf16 %v1150, %v1150
        %v1215 = vpack.c.bf16 %v1151, %v1151
        %v1216 = vpack.c.bf16 %v1152, %v1152
        %v1217 = vpack.c.bf16 %v1153, %v1153
        %v1218 = vpack.c.bf16 %v1154, %v1154
        %v1219 = vpack.c.bf16 %v1155, %v1155
        %v1220 = vpack.c.bf16 %v1156, %v1156
        %v1221 = vpack.c.bf16 %v1157, %v1157
        %v1222 = vpack.c.bf16 %v1158, %v1158
        %v1223 = vpack.c.bf16 %v1159, %v1159
        %v1224 = vpack.c.bf16 %v1160, %v1160
        %v1225 = vpack.c.bf16 %v1161, %v1161
        %v1226 = vpack.c.bf16 %v1162, %v1162
        %v1227 = vpack.c.bf16 %v1163, %v1163
        %v1228 = vpack.c.bf16 %v1164, %v1164
        %v1229 = vpack.c.bf16 %v1165, %v1165
        %v1230 = vpack.c.bf16 %v1166, %v1166
        %v1231 = vpack.c.bf16 %v1167, %v1167
        %v1232 = vpack.c.bf16 %v1168, %v1168
        %v1233 = vpack.c.bf16 %v1169, %v1169
        %v1234 = vpack.c.bf16 %v1170, %v1170
        %v1235 = vpack.c.bf16 %v1171, %v1171
        %v1236 = vpack.c.bf16 %v1172, %v1172
        %v1237 = vpack.c.bf16 %v1173, %v1173
        %v1238 = vpack.c.bf16 %v1174, %v1174
        %v1239 = vpack.c.bf16 %v1175, %v1175
        %v1240 = vpack.c.bf16 %v1176, %v1176
        %v1241 = vpack.c.bf16 %v1177, %v1177
        %v1242 = vpack.c.bf16 %v1178, %v1178
        %v1243 = vpack.c.bf16 %v1179, %v1179
        %v1244 = vpack.c.bf16 %v1180, %v1180
        %v1245 = vpack.c.bf16 %v1181, %v1181
        %v1246 = vpack.c.bf16 %v1182, %v1182
        %v1247 = vpack.c.bf16 %v1183, %v1183
        %v1248 = vpack.c.bf16 %v1184, %v1184
        %v1249 = vpack.c.bf16 %v1185, %v1185
        %v1250 = vpack.c.bf16 %v1186, %v1186
        %v1251 = vpack.c.bf16 %v1187, %v1187
        %v1252 = vpack.c.bf16 %v1188, %v1188
        %1253 = vst [vmem:[%s322] sm:$0xf] %v1189
        %1254 = vst [vmem:[%s322 + $0x4] sm:$0xf] %v1190
        %1255 = vst [vmem:[%s322 + $0x8] sm:$0xf] %v1191
        %1256 = vst [vmem:[%s322 + $0xc] sm:$0xf] %v1192
        %1257 = vst [vmem:[%s322 + $0x10] sm:$0xf] %v1193
        %1258 = vst [vmem:[%s322 + $0x14] sm:$0xf] %v1194
        %1259 = vst [vmem:[%s322 + $0x18] sm:$0xf] %v1195
        %1260 = vst [vmem:[%s322 + $0x1c] sm:$0xf] %v1196
        %1261 = vst [vmem:[%s322 + $0x20] sm:$0xf] %v1197
        %1262 = vst [vmem:[%s322 + $0x24] sm:$0xf] %v1198
        %1263 = vst [vmem:[%s322 + $0x28] sm:$0xf] %v1199
        %1264 = vst [vmem:[%s322 + $0x2c] sm:$0xf] %v1200
        %1265 = vst [vmem:[%s322 + $0x30] sm:$0xf] %v1201
        %1266 = vst [vmem:[%s322 + $0x34] sm:$0xf] %v1202
        %1267 = vst [vmem:[%s322 + $0x38] sm:$0xf] %v1203
        %1268 = vst [vmem:[%s322 + $0x3c] sm:$0xf] %v1204
        %1269 = vst [vmem:[%s322 + $0x40] sm:$0xf] %v1205
        %1270 = vst [vmem:[%s322 + $0x44] sm:$0xf] %v1206
        %1271 = vst [vmem:[%s322 + $0x48] sm:$0xf] %v1207
        %1272 = vst [vmem:[%s322 + $0x4c] sm:$0xf] %v1208
        %1273 = vst [vmem:[%s322 + $0x50] sm:$0xf] %v1209
        %1274 = vst [vmem:[%s322 + $0x54] sm:$0xf] %v1210
        %1275 = vst [vmem:[%s322 + $0x58] sm:$0xf] %v1211
        %1276 = vst [vmem:[%s322 + $0x5c] sm:$0xf] %v1212
        %1277 = vst [vmem:[%s322 + $0x60] sm:$0xf] %v1213
        %1278 = vst [vmem:[%s322 + $0x64] sm:$0xf] %v1214
        %1279 = vst [vmem:[%s322 + $0x68] sm:$0xf] %v1215
        %1280 = vst [vmem:[%s322 + $0x6c] sm:$0xf] %v1216
        %1281 = vst [vmem:[%s322 + $0x70] sm:$0xf] %v1217
        %1282 = vst [vmem:[%s322 + $0x74] sm:$0xf] %v1218
        %1283 = vst [vmem:[%s322 + $0x78] sm:$0xf] %v1219
        %1284 = vst [vmem:[%s322 + $0x7c] sm:$0xf] %v1220
        %1285 = vst [vmem:[%s322 + $0x80] sm:$0xf] %v1221
        %1286 = vst [vmem:[%s322 + $0x84] sm:$0xf] %v1222
        %1287 = vst [vmem:[%s322 + $0x88] sm:$0xf] %v1223
        %1288 = vst [vmem:[%s322 + $0x8c] sm:$0xf] %v1224
        %1289 = vst [vmem:[%s322 + $0x90] sm:$0xf] %v1225
        %1290 = vst [vmem:[%s322 + $0x94] sm:$0xf] %v1226
        %1291 = vst [vmem:[%s322 + $0x98] sm:$0xf] %v1227
        %1292 = vst [vmem:[%s322 + $0x9c] sm:$0xf] %v1228
        %1293 = vst [vmem:[%s322 + $0xa0] sm:$0xf] %v1229
        %1294 = vst [vmem:[%s322 + $0xa4] sm:$0xf] %v1230
        %1295 = vst [vmem:[%s322 + $0xa8] sm:$0xf] %v1231
        %1296 = vst [vmem:[%s322 + $0xac] sm:$0xf] %v1232
        %1297 = vst [vmem:[%s322 + $0xb0] sm:$0xf] %v1233
        %1298 = vst [vmem:[%s322 + $0xb4] sm:$0xf] %v1234
        %1299 = vst [vmem:[%s322 + $0xb8] sm:$0xf] %v1235
        %1300 = vst [vmem:[%s322 + $0xbc] sm:$0xf] %v1236
        %1301 = vst [vmem:[%s322 + $0xc0] sm:$0xf] %v1237
        %1302 = vst [vmem:[%s322 + $0xc4] sm:$0xf] %v1238
        %1303 = vst [vmem:[%s322 + $0xc8] sm:$0xf] %v1239
        %1304 = vst [vmem:[%s322 + $0xcc] sm:$0xf] %v1240
        %1305 = vst [vmem:[%s322 + $0xd0] sm:$0xf] %v1241
        %1306 = vst [vmem:[%s322 + $0xd4] sm:$0xf] %v1242
        %1307 = vst [vmem:[%s322 + $0xd8] sm:$0xf] %v1243
        %1308 = vst [vmem:[%s322 + $0xdc] sm:$0xf] %v1244
        %1309 = vst [vmem:[%s322 + $0xe0] sm:$0xf] %v1245
        %1310 = vst [vmem:[%s322 + $0xe4] sm:$0xf] %v1246
        %1311 = vst [vmem:[%s322 + $0xe8] sm:$0xf] %v1247
        %1312 = vst [vmem:[%s322 + $0xec] sm:$0xf] %v1248
        %1313 = vst [vmem:[%s322 + $0xf0] sm:$0xf] %v1249
        %1314 = vst [vmem:[%s322 + $0xf4] sm:$0xf] %v1250
        %1315 = vst [vmem:[%s322 + $0xf8] sm:$0xf] %v1251
        %1316 = vst [vmem:[%s322 + $0xfc] sm:$0xf] %v1252
        %v1317 = vld [vmem:[%s332] sm:$0xff]
        %v1318 = vadd.f32 %v1125, %v1126
        %v1319 = vadd.f32 %v1318, %v1127
        %v1320 = vadd.f32 %v1319, %v1128
        %v1321 = vadd.f32 %v1320, %v1129
        %v1322 = vadd.f32 %v1321, %v1130
        %v1323 = vadd.f32 %v1322, %v1131
        %v1324 = vadd.f32 %v1323, %v1132
        %v1325 = vadd.f32 %v1324, %v1133
        %v1326 = vadd.f32 %v1325, %v1134
        %v1327 = vadd.f32 %v1326, %v1135
        %v1328 = vadd.f32 %v1327, %v1136
        %v1329 = vadd.f32 %v1328, %v1137
        %v1330 = vadd.f32 %v1329, %v1138
        %v1331 = vadd.f32 %v1330, %v1139
        %v1332 = vadd.f32 %v1331, %v1140
        %v1333 = vadd.f32 %v1332, %v1141
        %v1334 = vadd.f32 %v1333, %v1142
        %v1335 = vadd.f32 %v1334, %v1143
        %v1336 = vadd.f32 %v1335, %v1144
        %v1337 = vadd.f32 %v1336, %v1145
        %v1338 = vadd.f32 %v1337, %v1146
        %v1339 = vadd.f32 %v1338, %v1147
        %v1340 = vadd.f32 %v1339, %v1148
        %v1341 = vadd.f32 %v1340, %v1149
        %v1342 = vadd.f32 %v1341, %v1150
        %v1343 = vadd.f32 %v1342, %v1151
        %v1344 = vadd.f32 %v1343, %v1152
        %v1345 = vadd.f32 %v1344, %v1153
        %v1346 = vadd.f32 %v1345, %v1154
        %v1347 = vadd.f32 %v1346, %v1155
        %v1348 = vadd.f32 %v1347, %v1156
        %v1349 = vadd.f32 %v1348, %v1157
        %v1350 = vadd.f32 %v1349, %v1158
        %v1351 = vadd.f32 %v1350, %v1159
        %v1352 = vadd.f32 %v1351, %v1160
        %v1353 = vadd.f32 %v1352, %v1161
        %v1354 = vadd.f32 %v1353, %v1162
        %v1355 = vadd.f32 %v1354, %v1163
        %v1356 = vadd.f32 %v1355, %v1164
        %v1357 = vadd.f32 %v1356, %v1165
        %v1358 = vadd.f32 %v1357, %v1166
        %v1359 = vadd.f32 %v1358, %v1167
        %v1360 = vadd.f32 %v1359, %v1168
        %v1361 = vadd.f32 %v1360, %v1169
        %v1362 = vadd.f32 %v1361, %v1170
        %v1363 = vadd.f32 %v1362, %v1171
        %v1364 = vadd.f32 %v1363, %v1172
        %v1365 = vadd.f32 %v1364, %v1173
        %v1366 = vadd.f32 %v1365, %v1174
        %v1367 = vadd.f32 %v1366, %v1175
        %v1368 = vadd.f32 %v1367, %v1176
        %v1369 = vadd.f32 %v1368, %v1177
        %v1370 = vadd.f32 %v1369, %v1178
        %v1371 = vadd.f32 %v1370, %v1179
        %v1372 = vadd.f32 %v1371, %v1180
        %v1373 = vadd.f32 %v1372, %v1181
        %v1374 = vadd.f32 %v1373, %v1182
        %v1375 = vadd.f32 %v1374, %v1183
        %v1376 = vadd.f32 %v1375, %v1184
        %v1377 = vadd.f32 %v1376, %v1185
        %v1378 = vadd.f32 %v1377, %v1186
        %v1379 = vadd.f32 %v1378, %v1187
        %v1380 = vadd.f32 %v1379, %v1188
        %v1381 = vrot.slane %v1380, 4
        %v1382 = vadd.f32 %v1380, %v1381
        %v1383 = vrot.slane %v1382, 2
        %v1384 = vadd.f32 %v1382, %v1383
        %v1385 = vrot.slane %v1384, 1
        %v1386 = vadd.f32 %v1384, %v1385
        %v1387 = vadd.f32 %v1317, %v1386
        %1388 = vst [vmem:[%s332] sm:$0xff] %v1387
        %v1389 = vld [vmem:[%s339] sm:$0xff]
        %v1390 = vmul.f32 %v1125, %v1125
        %v1391 = vmul.f32 %v1126, %v1126
        %v1392 = vmul.f32 %v1127, %v1127
        %v1393 = vmul.f32 %v1128, %v1128
        %v1394 = vmul.f32 %v1129, %v1129
        %v1395 = vmul.f32 %v1130, %v1130
        %v1396 = vmul.f32 %v1131, %v1131
        %v1397 = vmul.f32 %v1132, %v1132
        %v1398 = vmul.f32 %v1133, %v1133
        %v1399 = vmul.f32 %v1134, %v1134
        %v1400 = vmul.f32 %v1135, %v1135
        %v1401 = vmul.f32 %v1136, %v1136
        %v1402 = vmul.f32 %v1137, %v1137
        %v1403 = vmul.f32 %v1138, %v1138
        %v1404 = vmul.f32 %v1139, %v1139
        %v1405 = vmul.f32 %v1140, %v1140
        %v1406 = vmul.f32 %v1141, %v1141
        %v1407 = vmul.f32 %v1142, %v1142
        %v1408 = vmul.f32 %v1143, %v1143
        %v1409 = vmul.f32 %v1144, %v1144
        %v1410 = vmul.f32 %v1145, %v1145
        %v1411 = vmul.f32 %v1146, %v1146
        %v1412 = vmul.f32 %v1147, %v1147
        %v1413 = vmul.f32 %v1148, %v1148
        %v1414 = vmul.f32 %v1149, %v1149
        %v1415 = vmul.f32 %v1150, %v1150
        %v1416 = vmul.f32 %v1151, %v1151
        %v1417 = vmul.f32 %v1152, %v1152
        %v1418 = vmul.f32 %v1153, %v1153
        %v1419 = vmul.f32 %v1154, %v1154
        %v1420 = vmul.f32 %v1155, %v1155
        %v1421 = vmul.f32 %v1156, %v1156
        %v1422 = vmul.f32 %v1157, %v1157
        %v1423 = vmul.f32 %v1158, %v1158
        %v1424 = vmul.f32 %v1159, %v1159
        %v1425 = vmul.f32 %v1160, %v1160
        %v1426 = vmul.f32 %v1161, %v1161
        %v1427 = vmul.f32 %v1162, %v1162
        %v1428 = vmul.f32 %v1163, %v1163
        %v1429 = vmul.f32 %v1164, %v1164
        %v1430 = vmul.f32 %v1165, %v1165
        %v1431 = vmul.f32 %v1166, %v1166
        %v1432 = vmul.f32 %v1167, %v1167
        %v1433 = vmul.f32 %v1168, %v1168
        %v1434 = vmul.f32 %v1169, %v1169
        %v1435 = vmul.f32 %v1170, %v1170
        %v1436 = vmul.f32 %v1171, %v1171
        %v1437 = vmul.f32 %v1172, %v1172
        %v1438 = vmul.f32 %v1173, %v1173
        %v1439 = vmul.f32 %v1174, %v1174
        %v1440 = vmul.f32 %v1175, %v1175
        %v1441 = vmul.f32 %v1176, %v1176
        %v1442 = vmul.f32 %v1177, %v1177
        %v1443 = vmul.f32 %v1178, %v1178
        %v1444 = vmul.f32 %v1179, %v1179
        %v1445 = vmul.f32 %v1180, %v1180
        %v1446 = vmul.f32 %v1181, %v1181
        %v1447 = vmul.f32 %v1182, %v1182
        %v1448 = vmul.f32 %v1183, %v1183
        %v1449 = vmul.f32 %v1184, %v1184
        %v1450 = vmul.f32 %v1185, %v1185
        %v1451 = vmul.f32 %v1186, %v1186
        %v1452 = vmul.f32 %v1187, %v1187
        %v1453 = vmul.f32 %v1188, %v1188
        %v1454 = vadd.f32 %v1390, %v1391
        %v1455 = vadd.f32 %v1454, %v1392
        %v1456 = vadd.f32 %v1455, %v1393
        %v1457 = vadd.f32 %v1456, %v1394
        %v1458 = vadd.f32 %v1457, %v1395
        %v1459 = vadd.f32 %v1458, %v1396
        %v1460 = vadd.f32 %v1459, %v1397
        %v1461 = vadd.f32 %v1460, %v1398
        %v1462 = vadd.f32 %v1461, %v1399
        %v1463 = vadd.f32 %v1462, %v1400
        %v1464 = vadd.f32 %v1463, %v1401
        %v1465 = vadd.f32 %v1464, %v1402
        %v1466 = vadd.f32 %v1465, %v1403
        %v1467 = vadd.f32 %v1466, %v1404
        %v1468 = vadd.f32 %v1467, %v1405
        %v1469 = vadd.f32 %v1468, %v1406
        %v1470 = vadd.f32 %v1469, %v1407
        %v1471 = vadd.f32 %v1470, %v1408
        %v1472 = vadd.f32 %v1471, %v1409
        %v1473 = vadd.f32 %v1472, %v1410
        %v1474 = vadd.f32 %v1473, %v1411
        %v1475 = vadd.f32 %v1474, %v1412
        %v1476 = vadd.f32 %v1475, %v1413
        %v1477 = vadd.f32 %v1476, %v1414
        %v1478 = vadd.f32 %v1477, %v1415
        %v1479 = vadd.f32 %v1478, %v1416
        %v1480 = vadd.f32 %v1479, %v1417
        %v1481 = vadd.f32 %v1480, %v1418
        %v1482 = vadd.f32 %v1481, %v1419
        %v1483 = vadd.f32 %v1482, %v1420
        %v1484 = vadd.f32 %v1483, %v1421
        %v1485 = vadd.f32 %v1484, %v1422
        %v1486 = vadd.f32 %v1485, %v1423
        %v1487 = vadd.f32 %v1486, %v1424
        %v1488 = vadd.f32 %v1487, %v1425
        %v1489 = vadd.f32 %v1488, %v1426
        %v1490 = vadd.f32 %v1489, %v1427
        %v1491 = vadd.f32 %v1490, %v1428
        %v1492 = vadd.f32 %v1491, %v1429
        %v1493 = vadd.f32 %v1492, %v1430
        %v1494 = vadd.f32 %v1493, %v1431
        %v1495 = vadd.f32 %v1494, %v1432
        %v1496 = vadd.f32 %v1495, %v1433
        %v1497 = vadd.f32 %v1496, %v1434
        %v1498 = vadd.f32 %v1497, %v1435
        %v1499 = vadd.f32 %v1498, %v1436
        %v1500 = vadd.f32 %v1499, %v1437
        %v1501 = vadd.f32 %v1500, %v1438
        %v1502 = vadd.f32 %v1501, %v1439
        %v1503 = vadd.f32 %v1502, %v1440
        %v1504 = vadd.f32 %v1503, %v1441
        %v1505 = vadd.f32 %v1504, %v1442
        %v1506 = vadd.f32 %v1505, %v1443
        %v1507 = vadd.f32 %v1506, %v1444
        %v1508 = vadd.f32 %v1507, %v1445
        %v1509 = vadd.f32 %v1508, %v1446
        %v1510 = vadd.f32 %v1509, %v1447
        %v1511 = vadd.f32 %v1510, %v1448
        %v1512 = vadd.f32 %v1511, %v1449
        %v1513 = vadd.f32 %v1512, %v1450
        %v1514 = vadd.f32 %v1513, %v1451
        %v1515 = vadd.f32 %v1514, %v1452
        %v1516 = vadd.f32 %v1515, %v1453
        %v1517 = vrot.slane %v1516, 4
        %v1518 = vadd.f32 %v1516, %v1517
        %v1519 = vrot.slane %v1518, 2
        %v1520 = vadd.f32 %v1518, %v1519
        %v1521 = vrot.slane %v1520, 1
        %v1522 = vadd.f32 %v1520, %v1521
        %v1523 = vadd.f32 %v1389, %v1522
        %1524 = vst [vmem:[%s339] sm:$0xff] %v1523
      $region40: #{encoder_forward.4} parent=27 // pred_fallthru
        _
      %s1525 = smul.u32 %s22, 4
      %s1526 = sadd.s32 %s1525, %s24
      %s1527 = smul.u32 64, %s1526
      %p1528 = scmp.lt.s32.totalorder %s1527, 511
      %s1529 = scalar_select %p1528, %s1527, 511
      %p1530 = scmp.lt.s32.totalorder %s23, 0
      %s1531 = scalar_select %p1530, %s23, 0
      %s1532 = sadd.s32 %s1531, %s1529
      %s1533 = smul.addr %s1532, 4
      %s1534 = scalar_lea.vmem %s2, %s1533
      %p1535 = scmp.lt.s32.totalorder %s22, 1
      %s1536 = scalar_select %p1535, %s22, 1
      %p1537 = scmp.lt.s32.totalorder %s23, 0
      %s1538 = scalar_select %p1537, %s23, 0
      %s1539 = sadd.s32 %s1538, %s1536
      %s1540 = smul.addr %s1539, 8
      %s1541 = scalar_lea.vmem %s3, %s1540
      %p1542 = scmp.lt.s32.totalorder %s22, 1
      %s1543 = scalar_select %p1542, %s22, 1
      %p1544 = scmp.lt.s32.totalorder %s23, 0
      %s1545 = scalar_select %p1544, %s23, 0
      %s1546 = sadd.s32 %s1545, %s1543
      %s1547 = smul.addr %s1546, 8
      %s1548 = scalar_lea.vmem %s4, %s1547
      // Predicated region
      $region41: #{encoder_forward.4} parent=27 // pred_check
        %p1549 = pneg %p126
      $region42: #{encoder_forward.4} parent=27 // pred_check_branch
        %1551 = sbr.rel (%p1549) target = $region44
      $region43: #{encoder_forward.4} parent=27 // pred_region
        %s1552 = smul.u32 %s22, 4
        %s1553 = sadd.s32 %s1552, %s24
        %s1554 = smul.u32 64, %s1553
      $region44: #{encoder_forward.4} parent=27 // pred_fallthru
        _
      // Predicated region
      $region45: #{encoder_forward.4} parent=27 // pred_check
        %p1555 = pneg %p154
      $region46: #{encoder_forward.4} parent=27 // pred_check_branch
        %1557 = sbr.rel (%p1555) target = $region48
      $region47: #{encoder_forward.4} parent=27 // pred_region
        _
      $region48: #{encoder_forward.4} parent=27 // pred_fallthru
        _
      // Predicated region
      $region49: #{encoder_forward.4} parent=27 // pred_check
        %p1558 = pneg %p182
      $region50: #{encoder_forward.4} parent=27 // pred_check_branch
        %1560 = sbr.rel (%p1558) target = $region52
      $region51: #{encoder_forward.4} parent=27 // pred_region
        _
      $region52: #{encoder_forward.4} parent=27 // pred_fallthru
        _
    $region28: #{encoder_forward.4} parent=5 // pred_fallthru
      _
    %p1561 = scmp.le.s32.totalorder 2, %s11
    // Predicated region
    $region53: #{encoder_forward.4} parent=5 // pred_check
      %p1562 = pneg %p1561
    $region54: #{encoder_forward.4} parent=5 // pred_check_branch
      %1564 = sbr.rel (%p1562) target = $region56
    $region55: #{encoder_forward.4} parent=5 // pred_region
      %s1565 = ssub.s32 %s11, 2
      // Predicated region
      $region57: #{encoder_forward.4} parent=55 // pred_check
        %p1566 = pneg %p132
      $region58: #{encoder_forward.4} parent=55 // pred_check_branch
        %1568 = sbr.rel (%p1566) target = $region60
      $region59: #{encoder_forward.4} parent=55 // pred_region
        %s1569 = smul.u32 %s26, 4
        %s1570 = sadd.s32 %s1569, %s28
        %s1571 = smul.u32 64, %s1570
        %p1572 = scmp.lt.s32.totalorder %s1571, 511
        %s1573 = scalar_select %p1572, %s1571, 511
        %p1574 = scmp.lt.s32.totalorder %s27, 0
        %s1575 = scalar_select %p1574, %s27, 0
        %s1576 = sadd.s32 %s1575, %s1573
        %s1577 = smul.addr %s1576, 4
        %s1578 = scalar_lea.vmem %s2, %s1577
      $region60: #{encoder_forward.4} parent=55 // pred_fallthru
        _
      // Predicated region
      $region61: #{encoder_forward.4} parent=55 // pred_check
        %p1579 = pneg %p160
      $region62: #{encoder_forward.4} parent=55 // pred_check_branch
        %1581 = sbr.rel (%p1579) target = $region64
      $region63: #{encoder_forward.4} parent=55 // pred_region
        %p1582 = scmp.lt.s32.totalorder %s26, 1
        %s1583 = scalar_select %p1582, %s26, 1
        %p1584 = scmp.lt.s32.totalorder %s27, 0
        %s1585 = scalar_select %p1584, %s27, 0
        %s1586 = sadd.s32 %s1585, %s1583
        %s1587 = smul.addr %s1586, 8
        %s1588 = scalar_lea.vmem %s3, %s1587
      $region64: #{encoder_forward.4} parent=55 // pred_fallthru
        _
      // Predicated region
      $region65: #{encoder_forward.4} parent=55 // pred_check
        %p1589 = pneg %p188
      $region66: #{encoder_forward.4} parent=55 // pred_check_branch
        %1591 = sbr.rel (%p1589) target = $region68
      $region67: #{encoder_forward.4} parent=55 // pred_region
        %p1592 = scmp.lt.s32.totalorder %s26, 1
        %s1593 = scalar_select %p1592, %s26, 1
        %p1594 = scmp.lt.s32.totalorder %s27, 0
        %s1595 = scalar_select %p1594, %s27, 0
        %s1596 = sadd.s32 %s1595, %s1593
        %s1597 = smul.addr %s1596, 8
        %s1598 = scalar_lea.vmem %s4, %s1597
      $region68: #{encoder_forward.4} parent=55 // pred_fallthru
        _
    $region56: #{encoder_forward.4} parent=5 // pred_fallthru
      _
  $region6: #{encoder_forward.4} parent=0 // loop_footer
    %s15 = sadd.s32 1, %s11
  $region7: #{encoder_forward.4} parent=0 // loop_footer_branch
    %10 = sbr.rel target = $region3
  $region8: #{encoder_forward.4} parent=0 // loop_exit
    _

// kernel: encoder_forward.5
$region0: #{encoder_forward.5}
  #allocation0 [shape = 'u32[]', space=smem, size = 0x4, offset = 0x4, fixed_abs, tag = 'smem constant byte address 0x4 - core index']
  #allocation1 [shape = 'u32[72,128]{1,0:T(1,128)}', space=vmem, size = 0x9000, scoped, tag = 'internal scratch']
  #allocation2 [shape = 'f32[512,128]{1,0:T(8,128)}', space=vmem, size = 0x40000, scoped, tag = 'scratch operand']
  %s0 = inlined_call_operand.vmem [shape: bf16[1024,128], index: 0, kind: input, shape index: {}]
  %s1 = inlined_call_operand.vmem [shape: bf16[128,128], index: 1, kind: input, shape index: {}]
  %s2 = inlined_call_operand.vmem [shape: bf16[1024,128], index: 2, kind: output, shape index: {0}]
  %s3 = inlined_call_operand.vmem [shape: f32[2,8,128], index: 3, kind: output, shape index: {1}]
  %s4 = inlined_call_operand.vmem [shape: f32[2,8,128], index: 4, kind: output, shape index: {2}]
  %5 = xla_tuple %s2, %s3, %s4
  %s6 = sld [smem:[#allocation0]]
  $region69: #{encoder_forward.5} parent=0
    _
  %s8 = ssub.s32 1, %s6
  %s9 = scalar_select 0, %s8, %s6
  loop: start=0, step=1, limit=4
  $region2: #{encoder_forward.5} parent=0 // loop_pre_header
    _
  $region3: #{encoder_forward.5} parent=0 // loop_header
    %s11 = sphi 0, %s15
    %p12 = scmp.ge.s32.totalorder %s11, 4
    %s18 = sphi 0, %s44
    %s19 = sphi 0, %s40
    %s20 = sphi 0, %s36
    %s21 = sphi 0, %s32
    %s22 = sphi 0, %s18
    %s23 = sphi 0, %s19
    %s24 = sphi 0, %s20
    %s25 = sphi 0, %s21
    %s26 = sphi 0, %s22
    %s27 = sphi 0, %s23
    %s28 = sphi 0, %s24
    %s29 = sphi 0, %s25
    %s51 = sphi 0, %s53
    %s54 = sphi 0, %s51
    %s55 = sphi 0, %s54
    %s71 = sphi 0, %s55
    %s79 = sphi 0, %s81
    %s82 = sphi 0, %s79
    %s83 = sphi 0, %s82
    %s99 = sphi 0, %s83
    %s109 = sphi 0, %s111
    %s112 = sphi 0, %s109
    %s113 = sphi 0, %s112
    %s129 = sphi 0, %s113
    %s137 = sphi 0, %s139
    %s140 = sphi 0, %s137
    %s141 = sphi 0, %s140
    %s157 = sphi 0, %s141
    %s165 = sphi 0, %s167
    %s168 = sphi 0, %s165
    %s169 = sphi 0, %s168
    %s185 = sphi 0, %s169
  $region4: #{encoder_forward.5} parent=0 // loop_header_branch
    %14 = sbr.rel (%p12) target = $region8
  $region5: #{encoder_forward.5} parent=0 // loop_body
    %s16 = ssub.s32 %s11, 1
    %s17 = ssub.s32 %s11, 2
    %s30 = sadd.s32 1, %s21
    %p31 = scmp.ge.s32.totalorder %s30, 1
    %s32 = scalar_select %p31, 0, %s30
    %s33 = sadd.s32 1, %s20
    %s34 = scalar_select %p31, %s33, %s20
    %p35 = scmp.ge.s32.totalorder %s34, 1
    %s36 = scalar_select %p35, 0, %s34
    %s37 = sadd.s32 1, %s19
    %s38 = scalar_select %p35, %s37, %s19
    %p39 = scmp.ge.s32.totalorder %s38, 1
    %s40 = scalar_select %p39, 0, %s38
    %s41 = sadd.s32 1, %s18
    %s42 = scalar_select %p39, %s41, %s18
    %p43 = scmp.ge.s32.totalorder %s42, 2
    %s44 = scalar_select %p43, 0, %s42
    %s45 = sadd.s32 %s18, %s20
    %s46 = sadd.s32 %s44, %s36
    %s47 = ssub.s32 %s45, %s46
    %s48 = ssub.s32 %s21, %s32
    %s49 = sor.u32 %s47, %s48
    %p50 = scmp.eq.s32.totalorder %s49, 0
    %s52 = sadd.s32 %s51, 1
    %s53 = scalar_select %p50, %s51, %s52
    %p56 = pneg %p50
    %p57 = scmp.eq.s32.totalorder %s11, 1
    %p58 = por %p56, %p57
    %p59 = scmp.ne.s32.totalorder %s51, %s54
    %p60 = scmp.eq.s32.totalorder %s11, 0
    %p61 = por %p59, %p60
    %p62 = scmp.ne.s32.totalorder %s51, %s54
    %p63 = scmp.eq.s32.totalorder %s16, 1
    %p64 = por %p62, %p63
    %p65 = scmp.ne.s32.totalorder %s54, %s55
    %p66 = scmp.eq.s32.totalorder %s16, 0
    %p67 = por %p65, %p66
    %p68 = scmp.ne.s32.totalorder %s54, %s55
    %p69 = scmp.eq.s32.totalorder %s17, 1
    %p70 = por %p68, %p69
    %p72 = scmp.ne.s32.totalorder %s55, %s71
    %p73 = scmp.eq.s32.totalorder %s17, 0
    %p74 = por %p72, %p73
    %s75 = ssub.s32 %s21, %s32
    %s76 = ssub.s32 %s19, %s40
    %s77 = sor.u32 %s75, %s76
    %p78 = scmp.eq.s32.totalorder %s77, 0
    %s80 = sadd.s32 %s79, 1
    %s81 = scalar_select %p78, %s79, %s80
    %p84 = pneg %p78
    %p85 = scmp.eq.s32.totalorder %s11, 1
    %p86 = por %p84, %p85
    %p87 = scmp.ne.s32.totalorder %s79, %s82
    %p88 = scmp.eq.s32.totalorder %s11, 0
    %p89 = por %p87, %p88
    %p90 = scmp.ne.s32.totalorder %s79, %s82
    %p91 = scmp.eq.s32.totalorder %s16, 1
    %p92 = por %p90, %p91
    %p93 = scmp.ne.s32.totalorder %s82, %s83
    %p94 = scmp.eq.s32.totalorder %s16, 0
    %p95 = por %p93, %p94
    %p96 = scmp.ne.s32.totalorder %s82, %s83
    %p97 = scmp.eq.s32.totalorder %s17, 1
    %p98 = por %p96, %p97
    %p100 = scmp.ne.s32.totalorder %s83, %s99
    %p101 = scmp.eq.s32.totalorder %s17, 0
    %p102 = por %p100, %p101
    %s103 = sadd.s32 %s18, %s20
    %s104 = sadd.s32 %s44, %s36
    %s105 = ssub.s32 %s103, %s104
    %s106 = ssub.s32 %s19, %s40
    %s107 = sor.u32 %s105, %s106
    %p108 = scmp.eq.s32.totalorder %s107, 0
    %s110 = sadd.s32 %s109, 1
    %s111 = scalar_select %p108, %s109, %s110
    %p114 = pneg %p108
    %p115 = scmp.eq.s32.totalorder %s11, 1
    %p116 = por %p114, %p115
    %p117 = scmp.ne.s32.totalorder %s109, %s112
    %p118 = scmp.eq.s32.totalorder %s11, 0
    %p119 = por %p117, %p118
    %p120 = scmp.ne.s32.totalorder %s109, %s112
    %p121 = scmp.eq.s32.totalorder %s16, 1
    %p122 = por %p120, %p121
    %p123 = scmp.ne.s32.totalorder %s112, %s113
    %p124 = scmp.eq.s32.totalorder %s16, 0
    %p125 = por %p123, %p124
    %p126 = scmp.ne.s32.totalorder %s112, %s113
    %p127 = scmp.eq.s32.totalorder %s17, 1
    %p128 = por %p126, %p127
    %p130 = scmp.ne.s32.totalorder %s113, %s129
    %p131 = scmp.eq.s32.totalorder %s17, 0
    %p132 = por %p130, %p131
    %s133 = ssub.s32 %s18, %s44
    %s134 = ssub.s32 %s19, %s40
    %s135 = sor.u32 %s133, %s134
    %p136 = scmp.eq.s32.totalorder %s135, 0
    %s138 = sadd.s32 %s137, 1
    %s139 = scalar_select %p136, %s137, %s138
    %p142 = pneg %p136
    %p143 = scmp.eq.s32.totalorder %s11, 1
    %p144 = por %p142, %p143
    %p145 = scmp.ne.s32.totalorder %s137, %s140
    %p146 = scmp.eq.s32.totalorder %s11, 0
    %p147 = por %p145, %p146
    %p148 = scmp.ne.s32.totalorder %s137, %s140
    %p149 = scmp.eq.s32.totalorder %s16, 1
    %p150 = por %p148, %p149
    %p151 = scmp.ne.s32.totalorder %s140, %s141
    %p152 = scmp.eq.s32.totalorder %s16, 0
    %p153 = por %p151, %p152
    %p154 = scmp.ne.s32.totalorder %s140, %s141
    %p155 = scmp.eq.s32.totalorder %s17, 1
    %p156 = por %p154, %p155
    %p158 = scmp.ne.s32.totalorder %s141, %s157
    %p159 = scmp.eq.s32.totalorder %s17, 0
    %p160 = por %p158, %p159
    %s161 = ssub.s32 %s18, %s44
    %s162 = ssub.s32 %s19, %s40
    %s163 = sor.u32 %s161, %s162
    %p164 = scmp.eq.s32.totalorder %s163, 0
    %s166 = sadd.s32 %s165, 1
    %s167 = scalar_select %p164, %s165, %s166
    %p170 = pneg %p164
    %p171 = scmp.eq.s32.totalorder %s11, 1
    %p172 = por %p170, %p171
    %p173 = scmp.ne.s32.totalorder %s165, %s168
    %p174 = scmp.eq.s32.totalorder %s11, 0
    %p175 = por %p173, %p174
    %p176 = scmp.ne.s32.totalorder %s165, %s168
    %p177 = scmp.eq.s32.totalorder %s16, 1
    %p178 = por %p176, %p177
    %p179 = scmp.ne.s32.totalorder %s168, %s169
    %p180 = scmp.eq.s32.totalorder %s16, 0
    %p181 = por %p179, %p180
    %p182 = scmp.ne.s32.totalorder %s168, %s169
    %p183 = scmp.eq.s32.totalorder %s17, 1
    %p184 = por %p182, %p183
    %p186 = scmp.ne.s32.totalorder %s169, %s185
    %p187 = scmp.eq.s32.totalorder %s17, 0
    %p188 = por %p186, %p187
    %p189 = scmp.le.s32.totalorder 1, %s11
    %p190 = scmp.lt.s32.totalorder %s11, 3
    %p191 = pnand %p189, %p190
    %p192 = pneg %p191
    // Predicated region
    $region9: #{encoder_forward.5} parent=5 // pred_check
      _
    $region10: #{encoder_forward.5} parent=5 // pred_check_branch
      %194 = sbr.rel (%p191) target = $region12
    $region11: #{encoder_forward.5} parent=5 // pred_region
      %s195 = ssub.s32 %s11, 1
      // Predicated region
      $region13: #{encoder_forward.5} parent=11 // pred_check
        %p196 = pneg %p95
      $region14: #{encoder_forward.5} parent=11 // pred_check_branch
        %198 = sbr.rel (%p196) target = $region16
      $region15: #{encoder_forward.5} parent=11 // pred_region
        %s199 = smul.u32 16, %s25
        %p200 = scmp.lt.s32.totalorder %s199, 15
        %s201 = scalar_select %p200, %s199, 15
        %p202 = scmp.lt.s32.totalorder %s23, 0
        %s203 = scalar_select %p202, %s23, 0
        %s204 = sadd.s32 %s203, %s201
        %s205 = smul.addr %s204, 4
        %s206 = scalar_lea.vmem %s1, %s205
        %s207 = smul.u32 16, %s25
      $region16: #{encoder_forward.5} parent=11 // pred_fallthru
        _
    $region12: #{encoder_forward.5} parent=5 // pred_fallthru
      _
    %p208 = scmp.lt.s32.totalorder %s11, 2
    // Predicated region
    $region17: #{encoder_forward.5} parent=5 // pred_check
      %p209 = pneg %p208
    $region18: #{encoder_forward.5} parent=5 // pred_check_branch
      %211 = sbr.rel (%p209) target = $region20
    $region19: #{encoder_forward.5} parent=5 // pred_region
      // Predicated region
      $region21: #{encoder_forward.5} parent=19 // pred_check
        %p212 = pneg %p61
      $region22: #{encoder_forward.5} parent=19 // pred_check_branch
        %214 = sbr.rel (%p212) target = $region24
      $region23: #{encoder_forward.5} parent=19 // pred_region
        %s215 = sadd.s32 %s18, %s20
        %s216 = smul.u32 64, %s215
        %p217 = scmp.lt.s32.totalorder %s216, 127
        %s218 = scalar_select %p217, %s216, 127
        %p219 = scmp.lt.s32.totalorder %s21, 0
        %s220 = scalar_select %p219, %s21, 0
        %s221 = sadd.s32 %s220, %s218
        %s222 = smul.addr %s221, 4
        %s223 = scalar_lea.vmem %s0, %s222
        %s224 = sadd.s32 %s18, %s20
        %s225 = smul.u32 64, %s224
      $region24: #{encoder_forward.5} parent=19 // pred_fallthru
        _
    $region20: #{encoder_forward.5} parent=5 // pred_fallthru
      _
    %p226 = scmp.le.s32.totalorder 1, %s11
    %p227 = scmp.lt.s32.totalorder %s11, 3
    %p228 = pnand %p226, %p227
    %p229 = pneg %p228
    // Predicated region
    $region25: #{encoder_forward.5} parent=5 // pred_check
      _
    $region26: #{encoder_forward.5} parent=5 // pred_check_branch
      %231 = sbr.rel (%p228) target = $region28
    $region27: #{encoder_forward.5} parent=5 // pred_region
      %s232 = ssub.s32 %s11, 1
      %s233 = sadd.s32 %s22, %s24
      %s234 = smul.u32 64, %s233
      %p235 = scmp.lt.s32.totalorder %s234, 127
      %s236 = scalar_select %p235, %s234, 127
      %p237 = scmp.lt.s32.totalorder %s25, 0
      %s238 = scalar_select %p237, %s25, 0
      %s239 = sadd.s32 %s238, %s236
      %s240 = smul.addr %s239, 4
      %s241 = scalar_lea.vmem %s0, %s240
      %p242 = pneg %p67
      %p243 = pneg %p64
      %s244 = smul.u32 16, %s25
      %p245 = scmp.lt.s32.totalorder %s244, 15
      %s246 = scalar_select %p245, %s244, 15
      %p247 = scmp.lt.s32.totalorder %s23, 0
      %s248 = scalar_select %p247, %s23, 0
      %s249 = sadd.s32 %s248, %s246
      %s250 = smul.addr %s249, 4
      %s251 = scalar_lea.vmem %s1, %s250
      %p252 = pneg %p95
      %p253 = pneg %p92
      %p254 = pneg %p125
      %p255 = pneg %p122
      %s256 = sadd.s32 %s22, %s24
      %s257 = smul.u32 64, %s256
      %p258 = scmp.lt.s32.totalorder %s257, 127
      %s259 = scalar_select %p258, %s257, 127
      %p260 = scmp.lt.s32.totalorder %s23, 0
      %s261 = scalar_select %p260, %s23, 0
      %s262 = sadd.s32 %s261, %s259
      %s263 = smul.addr %s262, 4
      %s264 = scalar_lea.vmem %s2, %s263
      %p265 = pneg %p153
      %p266 = pneg %p150
      %p267 = scmp.lt.s32.totalorder %s22, 1
      %s268 = scalar_select %p267, %s22, 1
      %p269 = scmp.lt.s32.totalorder %s23, 0
      %s270 = scalar_select %p269, %s23, 0
      %s271 = sadd.s32 %s270, %s268
      %s272 = smul.addr %s271, 8
      %s273 = scalar_lea.vmem %s3, %s272
      %p274 = pneg %p181
      %p275 = pneg %p178
      %p276 = scmp.lt.s32.totalorder %s22, 1
      %s277 = scalar_select %p276, %s22, 1
      %p278 = scmp.lt.s32.totalorder %s23, 0
      %s279 = scalar_select %p278, %s23, 0
      %s280 = sadd.s32 %s279, %s277
      %s281 = smul.addr %s280, 8
      %s282 = scalar_lea.vmem %s4, %s281
      %s283 = sadd.s32 %s22, %s24
      %s284 = smul.u32 64, %s283
      %p285 = scmp.lt.s32.totalorder %s284, 127
      %s286 = scalar_select %p285, %s284, 127
      %p287 = scmp.lt.s32.totalorder %s25, 0
      %s288 = scalar_select %p287, %s25, 0
      %s289 = sadd.s32 %s288, %s286
      %s290 = smul.addr %s289, 4
      %s291 = scalar_lea.vmem %s0, %s290
      %s292 = sadd.s32 %s22, %s24
      %s293 = smul.u32 64, %s292
      %s294 = smul.u32 16, %s25
      %p295 = scmp.lt.s32.totalorder %s294, 15
      %s296 = scalar_select %p295, %s294, 15
      %p297 = scmp.lt.s32.totalorder %s23, 0
      %s298 = scalar_select %p297, %s23, 0
      %s299 = sadd.s32 %s298, %s296
      %s300 = smul.addr %s299, 4
      %s301 = scalar_lea.vmem %s1, %s300
      %s302 = smul.u32 16, %s25
      %s303 = sadd.s32 %s22, %s24
      %s304 = smul.u32 64, %s303
      %p305 = scmp.lt.s32.totalorder %s304, 127
      %s306 = scalar_select %p305, %s304, 127
      %p307 = scmp.lt.s32.totalorder %s23, 0
      %s308 = scalar_select %p307, %s23, 0
      %s309 = sadd.s32 %s308, %s306
      %s310 = smul.addr %s309, 4
      %s311 = scalar_lea.vmem %s2, %s310
      %s312 = sadd.s32 %s22, %s24
      %s313 = smul.u32 64, %s312
      %p314 = scmp.lt.s32.totalorder %s22, 1
      %s315 = scalar_select %p314, %s22, 1
      %p316 = scmp.lt.s32.totalorder %s23, 0
      %s317 = scalar_select %p316, %s23, 0
      %s318 = sadd.s32 %s317, %s315
      %s319 = smul.addr %s318, 8
      %s320 = scalar_lea.vmem %s3, %s319
      %p321 = scmp.lt.s32.totalorder %s22, 1
      %s322 = scalar_select %p321, %s22, 1
      %p323 = scmp.lt.s32.totalorder %s23, 0
      %s324 = scalar_select %p323, %s23, 0
      %s325 = sadd.s32 %s324, %s322
      %s326 = smul.addr %s325, 8
      %s327 = scalar_lea.vmem %s4, %s326
      %p328 = scmp.eq.s32.totalorder %s25, 0
      // Predicated region
      $region29: #{encoder_forward.5} parent=27 // pred_check
        %p329 = pneg %p328
      $region30: #{encoder_forward.5} parent=27 // pred_check_branch
        %331 = sbr.rel (%p329) target = $region32
      $region31: #{encoder_forward.5} parent=27 // pred_region
        %332 = vst [vmem:[#allocation2] sm:$0xff] 0.0
        %333 = vst [vmem:[#allocation2 + $0x8] sm:$0xff] 0.0
        %334 = vst [vmem:[#allocation2 + $0x10] sm:$0xff] 0.0
        %335 = vst [vmem:[#allocation2 + $0x18] sm:$0xff] 0.0
        %336 = vst [vmem:[#allocation2 + $0x20] sm:$0xff] 0.0
        %337 = vst [vmem:[#allocation2 + $0x28] sm:$0xff] 0.0
        %338 = vst [vmem:[#allocation2 + $0x30] sm:$0xff] 0.0
        %339 = vst [vmem:[#allocation2 + $0x38] sm:$0xff] 0.0
        %340 = vst [vmem:[#allocation2 + $0x40] sm:$0xff] 0.0
        %341 = vst [vmem:[#allocation2 + $0x48] sm:$0xff] 0.0
        %342 = vst [vmem:[#allocation2 + $0x50] sm:$0xff] 0.0
        %343 = vst [vmem:[#allocation2 + $0x58] sm:$0xff] 0.0
        %344 = vst [vmem:[#allocation2 + $0x60] sm:$0xff] 0.0
        %345 = vst [vmem:[#allocation2 + $0x68] sm:$0xff] 0.0
        %346 = vst [vmem:[#allocation2 + $0x70] sm:$0xff] 0.0
        %347 = vst [vmem:[#allocation2 + $0x78] sm:$0xff] 0.0
        %348 = vst [vmem:[#allocation2 + $0x80] sm:$0xff] 0.0
        %349 = vst [vmem:[#allocation2 + $0x88] sm:$0xff] 0.0
        %350 = vst [vmem:[#allocation2 + $0x90] sm:$0xff] 0.0
        %351 = vst [vmem:[#allocation2 + $0x98] sm:$0xff] 0.0
        %352 = vst [vmem:[#allocation2 + $0xa0] sm:$0xff] 0.0
        %353 = vst [vmem:[#allocation2 + $0xa8] sm:$0xff] 0.0
        %354 = vst [vmem:[#allocation2 + $0xb0] sm:$0xff] 0.0
        %355 = vst [vmem:[#allocation2 + $0xb8] sm:$0xff] 0.0
        %356 = vst [vmem:[#allocation2 + $0xc0] sm:$0xff] 0.0
        %357 = vst [vmem:[#allocation2 + $0xc8] sm:$0xff] 0.0
        %358 = vst [vmem:[#allocation2 + $0xd0] sm:$0xff] 0.0
        %359 = vst [vmem:[#allocation2 + $0xd8] sm:$0xff] 0.0
        %360 = vst [vmem:[#allocation2 + $0xe0] sm:$0xff] 0.0
        %361 = vst [vmem:[#allocation2 + $0xe8] sm:$0xff] 0.0
        %362 = vst [vmem:[#allocation2 + $0xf0] sm:$0xff] 0.0
        %363 = vst [vmem:[#allocation2 + $0xf8] sm:$0xff] 0.0
        %364 = vst [vmem:[#allocation2 + $0x100] sm:$0xff] 0.0
        %365 = vst [vmem:[#allocation2 + $0x108] sm:$0xff] 0.0
        %366 = vst [vmem:[#allocation2 + $0x110] sm:$0xff] 0.0
        %367 = vst [vmem:[#allocation2 + $0x118] sm:$0xff] 0.0
        %368 = vst [vmem:[#allocation2 + $0x120] sm:$0xff] 0.0
        %369 = vst [vmem:[#allocation2 + $0x128] sm:$0xff] 0.0
        %370 = vst [vmem:[#allocation2 + $0x130] sm:$0xff] 0.0
        %371 = vst [vmem:[#allocation2 + $0x138] sm:$0xff] 0.0
        %372 = vst [vmem:[#allocation2 + $0x140] sm:$0xff] 0.0
        %373 = vst [vmem:[#allocation2 + $0x148] sm:$0xff] 0.0
        %374 = vst [vmem:[#allocation2 + $0x150] sm:$0xff] 0.0
        %375 = vst [vmem:[#allocation2 + $0x158] sm:$0xff] 0.0
        %376 = vst [vmem:[#allocation2 + $0x160] sm:$0xff] 0.0
        %377 = vst [vmem:[#allocation2 + $0x168] sm:$0xff] 0.0
        %378 = vst [vmem:[#allocation2 + $0x170] sm:$0xff] 0.0
        %379 = vst [vmem:[#allocation2 + $0x178] sm:$0xff] 0.0
        %380 = vst [vmem:[#allocation2 + $0x180] sm:$0xff] 0.0
        %381 = vst [vmem:[#allocation2 + $0x188] sm:$0xff] 0.0
        %382 = vst [vmem:[#allocation2 + $0x190] sm:$0xff] 0.0
        %383 = vst [vmem:[#allocation2 + $0x198] sm:$0xff] 0.0
        %384 = vst [vmem:[#allocation2 + $0x1a0] sm:$0xff] 0.0
        %385 = vst [vmem:[#allocation2 + $0x1a8] sm:$0xff] 0.0
        %386 = vst [vmem:[#allocation2 + $0x1b0] sm:$0xff] 0.0
        %387 = vst [vmem:[#allocation2 + $0x1b8] sm:$0xff] 0.0
        %388 = vst [vmem:[#allocation2 + $0x1c0] sm:$0xff] 0.0
        %389 = vst [vmem:[#allocation2 + $0x1c8] sm:$0xff] 0.0
        %390 = vst [vmem:[#allocation2 + $0x1d0] sm:$0xff] 0.0
        %391 = vst [vmem:[#allocation2 + $0x1d8] sm:$0xff] 0.0
        %392 = vst [vmem:[#allocation2 + $0x1e0] sm:$0xff] 0.0
        %393 = vst [vmem:[#allocation2 + $0x1e8] sm:$0xff] 0.0
        %394 = vst [vmem:[#allocation2 + $0x1f0] sm:$0xff] 0.0
        %395 = vst [vmem:[#allocation2 + $0x1f8] sm:$0xff] 0.0
      $region32: #{encoder_forward.5} parent=27 // pred_fallthru
        _
      %v396 = vld [vmem:[#allocation2] sm:$0xff]
      %v397 = vld [vmem:[#allocation2 + $0x8] sm:$0xff]
      %v398 = vld [vmem:[#allocation2 + $0x10] sm:$0xff]
      %v399 = vld [vmem:[#allocation2 + $0x18] sm:$0xff]
      %v400 = vld [vmem:[#allocation2 + $0x20] sm:$0xff]
      %v401 = vld [vmem:[#allocation2 + $0x28] sm:$0xff]
      %v402 = vld [vmem:[#allocation2 + $0x30] sm:$0xff]
      %v403 = vld [vmem:[#allocation2 + $0x38] sm:$0xff]
      %v404 = vld [vmem:[#allocation2 + $0x40] sm:$0xff]
      %v405 = vld [vmem:[#allocation2 + $0x48] sm:$0xff]
      %v406 = vld [vmem:[#allocation2 + $0x50] sm:$0xff]
      %v407 = vld [vmem:[#allocation2 + $0x58] sm:$0xff]
      %v408 = vld [vmem:[#allocation2 + $0x60] sm:$0xff]
      %v409 = vld [vmem:[#allocation2 + $0x68] sm:$0xff]
      %v410 = vld [vmem:[#allocation2 + $0x70] sm:$0xff]
      %v411 = vld [vmem:[#allocation2 + $0x78] sm:$0xff]
      %v412 = vld [vmem:[#allocation2 + $0x80] sm:$0xff]
      %v413 = vld [vmem:[#allocation2 + $0x88] sm:$0xff]
      %v414 = vld [vmem:[#allocation2 + $0x90] sm:$0xff]
      %v415 = vld [vmem:[#allocation2 + $0x98] sm:$0xff]
      %v416 = vld [vmem:[#allocation2 + $0xa0] sm:$0xff]
      %v417 = vld [vmem:[#allocation2 + $0xa8] sm:$0xff]
      %v418 = vld [vmem:[#allocation2 + $0xb0] sm:$0xff]
      %v419 = vld [vmem:[#allocation2 + $0xb8] sm:$0xff]
      %v420 = vld [vmem:[#allocation2 + $0xc0] sm:$0xff]
      %v421 = vld [vmem:[#allocation2 + $0xc8] sm:$0xff]
      %v422 = vld [vmem:[#allocation2 + $0xd0] sm:$0xff]
      %v423 = vld [vmem:[#allocation2 + $0xd8] sm:$0xff]
      %v424 = vld [vmem:[#allocation2 + $0xe0] sm:$0xff]
      %v425 = vld [vmem:[#allocation2 + $0xe8] sm:$0xff]
      %v426 = vld [vmem:[#allocation2 + $0xf0] sm:$0xff]
      %v427 = vld [vmem:[#allocation2 + $0xf8] sm:$0xff]
      %v428 = vld [vmem:[#allocation2 + $0x100] sm:$0xff]
      %v429 = vld [vmem:[#allocation2 + $0x108] sm:$0xff]
      %v430 = vld [vmem:[#allocation2 + $0x110] sm:$0xff]
      %v431 = vld [vmem:[#allocation2 + $0x118] sm:$0xff]
      %v432 = vld [vmem:[#allocation2 + $0x120] sm:$0xff]
      %v433 = vld [vmem:[#allocation2 + $0x128] sm:$0xff]
      %v434 = vld [vmem:[#allocation2 + $0x130] sm:$0xff]
      %v435 = vld [vmem:[#allocation2 + $0x138] sm:$0xff]
      %v436 = vld [vmem:[#allocation2 + $0x140] sm:$0xff]
      %v437 = vld [vmem:[#allocation2 + $0x148] sm:$0xff]
      %v438 = vld [vmem:[#allocation2 + $0x150] sm:$0xff]
      %v439 = vld [vmem:[#allocation2 + $0x158] sm:$0xff]
      %v440 = vld [vmem:[#allocation2 + $0x160] sm:$0xff]
      %v441 = vld [vmem:[#allocation2 + $0x168] sm:$0xff]
      %v442 = vld [vmem:[#allocation2 + $0x170] sm:$0xff]
      %v443 = vld [vmem:[#allocation2 + $0x178] sm:$0xff]
      %v444 = vld [vmem:[#allocation2 + $0x180] sm:$0xff]
      %v445 = vld [vmem:[#allocation2 + $0x188] sm:$0xff]
      %v446 = vld [vmem:[#allocation2 + $0x190] sm:$0xff]
      %v447 = vld [vmem:[#allocation2 + $0x198] sm:$0xff]
      %v448 = vld [vmem:[#allocation2 + $0x1a0] sm:$0xff]
      %v449 = vld [vmem:[#allocation2 + $0x1a8] sm:$0xff]
      %v450 = vld [vmem:[#allocation2 + $0x1b0] sm:$0xff]
      %v451 = vld [vmem:[#allocation2 + $0x1b8] sm:$0xff]
      %v452 = vld [vmem:[#allocation2 + $0x1c0] sm:$0xff]
      %v453 = vld [vmem:[#allocation2 + $0x1c8] sm:$0xff]
      %v454 = vld [vmem:[#allocation2 + $0x1d0] sm:$0xff]
      %v455 = vld [vmem:[#allocation2 + $0x1d8] sm:$0xff]
      %v456 = vld [vmem:[#allocation2 + $0x1e0] sm:$0xff]
      %v457 = vld [vmem:[#allocation2 + $0x1e8] sm:$0xff]
      %v458 = vld [vmem:[#allocation2 + $0x1f0] sm:$0xff]
      %v459 = vld [vmem:[#allocation2 + $0x1f8] sm:$0xff]
      %v460 = vld [vmem:[%s291] sm:$0xf]
      %v461 = vld [vmem:[%s291 + $0x4] sm:$0xf]
      %v462 = vld [vmem:[%s291 + $0x8] sm:$0xf]
      %v463 = vld [vmem:[%s291 + $0xc] sm:$0xf]
      %v464 = vld [vmem:[%s291 + $0x10] sm:$0xf]
      %v465 = vld [vmem:[%s291 + $0x14] sm:$0xf]
      %v466 = vld [vmem:[%s291 + $0x18] sm:$0xf]
      %v467 = vld [vmem:[%s291 + $0x1c] sm:$0xf]
      %v468 = vld [vmem:[%s291 + $0x20] sm:$0xf]
      %v469 = vld [vmem:[%s291 + $0x24] sm:$0xf]
      %v470 = vld [vmem:[%s291 + $0x28] sm:$0xf]
      %v471 = vld [vmem:[%s291 + $0x2c] sm:$0xf]
      %v472 = vld [vmem:[%s291 + $0x30] sm:$0xf]
      %v473 = vld [vmem:[%s291 + $0x34] sm:$0xf]
      %v474 = vld [vmem:[%s291 + $0x38] sm:$0xf]
      %v475 = vld [vmem:[%s291 + $0x3c] sm:$0xf]
      %v476 = vld [vmem:[%s291 + $0x40] sm:$0xf]
      %v477 = vld [vmem:[%s291 + $0x44] sm:$0xf]
      %v478 = vld [vmem:[%s291 + $0x48] sm:$0xf]
      %v479 = vld [vmem:[%s291 + $0x4c] sm:$0xf]
      %v480 = vld [vmem:[%s291 + $0x50] sm:$0xf]
      %v481 = vld [vmem:[%s291 + $0x54] sm:$0xf]
      %v482 = vld [vmem:[%s291 + $0x58] sm:$0xf]
      %v483 = vld [vmem:[%s291 + $0x5c] sm:$0xf]
      %v484 = vld [vmem:[%s291 + $0x60] sm:$0xf]
      %v485 = vld [vmem:[%s291 + $0x64] sm:$0xf]
      %v486 = vld [vmem:[%s291 + $0x68] sm:$0xf]
      %v487 = vld [vmem:[%s291 + $0x6c] sm:$0xf]
      %v488 = vld [vmem:[%s291 + $0x70] sm:$0xf]
      %v489 = vld [vmem:[%s291 + $0x74] sm:$0xf]
      %v490 = vld [vmem:[%s291 + $0x78] sm:$0xf]
      %v491 = vld [vmem:[%s291 + $0x7c] sm:$0xf]
      %v492 = vld [vmem:[%s291 + $0x80] sm:$0xf]
      %v493 = vld [vmem:[%s291 + $0x84] sm:$0xf]
      %v494 = vld [vmem:[%s291 + $0x88] sm:$0xf]
      %v495 = vld [vmem:[%s291 + $0x8c] sm:$0xf]
      %v496 = vld [vmem:[%s291 + $0x90] sm:$0xf]
      %v497 = vld [vmem:[%s291 + $0x94] sm:$0xf]
      %v498 = vld [vmem:[%s291 + $0x98] sm:$0xf]
      %v499 = vld [vmem:[%s291 + $0x9c] sm:$0xf]
      %v500 = vld [vmem:[%s291 + $0xa0] sm:$0xf]
      %v501 = vld [vmem:[%s291 + $0xa4] sm:$0xf]
      %v502 = vld [vmem:[%s291 + $0xa8] sm:$0xf]
      %v503 = vld [vmem:[%s291 + $0xac] sm:$0xf]
      %v504 = vld [vmem:[%s291 + $0xb0] sm:$0xf]
      %v505 = vld [vmem:[%s291 + $0xb4] sm:$0xf]
      %v506 = vld [vmem:[%s291 + $0xb8] sm:$0xf]
      %v507 = vld [vmem:[%s291 + $0xbc] sm:$0xf]
      %v508 = vld [vmem:[%s291 + $0xc0] sm:$0xf]
      %v509 = vld [vmem:[%s291 + $0xc4] sm:$0xf]
      %v510 = vld [vmem:[%s291 + $0xc8] sm:$0xf]
      %v511 = vld [vmem:[%s291 + $0xcc] sm:$0xf]
      %v512 = vld [vmem:[%s291 + $0xd0] sm:$0xf]
      %v513 = vld [vmem:[%s291 + $0xd4] sm:$0xf]
      %v514 = vld [vmem:[%s291 + $0xd8] sm:$0xf]
      %v515 = vld [vmem:[%s291 + $0xdc] sm:$0xf]
      %v516 = vld [vmem:[%s291 + $0xe0] sm:$0xf]
      %v517 = vld [vmem:[%s291 + $0xe4] sm:$0xf]
      %v518 = vld [vmem:[%s291 + $0xe8] sm:$0xf]
      %v519 = vld [vmem:[%s291 + $0xec] sm:$0xf]
      %v520 = vld [vmem:[%s291 + $0xf0] sm:$0xf]
      %v521 = vld [vmem:[%s291 + $0xf4] sm:$0xf]
      %v522 = vld [vmem:[%s291 + $0xf8] sm:$0xf]
      %v523 = vld [vmem:[%s291 + $0xfc] sm:$0xf]
      %v524 = vld [vmem:[%s301] sm:$0xf]
      %v525 = vld [vmem:[%s301 + $0x4] sm:$0xf]
      %v526 = vld [vmem:[%s301 + $0x8] sm:$0xf]
      %v527 = vld [vmem:[%s301 + $0xc] sm:$0xf]
      %v528 = vld [vmem:[%s301 + $0x10] sm:$0xf]
      %v529 = vld [vmem:[%s301 + $0x14] sm:$0xf]
      %v530 = vld [vmem:[%s301 + $0x18] sm:$0xf]
      %v531 = vld [vmem:[%s301 + $0x1c] sm:$0xf]
      %v532 = vld [vmem:[%s301 + $0x20] sm:$0xf]
      %v533 = vld [vmem:[%s301 + $0x24] sm:$0xf]
      %v534 = vld [vmem:[%s301 + $0x28] sm:$0xf]
      %v535 = vld [vmem:[%s301 + $0x2c] sm:$0xf]
      %v536 = vld [vmem:[%s301 + $0x30] sm:$0xf]
      %v537 = vld [vmem:[%s301 + $0x34] sm:$0xf]
      %v538 = vld [vmem:[%s301 + $0x38] sm:$0xf]
      %v539 = vld [vmem:[%s301 + $0x3c] sm:$0xf]
      %v604 = vunpack.c.l.b16 %v460
      %v605 = vunpack.c.l.b16 %v461
      %v606 = vunpack.c.l.b16 %v462
      %v607 = vunpack.c.l.b16 %v463
      %v608 = vunpack.c.l.b16 %v464
      %v609 = vunpack.c.l.b16 %v465
      %v610 = vunpack.c.l.b16 %v466
      %v611 = vunpack.c.l.b16 %v467
      %v612 = vunpack.c.l.b16 %v468
      %v613 = vunpack.c.l.b16 %v469
      %v614 = vunpack.c.l.b16 %v470
      %v615 = vunpack.c.l.b16 %v471
      %v616 = vunpack.c.l.b16 %v472
      %v617 = vunpack.c.l.b16 %v473
      %v618 = vunpack.c.l.b16 %v474
      %v619 = vunpack.c.l.b16 %v475
      %v620 = vunpack.c.l.b16 %v476
      %v621 = vunpack.c.l.b16 %v477
      %v622 = vunpack.c.l.b16 %v478
      %v623 = vunpack.c.l.b16 %v479
      %v624 = vunpack.c.l.b16 %v480
      %v625 = vunpack.c.l.b16 %v481
      %v626 = vunpack.c.l.b16 %v482
      %v627 = vunpack.c.l.b16 %v483
      %v628 = vunpack.c.l.b16 %v484
      %v629 = vunpack.c.l.b16 %v485
      %v630 = vunpack.c.l.b16 %v486
      %v631 = vunpack.c.l.b16 %v487
      %v632 = vunpack.c.l.b16 %v488
      %v633 = vunpack.c.l.b16 %v489
      %v634 = vunpack.c.l.b16 %v490
      %v635 = vunpack.c.l.b16 %v491
      %v636 = vunpack.c.l.b16 %v492
      %v637 = vunpack.c.l.b16 %v493
      %v638 = vunpack.c.l.b16 %v494
      %v639 = vunpack.c.l.b16 %v495
      %v640 = vunpack.c.l.b16 %v496
      %v641 = vunpack.c.l.b16 %v497
      %v642 = vunpack.c.l.b16 %v498
      %v643 = vunpack.c.l.b16 %v499
      %v644 = vunpack.c.l.b16 %v500
      %v645 = vunpack.c.l.b16 %v501
      %v646 = vunpack.c.l.b16 %v502
      %v647 = vunpack.c.l.b16 %v503
      %v648 = vunpack.c.l.b16 %v504
      %v649 = vunpack.c.l.b16 %v505
      %v650 = vunpack.c.l.b16 %v506
      %v651 = vunpack.c.l.b16 %v507
      %v652 = vunpack.c.l.b16 %v508
      %v653 = vunpack.c.l.b16 %v509
      %v654 = vunpack.c.l.b16 %v510
      %v655 = vunpack.c.l.b16 %v511
      %v656 = vunpack.c.l.b16 %v512
      %v657 = vunpack.c.l.b16 %v513
      %v658 = vunpack.c.l.b16 %v514
      %v659 = vunpack.c.l.b16 %v515
      %v660 = vunpack.c.l.b16 %v516
      %v661 = vunpack.c.l.b16 %v517
      %v662 = vunpack.c.l.b16 %v518
      %v663 = vunpack.c.l.b16 %v519
      %v664 = vunpack.c.l.b16 %v520
      %v665 = vunpack.c.l.b16 %v521
      %v666 = vunpack.c.l.b16 %v522
      %v667 = vunpack.c.l.b16 %v523
      %v668 = vpack.c.b16 %v605, %v604
      %v669 = vpack.c.b16 %v607, %v606
      %v670 = vpack.c.b16 %v609, %v608
      %v671 = vpack.c.b16 %v611, %v610
      %v672 = vpack.c.b16 %v613, %v612
      %v673 = vpack.c.b16 %v615, %v614
      %v674 = vpack.c.b16 %v617, %v616
      %v675 = vpack.c.b16 %v619, %v618
      %v676 = vpack.c.b16 %v621, %v620
      %v677 = vpack.c.b16 %v623, %v622
      %v678 = vpack.c.b16 %v625, %v624
      %v679 = vpack.c.b16 %v627, %v626
      %v680 = vpack.c.b16 %v629, %v628
      %v681 = vpack.c.b16 %v631, %v630
      %v682 = vpack.c.b16 %v633, %v632
      %v683 = vpack.c.b16 %v635, %v634
      %v684 = vpack.c.b16 %v637, %v636
      %v685 = vpack.c.b16 %v639, %v638
      %v686 = vpack.c.b16 %v641, %v640
      %v687 = vpack.c.b16 %v643, %v642
      %v688 = vpack.c.b16 %v645, %v644
      %v689 = vpack.c.b16 %v647, %v646
      %v690 = vpack.c.b16 %v649, %v648
      %v691 = vpack.c.b16 %v651, %v650
      %v692 = vpack.c.b16 %v653, %v652
      %v693 = vpack.c.b16 %v655, %v654
      %v694 = vpack.c.b16 %v657, %v656
      %v695 = vpack.c.b16 %v659, %v658
      %v696 = vpack.c.b16 %v661, %v660
      %v697 = vpack.c.b16 %v663, %v662
      %v698 = vpack.c.b16 %v665, %v664
      %v699 = vpack.c.b16 %v667, %v666
      %v748 = vunpack.c.l.b16 %v524
      %v749 = vunpack.c.l.b16 %v525
      %v750 = vunpack.c.l.b16 %v526
      %v751 = vunpack.c.l.b16 %v527
      %v752 = vunpack.c.l.b16 %v528
      %v753 = vunpack.c.l.b16 %v529
      %v754 = vunpack.c.l.b16 %v530
      %v755 = vunpack.c.l.b16 %v531
      %v756 = vunpack.c.l.b16 %v532
      %v757 = vunpack.c.l.b16 %v533
      %v758 = vunpack.c.l.b16 %v534
      %v759 = vunpack.c.l.b16 %v535
      %v760 = vunpack.c.l.b16 %v536
      %v761 = vunpack.c.l.b16 %v537
      %v762 = vunpack.c.l.b16 %v538
      %v763 = vunpack.c.l.b16 %v539
      %v764 = vpack.c.b16 %v749, %v748
      %v765 = vpack.c.b16 %v751, %v750
      %v766 = vpack.c.b16 %v753, %v752
      %v767 = vpack.c.b16 %v755, %v754
      %v768 = vpack.c.b16 %v757, %v756
      %v769 = vpack.c.b16 %v759, %v758
      %v770 = vpack.c.b16 %v761, %v760
      %v771 = vpack.c.b16 %v763, %v762
      %780 = vmatpush.bf16.msra.mxu0 %v771
      %781 = vmatpush.bf16.msra.mxu0 %v770
      %782 = vmatpush.bf16.msra.mxu0 %v769
      %783 = vmatpush.bf16.msra.mxu0 %v768
      %784 = vmatpush.bf16.msra.mxu0 %v767
      %785 = vmatpush.bf16.msra.mxu0 %v766
      %786 = vmatpush.bf16.msra.mxu0 %v765
      %787 = vmatpush.bf16.msra.mxu0 %v764
      %788 = vmatmul.bf16.gmra.mxu0 %v668
      %v789 = vpop.f32.mrf.mxu0
      %v790 = vadd.f32 0.0, %v789
      %v791 = vpop.f32.mrf.mxu0
      %v792 = vadd.f32 0.0, %v791
      %793 = vmatmul.bf16.gmra.mxu0 %v669
      %v794 = vpop.f32.mrf.mxu0
      %v795 = vadd.f32 0.0, %v794
      %v796 = vpop.f32.mrf.mxu0
      %v797 = vadd.f32 0.0, %v796
      %798 = vmatmul.bf16.gmra.mxu0 %v670
      %v799 = vpop.f32.mrf.mxu0
      %v800 = vadd.f32 0.0, %v799
      %v801 = vpop.f32.mrf.mxu0
      %v802 = vadd.f32 0.0, %v801
      %803 = vmatmul.bf16.gmra.mxu0 %v671
      %v804 = vpop.f32.mrf.mxu0
      %v805 = vadd.f32 0.0, %v804
      %v806 = vpop.f32.mrf.mxu0
      %v807 = vadd.f32 0.0, %v806
      %808 = vmatmul.bf16.gmra.mxu0 %v672
      %v809 = vpop.f32.mrf.mxu0
      %v810 = vadd.f32 0.0, %v809
      %v811 = vpop.f32.mrf.mxu0
      %v812 = vadd.f32 0.0, %v811
      %813 = vmatmul.bf16.gmra.mxu0 %v673
      %v814 = vpop.f32.mrf.mxu0
      %v815 = vadd.f32 0.0, %v814
      %v816 = vpop.f32.mrf.mxu0
      %v817 = vadd.f32 0.0, %v816
      %818 = vmatmul.bf16.gmra.mxu0 %v674
      %v819 = vpop.f32.mrf.mxu0
      %v820 = vadd.f32 0.0, %v819
      %v821 = vpop.f32.mrf.mxu0
      %v822 = vadd.f32 0.0, %v821
      %823 = vmatmul.bf16.gmra.mxu0 %v675
      %v824 = vpop.f32.mrf.mxu0
      %v825 = vadd.f32 0.0, %v824
      %v826 = vpop.f32.mrf.mxu0
      %v827 = vadd.f32 0.0, %v826
      %828 = vmatmul.bf16.gmra.mxu0 %v676
      %v829 = vpop.f32.mrf.mxu0
      %v830 = vadd.f32 0.0, %v829
      %v831 = vpop.f32.mrf.mxu0
      %v832 = vadd.f32 0.0, %v831
      %833 = vmatmul.bf16.gmra.mxu0 %v677
      %v834 = vpop.f32.mrf.mxu0
      %v835 = vadd.f32 0.0, %v834
      %v836 = vpop.f32.mrf.mxu0
      %v837 = vadd.f32 0.0, %v836
      %838 = vmatmul.bf16.gmra.mxu0 %v678
      %v839 = vpop.f32.mrf.mxu0
      %v840 = vadd.f32 0.0, %v839
      %v841 = vpop.f32.mrf.mxu0
      %v842 = vadd.f32 0.0, %v841
      %843 = vmatmul.bf16.gmra.mxu0 %v679
      %v844 = vpop.f32.mrf.mxu0
      %v845 = vadd.f32 0.0, %v844
      %v846 = vpop.f32.mrf.mxu0
      %v847 = vadd.f32 0.0, %v846
      %848 = vmatmul.bf16.gmra.mxu0 %v680
      %v849 = vpop.f32.mrf.mxu0
      %v850 = vadd.f32 0.0, %v849
      %v851 = vpop.f32.mrf.mxu0
      %v852 = vadd.f32 0.0, %v851
      %853 = vmatmul.bf16.gmra.mxu0 %v681
      %v854 = vpop.f32.mrf.mxu0
      %v855 = vadd.f32 0.0, %v854
      %v856 = vpop.f32.mrf.mxu0
      %v857 = vadd.f32 0.0, %v856
      %858 = vmatmul.bf16.gmra.mxu0 %v682
      %v859 = vpop.f32.mrf.mxu0
      %v860 = vadd.f32 0.0, %v859
      %v861 = vpop.f32.mrf.mxu0
      %v862 = vadd.f32 0.0, %v861
      %863 = vmatmul.bf16.gmra.mxu0 %v683
      %v864 = vpop.f32.mrf.mxu0
      %v865 = vadd.f32 0.0, %v864
      %v866 = vpop.f32.mrf.mxu0
      %v867 = vadd.f32 0.0, %v866
      %868 = vmatmul.bf16.gmra.mxu0 %v684
      %v869 = vpop.f32.mrf.mxu0
      %v870 = vadd.f32 0.0, %v869
      %v871 = vpop.f32.mrf.mxu0
      %v872 = vadd.f32 0.0, %v871
      %873 = vmatmul.bf16.gmra.mxu0 %v685
      %v874 = vpop.f32.mrf.mxu0
      %v875 = vadd.f32 0.0, %v874
      %v876 = vpop.f32.mrf.mxu0
      %v877 = vadd.f32 0.0, %v876
      %878 = vmatmul.bf16.gmra.mxu0 %v686
      %v879 = vpop.f32.mrf.mxu0
      %v880 = vadd.f32 0.0, %v879
      %v881 = vpop.f32.mrf.mxu0
      %v882 = vadd.f32 0.0, %v881
      %883 = vmatmul.bf16.gmra.mxu0 %v687
      %v884 = vpop.f32.mrf.mxu0
      %v885 = vadd.f32 0.0, %v884
      %v886 = vpop.f32.mrf.mxu0
      %v887 = vadd.f32 0.0, %v886
      %888 = vmatmul.bf16.gmra.mxu0 %v688
      %v889 = vpop.f32.mrf.mxu0
      %v890 = vadd.f32 0.0, %v889
      %v891 = vpop.f32.mrf.mxu0
      %v892 = vadd.f32 0.0, %v891
      %893 = vmatmul.bf16.gmra.mxu0 %v689
      %v894 = vpop.f32.mrf.mxu0
      %v895 = vadd.f32 0.0, %v894
      %v896 = vpop.f32.mrf.mxu0
      %v897 = vadd.f32 0.0, %v896
      %898 = vmatmul.bf16.gmra.mxu0 %v690
      %v899 = vpop.f32.mrf.mxu0
      %v900 = vadd.f32 0.0, %v899
      %v901 = vpop.f32.mrf.mxu0
      %v902 = vadd.f32 0.0, %v901
      %903 = vmatmul.bf16.gmra.mxu0 %v691
      %v904 = vpop.f32.mrf.mxu0
      %v905 = vadd.f32 0.0, %v904
      %v906 = vpop.f32.mrf.mxu0
      %v907 = vadd.f32 0.0, %v906
      %908 = vmatmul.bf16.gmra.mxu0 %v692
      %v909 = vpop.f32.mrf.mxu0
      %v910 = vadd.f32 0.0, %v909
      %v911 = vpop.f32.mrf.mxu0
      %v912 = vadd.f32 0.0, %v911
      %913 = vmatmul.bf16.gmra.mxu0 %v693
      %v914 = vpop.f32.mrf.mxu0
      %v915 = vadd.f32 0.0, %v914
      %v916 = vpop.f32.mrf.mxu0
      %v917 = vadd.f32 0.0, %v916
      %918 = vmatmul.bf16.gmra.mxu0 %v694
      %v919 = vpop.f32.mrf.mxu0
      %v920 = vadd.f32 0.0, %v919
      %v921 = vpop.f32.mrf.mxu0
      %v922 = vadd.f32 0.0, %v921
      %923 = vmatmul.bf16.gmra.mxu0 %v695
      %v924 = vpop.f32.mrf.mxu0
      %v925 = vadd.f32 0.0, %v924
      %v926 = vpop.f32.mrf.mxu0
      %v927 = vadd.f32 0.0, %v926
      %928 = vmatmul.bf16.gmra.mxu0 %v696
      %v929 = vpop.f32.mrf.mxu0
      %v930 = vadd.f32 0.0, %v929
      %v931 = vpop.f32.mrf.mxu0
      %v932 = vadd.f32 0.0, %v931
      %933 = vmatmul.bf16.gmra.mxu0 %v697
      %v934 = vpop.f32.mrf.mxu0
      %v935 = vadd.f32 0.0, %v934
      %v936 = vpop.f32.mrf.mxu0
      %v937 = vadd.f32 0.0, %v936
      %938 = vmatmul.bf16.gmra.mxu0 %v698
      %v939 = vpop.f32.mrf.mxu0
      %v940 = vadd.f32 0.0, %v939
      %v941 = vpop.f32.mrf.mxu0
      %v942 = vadd.f32 0.0, %v941
      %943 = vmatmul.bf16.gmra.mxu0 %v699
      %v944 = vpop.f32.mrf.mxu0
      %v945 = vadd.f32 0.0, %v944
      %v946 = vpop.f32.mrf.mxu0
      %v947 = vadd.f32 0.0, %v946
      %948 = vdwg.mxu0
      %v949 = vadd.f32 %v396, %v790
      %v950 = vadd.f32 %v397, %v792
      %v951 = vadd.f32 %v398, %v795
      %v952 = vadd.f32 %v399, %v797
      %v953 = vadd.f32 %v400, %v800
      %v954 = vadd.f32 %v401, %v802
      %v955 = vadd.f32 %v402, %v805
      %v956 = vadd.f32 %v403, %v807
      %v957 = vadd.f32 %v404, %v810
      %v958 = vadd.f32 %v405, %v812
      %v959 = vadd.f32 %v406, %v815
      %v960 = vadd.f32 %v407, %v817
      %v961 = vadd.f32 %v408, %v820
      %v962 = vadd.f32 %v409, %v822
      %v963 = vadd.f32 %v410, %v825
      %v964 = vadd.f32 %v411, %v827
      %v965 = vadd.f32 %v412, %v830
      %v966 = vadd.f32 %v413, %v832
      %v967 = vadd.f32 %v414, %v835
      %v968 = vadd.f32 %v415, %v837
      %v969 = vadd.f32 %v416, %v840
      %v970 = vadd.f32 %v417, %v842
      %v971 = vadd.f32 %v418, %v845
      %v972 = vadd.f32 %v419, %v847
      %v973 = vadd.f32 %v420, %v850
      %v974 = vadd.f32 %v421, %v852
      %v975 = vadd.f32 %v422, %v855
      %v976 = vadd.f32 %v423, %v857
      %v977 = vadd.f32 %v424, %v860
      %v978 = vadd.f32 %v425, %v862
      %v979 = vadd.f32 %v426, %v865
      %v980 = vadd.f32 %v427, %v867
      %v981 = vadd.f32 %v428, %v870
      %v982 = vadd.f32 %v429, %v872
      %v983 = vadd.f32 %v430, %v875
      %v984 = vadd.f32 %v431, %v877
      %v985 = vadd.f32 %v432, %v880
      %v986 = vadd.f32 %v433, %v882
      %v987 = vadd.f32 %v434, %v885
      %v988 = vadd.f32 %v435, %v887
      %v989 = vadd.f32 %v436, %v890
      %v990 = vadd.f32 %v437, %v892
      %v991 = vadd.f32 %v438, %v895
      %v992 = vadd.f32 %v439, %v897
      %v993 = vadd.f32 %v440, %v900
      %v994 = vadd.f32 %v441, %v902
      %v995 = vadd.f32 %v442, %v905
      %v996 = vadd.f32 %v443, %v907
      %v997 = vadd.f32 %v444, %v910
      %v998 = vadd.f32 %v445, %v912
      %v999 = vadd.f32 %v446, %v915
      %v1000 = vadd.f32 %v447, %v917
      %v1001 = vadd.f32 %v448, %v920
      %v1002 = vadd.f32 %v449, %v922
      %v1003 = vadd.f32 %v450, %v925
      %v1004 = vadd.f32 %v451, %v927
      %v1005 = vadd.f32 %v452, %v930
      %v1006 = vadd.f32 %v453, %v932
      %v1007 = vadd.f32 %v454, %v935
      %v1008 = vadd.f32 %v455, %v937
      %v1009 = vadd.f32 %v456, %v940
      %v1010 = vadd.f32 %v457, %v942
      %v1011 = vadd.f32 %v458, %v945
      %v1012 = vadd.f32 %v459, %v947
      %1013 = vst [vmem:[#allocation2] sm:$0xff] %v949
      %1014 = vst [vmem:[#allocation2 + $0x8] sm:$0xff] %v950
      %1015 = vst [vmem:[#allocation2 + $0x10] sm:$0xff] %v951
      %1016 = vst [vmem:[#allocation2 + $0x18] sm:$0xff] %v952
      %1017 = vst [vmem:[#allocation2 + $0x20] sm:$0xff] %v953
      %1018 = vst [vmem:[#allocation2 + $0x28] sm:$0xff] %v954
      %1019 = vst [vmem:[#allocation2 + $0x30] sm:$0xff] %v955
      %1020 = vst [vmem:[#allocation2 + $0x38] sm:$0xff] %v956
      %1021 = vst [vmem:[#allocation2 + $0x40] sm:$0xff] %v957
      %1022 = vst [vmem:[#allocation2 + $0x48] sm:$0xff] %v958
      %1023 = vst [vmem:[#allocation2 + $0x50] sm:$0xff] %v959
      %1024 = vst [vmem:[#allocation2 + $0x58] sm:$0xff] %v960
      %1025 = vst [vmem:[#allocation2 + $0x60] sm:$0xff] %v961
      %1026 = vst [vmem:[#allocation2 + $0x68] sm:$0xff] %v962
      %1027 = vst [vmem:[#allocation2 + $0x70] sm:$0xff] %v963
      %1028 = vst [vmem:[#allocation2 + $0x78] sm:$0xff] %v964
      %1029 = vst [vmem:[#allocation2 + $0x80] sm:$0xff] %v965
      %1030 = vst [vmem:[#allocation2 + $0x88] sm:$0xff] %v966
      %1031 = vst [vmem:[#allocation2 + $0x90] sm:$0xff] %v967
      %1032 = vst [vmem:[#allocation2 + $0x98] sm:$0xff] %v968
      %1033 = vst [vmem:[#allocation2 + $0xa0] sm:$0xff] %v969
      %1034 = vst [vmem:[#allocation2 + $0xa8] sm:$0xff] %v970
      %1035 = vst [vmem:[#allocation2 + $0xb0] sm:$0xff] %v971
      %1036 = vst [vmem:[#allocation2 + $0xb8] sm:$0xff] %v972
      %1037 = vst [vmem:[#allocation2 + $0xc0] sm:$0xff] %v973
      %1038 = vst [vmem:[#allocation2 + $0xc8] sm:$0xff] %v974
      %1039 = vst [vmem:[#allocation2 + $0xd0] sm:$0xff] %v975
      %1040 = vst [vmem:[#allocation2 + $0xd8] sm:$0xff] %v976
      %1041 = vst [vmem:[#allocation2 + $0xe0] sm:$0xff] %v977
      %1042 = vst [vmem:[#allocation2 + $0xe8] sm:$0xff] %v978
      %1043 = vst [vmem:[#allocation2 + $0xf0] sm:$0xff] %v979
      %1044 = vst [vmem:[#allocation2 + $0xf8] sm:$0xff] %v980
      %1045 = vst [vmem:[#allocation2 + $0x100] sm:$0xff] %v981
      %1046 = vst [vmem:[#allocation2 + $0x108] sm:$0xff] %v982
      %1047 = vst [vmem:[#allocation2 + $0x110] sm:$0xff] %v983
      %1048 = vst [vmem:[#allocation2 + $0x118] sm:$0xff] %v984
      %1049 = vst [vmem:[#allocation2 + $0x120] sm:$0xff] %v985
      %1050 = vst [vmem:[#allocation2 + $0x128] sm:$0xff] %v986
      %1051 = vst [vmem:[#allocation2 + $0x130] sm:$0xff] %v987
      %1052 = vst [vmem:[#allocation2 + $0x138] sm:$0xff] %v988
      %1053 = vst [vmem:[#allocation2 + $0x140] sm:$0xff] %v989
      %1054 = vst [vmem:[#allocation2 + $0x148] sm:$0xff] %v990
      %1055 = vst [vmem:[#allocation2 + $0x150] sm:$0xff] %v991
      %1056 = vst [vmem:[#allocation2 + $0x158] sm:$0xff] %v992
      %1057 = vst [vmem:[#allocation2 + $0x160] sm:$0xff] %v993
      %1058 = vst [vmem:[#allocation2 + $0x168] sm:$0xff] %v994
      %1059 = vst [vmem:[#allocation2 + $0x170] sm:$0xff] %v995
      %1060 = vst [vmem:[#allocation2 + $0x178] sm:$0xff] %v996
      %1061 = vst [vmem:[#allocation2 + $0x180] sm:$0xff] %v997
      %1062 = vst [vmem:[#allocation2 + $0x188] sm:$0xff] %v998
      %1063 = vst [vmem:[#allocation2 + $0x190] sm:$0xff] %v999
      %1064 = vst [vmem:[#allocation2 + $0x198] sm:$0xff] %v1000
      %1065 = vst [vmem:[#allocation2 + $0x1a0] sm:$0xff] %v1001
      %1066 = vst [vmem:[#allocation2 + $0x1a8] sm:$0xff] %v1002
      %1067 = vst [vmem:[#allocation2 + $0x1b0] sm:$0xff] %v1003
      %1068 = vst [vmem:[#allocation2 + $0x1b8] sm:$0xff] %v1004
      %1069 = vst [vmem:[#allocation2 + $0x1c0] sm:$0xff] %v1005
      %1070 = vst [vmem:[#allocation2 + $0x1c8] sm:$0xff] %v1006
      %1071 = vst [vmem:[#allocation2 + $0x1d0] sm:$0xff] %v1007
      %1072 = vst [vmem:[#allocation2 + $0x1d8] sm:$0xff] %v1008
      %1073 = vst [vmem:[#allocation2 + $0x1e0] sm:$0xff] %v1009
      %1074 = vst [vmem:[#allocation2 + $0x1e8] sm:$0xff] %v1010
      %1075 = vst [vmem:[#allocation2 + $0x1f0] sm:$0xff] %v1011
      %1076 = vst [vmem:[#allocation2 + $0x1f8] sm:$0xff] %v1012
      %p1077 = scmp.eq.s32.totalorder %s24, 0
      %p1078 = pnand %p1077, %p328
      %p1079 = pneg %p1078
      // Predicated region
      $region33: #{encoder_forward.5} parent=27 // pred_check
        _
      $region34: #{encoder_forward.5} parent=27 // pred_check_branch
        %1081 = sbr.rel (%p1078) target = $region36
      $region35: #{encoder_forward.5} parent=27 // pred_region
        %1082 = vst [vmem:[%s320] sm:$0xff] 0.0
        %1083 = vst [vmem:[%s327] sm:$0xff] 0.0
      $region36: #{encoder_forward.5} parent=27 // pred_fallthru
        _
      // Predicated region
      $region37: #{encoder_forward.5} parent=27 // pred_check
        %p1084 = pneg %p328
      $region38: #{encoder_forward.5} parent=27 // pred_check_branch
        %1086 = sbr.rel (%p1084) target = $region40
      $region39: #{encoder_forward.5} parent=27 // pred_region
        %v1087 = vld [vmem:[#allocation2] sm:$0xff]
        %v1088 = vld [vmem:[#allocation2 + $0x8] sm:$0xff]
        %v1089 = vld [vmem:[#allocation2 + $0x10] sm:$0xff]
        %v1090 = vld [vmem:[#allocation2 + $0x18] sm:$0xff]
        %v1091 = vld [vmem:[#allocation2 + $0x20] sm:$0xff]
        %v1092 = vld [vmem:[#allocation2 + $0x28] sm:$0xff]
        %v1093 = vld [vmem:[#allocation2 + $0x30] sm:$0xff]
        %v1094 = vld [vmem:[#allocation2 + $0x38] sm:$0xff]
        %v1095 = vld [vmem:[#allocation2 + $0x40] sm:$0xff]
        %v1096 = vld [vmem:[#allocation2 + $0x48] sm:$0xff]
        %v1097 = vld [vmem:[#allocation2 + $0x50] sm:$0xff]
        %v1098 = vld [vmem:[#allocation2 + $0x58] sm:$0xff]
        %v1099 = vld [vmem:[#allocation2 + $0x60] sm:$0xff]
        %v1100 = vld [vmem:[#allocation2 + $0x68] sm:$0xff]
        %v1101 = vld [vmem:[#allocation2 + $0x70] sm:$0xff]
        %v1102 = vld [vmem:[#allocation2 + $0x78] sm:$0xff]
        %v1103 = vld [vmem:[#allocation2 + $0x80] sm:$0xff]
        %v1104 = vld [vmem:[#allocation2 + $0x88] sm:$0xff]
        %v1105 = vld [vmem:[#allocation2 + $0x90] sm:$0xff]
        %v1106 = vld [vmem:[#allocation2 + $0x98] sm:$0xff]
        %v1107 = vld [vmem:[#allocation2 + $0xa0] sm:$0xff]
        %v1108 = vld [vmem:[#allocation2 + $0xa8] sm:$0xff]
        %v1109 = vld [vmem:[#allocation2 + $0xb0] sm:$0xff]
        %v1110 = vld [vmem:[#allocation2 + $0xb8] sm:$0xff]
        %v1111 = vld [vmem:[#allocation2 + $0xc0] sm:$0xff]
        %v1112 = vld [vmem:[#allocation2 + $0xc8] sm:$0xff]
        %v1113 = vld [vmem:[#allocation2 + $0xd0] sm:$0xff]
        %v1114 = vld [vmem:[#allocation2 + $0xd8] sm:$0xff]
        %v1115 = vld [vmem:[#allocation2 + $0xe0] sm:$0xff]
        %v1116 = vld [vmem:[#allocation2 + $0xe8] sm:$0xff]
        %v1117 = vld [vmem:[#allocation2 + $0xf0] sm:$0xff]
        %v1118 = vld [vmem:[#allocation2 + $0xf8] sm:$0xff]
        %v1119 = vld [vmem:[#allocation2 + $0x100] sm:$0xff]
        %v1120 = vld [vmem:[#allocation2 + $0x108] sm:$0xff]
        %v1121 = vld [vmem:[#allocation2 + $0x110] sm:$0xff]
        %v1122 = vld [vmem:[#allocation2 + $0x118] sm:$0xff]
        %v1123 = vld [vmem:[#allocation2 + $0x120] sm:$0xff]
        %v1124 = vld [vmem:[#allocation2 + $0x128] sm:$0xff]
        %v1125 = vld [vmem:[#allocation2 + $0x130] sm:$0xff]
        %v1126 = vld [vmem:[#allocation2 + $0x138] sm:$0xff]
        %v1127 = vld [vmem:[#allocation2 + $0x140] sm:$0xff]
        %v1128 = vld [vmem:[#allocation2 + $0x148] sm:$0xff]
        %v1129 = vld [vmem:[#allocation2 + $0x150] sm:$0xff]
        %v1130 = vld [vmem:[#allocation2 + $0x158] sm:$0xff]
        %v1131 = vld [vmem:[#allocation2 + $0x160] sm:$0xff]
        %v1132 = vld [vmem:[#allocation2 + $0x168] sm:$0xff]
        %v1133 = vld [vmem:[#allocation2 + $0x170] sm:$0xff]
        %v1134 = vld [vmem:[#allocation2 + $0x178] sm:$0xff]
        %v1135 = vld [vmem:[#allocation2 + $0x180] sm:$0xff]
        %v1136 = vld [vmem:[#allocation2 + $0x188] sm:$0xff]
        %v1137 = vld [vmem:[#allocation2 + $0x190] sm:$0xff]
        %v1138 = vld [vmem:[#allocation2 + $0x198] sm:$0xff]
        %v1139 = vld [vmem:[#allocation2 + $0x1a0] sm:$0xff]
        %v1140 = vld [vmem:[#allocation2 + $0x1a8] sm:$0xff]
        %v1141 = vld [vmem:[#allocation2 + $0x1b0] sm:$0xff]
        %v1142 = vld [vmem:[#allocation2 + $0x1b8] sm:$0xff]
        %v1143 = vld [vmem:[#allocation2 + $0x1c0] sm:$0xff]
        %v1144 = vld [vmem:[#allocation2 + $0x1c8] sm:$0xff]
        %v1145 = vld [vmem:[#allocation2 + $0x1d0] sm:$0xff]
        %v1146 = vld [vmem:[#allocation2 + $0x1d8] sm:$0xff]
        %v1147 = vld [vmem:[#allocation2 + $0x1e0] sm:$0xff]
        %v1148 = vld [vmem:[#allocation2 + $0x1e8] sm:$0xff]
        %v1149 = vld [vmem:[#allocation2 + $0x1f0] sm:$0xff]
        %v1150 = vld [vmem:[#allocation2 + $0x1f8] sm:$0xff]
        %v1151 = vpack.c.bf16 %v1087, %v1087
        %v1152 = vpack.c.bf16 %v1088, %v1088
        %v1153 = vpack.c.bf16 %v1089, %v1089
        %v1154 = vpack.c.bf16 %v1090, %v1090
        %v1155 = vpack.c.bf16 %v1091, %v1091
        %v1156 = vpack.c.bf16 %v1092, %v1092
        %v1157 = vpack.c.bf16 %v1093, %v1093
        %v1158 = vpack.c.bf16 %v1094, %v1094
        %v1159 = vpack.c.bf16 %v1095, %v1095
        %v1160 = vpack.c.bf16 %v1096, %v1096
        %v1161 = vpack.c.bf16 %v1097, %v1097
        %v1162 = vpack.c.bf16 %v1098, %v1098
        %v1163 = vpack.c.bf16 %v1099, %v1099
        %v1164 = vpack.c.bf16 %v1100, %v1100
        %v1165 = vpack.c.bf16 %v1101, %v1101
        %v1166 = vpack.c.bf16 %v1102, %v1102
        %v1167 = vpack.c.bf16 %v1103, %v1103
        %v1168 = vpack.c.bf16 %v1104, %v1104
        %v1169 = vpack.c.bf16 %v1105, %v1105
        %v1170 = vpack.c.bf16 %v1106, %v1106
        %v1171 = vpack.c.bf16 %v1107, %v1107
        %v1172 = vpack.c.bf16 %v1108, %v1108
        %v1173 = vpack.c.bf16 %v1109, %v1109
        %v1174 = vpack.c.bf16 %v1110, %v1110
        %v1175 = vpack.c.bf16 %v1111, %v1111
        %v1176 = vpack.c.bf16 %v1112, %v1112
        %v1177 = vpack.c.bf16 %v1113, %v1113
        %v1178 = vpack.c.bf16 %v1114, %v1114
        %v1179 = vpack.c.bf16 %v1115, %v1115
        %v1180 = vpack.c.bf16 %v1116, %v1116
        %v1181 = vpack.c.bf16 %v1117, %v1117
        %v1182 = vpack.c.bf16 %v1118, %v1118
        %v1183 = vpack.c.bf16 %v1119, %v1119
        %v1184 = vpack.c.bf16 %v1120, %v1120
        %v1185 = vpack.c.bf16 %v1121, %v1121
        %v1186 = vpack.c.bf16 %v1122, %v1122
        %v1187 = vpack.c.bf16 %v1123, %v1123
        %v1188 = vpack.c.bf16 %v1124, %v1124
        %v1189 = vpack.c.bf16 %v1125, %v1125
        %v1190 = vpack.c.bf16 %v1126, %v1126
        %v1191 = vpack.c.bf16 %v1127, %v1127
        %v1192 = vpack.c.bf16 %v1128, %v1128
        %v1193 = vpack.c.bf16 %v1129, %v1129
        %v1194 = vpack.c.bf16 %v1130, %v1130
        %v1195 = vpack.c.bf16 %v1131, %v1131
        %v1196 = vpack.c.bf16 %v1132, %v1132
        %v1197 = vpack.c.bf16 %v1133, %v1133
        %v1198 = vpack.c.bf16 %v1134, %v1134
        %v1199 = vpack.c.bf16 %v1135, %v1135
        %v1200 = vpack.c.bf16 %v1136, %v1136
        %v1201 = vpack.c.bf16 %v1137, %v1137
        %v1202 = vpack.c.bf16 %v1138, %v1138
        %v1203 = vpack.c.bf16 %v1139, %v1139
        %v1204 = vpack.c.bf16 %v1140, %v1140
        %v1205 = vpack.c.bf16 %v1141, %v1141
        %v1206 = vpack.c.bf16 %v1142, %v1142
        %v1207 = vpack.c.bf16 %v1143, %v1143
        %v1208 = vpack.c.bf16 %v1144, %v1144
        %v1209 = vpack.c.bf16 %v1145, %v1145
        %v1210 = vpack.c.bf16 %v1146, %v1146
        %v1211 = vpack.c.bf16 %v1147, %v1147
        %v1212 = vpack.c.bf16 %v1148, %v1148
        %v1213 = vpack.c.bf16 %v1149, %v1149
        %v1214 = vpack.c.bf16 %v1150, %v1150
        %1215 = vst [vmem:[%s311] sm:$0xf] %v1151
        %1216 = vst [vmem:[%s311 + $0x4] sm:$0xf] %v1152
        %1217 = vst [vmem:[%s311 + $0x8] sm:$0xf] %v1153
        %1218 = vst [vmem:[%s311 + $0xc] sm:$0xf] %v1154
        %1219 = vst [vmem:[%s311 + $0x10] sm:$0xf] %v1155
        %1220 = vst [vmem:[%s311 + $0x14] sm:$0xf] %v1156
        %1221 = vst [vmem:[%s311 + $0x18] sm:$0xf] %v1157
        %1222 = vst [vmem:[%s311 + $0x1c] sm:$0xf] %v1158
        %1223 = vst [vmem:[%s311 + $0x20] sm:$0xf] %v1159
        %1224 = vst [vmem:[%s311 + $0x24] sm:$0xf] %v1160
        %1225 = vst [vmem:[%s311 + $0x28] sm:$0xf] %v1161
        %1226 = vst [vmem:[%s311 + $0x2c] sm:$0xf] %v1162
        %1227 = vst [vmem:[%s311 + $0x30] sm:$0xf] %v1163
        %1228 = vst [vmem:[%s311 + $0x34] sm:$0xf] %v1164
        %1229 = vst [vmem:[%s311 + $0x38] sm:$0xf] %v1165
        %1230 = vst [vmem:[%s311 + $0x3c] sm:$0xf] %v1166
        %1231 = vst [vmem:[%s311 + $0x40] sm:$0xf] %v1167
        %1232 = vst [vmem:[%s311 + $0x44] sm:$0xf] %v1168
        %1233 = vst [vmem:[%s311 + $0x48] sm:$0xf] %v1169
        %1234 = vst [vmem:[%s311 + $0x4c] sm:$0xf] %v1170
        %1235 = vst [vmem:[%s311 + $0x50] sm:$0xf] %v1171
        %1236 = vst [vmem:[%s311 + $0x54] sm:$0xf] %v1172
        %1237 = vst [vmem:[%s311 + $0x58] sm:$0xf] %v1173
        %1238 = vst [vmem:[%s311 + $0x5c] sm:$0xf] %v1174
        %1239 = vst [vmem:[%s311 + $0x60] sm:$0xf] %v1175
        %1240 = vst [vmem:[%s311 + $0x64] sm:$0xf] %v1176
        %1241 = vst [vmem:[%s311 + $0x68] sm:$0xf] %v1177
        %1242 = vst [vmem:[%s311 + $0x6c] sm:$0xf] %v1178
        %1243 = vst [vmem:[%s311 + $0x70] sm:$0xf] %v1179
        %1244 = vst [vmem:[%s311 + $0x74] sm:$0xf] %v1180
        %1245 = vst [vmem:[%s311 + $0x78] sm:$0xf] %v1181
        %1246 = vst [vmem:[%s311 + $0x7c] sm:$0xf] %v1182
        %1247 = vst [vmem:[%s311 + $0x80] sm:$0xf] %v1183
        %1248 = vst [vmem:[%s311 + $0x84] sm:$0xf] %v1184
        %1249 = vst [vmem:[%s311 + $0x88] sm:$0xf] %v1185
        %1250 = vst [vmem:[%s311 + $0x8c] sm:$0xf] %v1186
        %1251 = vst [vmem:[%s311 + $0x90] sm:$0xf] %v1187
        %1252 = vst [vmem:[%s311 + $0x94] sm:$0xf] %v1188
        %1253 = vst [vmem:[%s311 + $0x98] sm:$0xf] %v1189
        %1254 = vst [vmem:[%s311 + $0x9c] sm:$0xf] %v1190
        %1255 = vst [vmem:[%s311 + $0xa0] sm:$0xf] %v1191
        %1256 = vst [vmem:[%s311 + $0xa4] sm:$0xf] %v1192
        %1257 = vst [vmem:[%s311 + $0xa8] sm:$0xf] %v1193
        %1258 = vst [vmem:[%s311 + $0xac] sm:$0xf] %v1194
        %1259 = vst [vmem:[%s311 + $0xb0] sm:$0xf] %v1195
        %1260 = vst [vmem:[%s311 + $0xb4] sm:$0xf] %v1196
        %1261 = vst [vmem:[%s311 + $0xb8] sm:$0xf] %v1197
        %1262 = vst [vmem:[%s311 + $0xbc] sm:$0xf] %v1198
        %1263 = vst [vmem:[%s311 + $0xc0] sm:$0xf] %v1199
        %1264 = vst [vmem:[%s311 + $0xc4] sm:$0xf] %v1200
        %1265 = vst [vmem:[%s311 + $0xc8] sm:$0xf] %v1201
        %1266 = vst [vmem:[%s311 + $0xcc] sm:$0xf] %v1202
        %1267 = vst [vmem:[%s311 + $0xd0] sm:$0xf] %v1203
        %1268 = vst [vmem:[%s311 + $0xd4] sm:$0xf] %v1204
        %1269 = vst [vmem:[%s311 + $0xd8] sm:$0xf] %v1205
        %1270 = vst [vmem:[%s311 + $0xdc] sm:$0xf] %v1206
        %1271 = vst [vmem:[%s311 + $0xe0] sm:$0xf] %v1207
        %1272 = vst [vmem:[%s311 + $0xe4] sm:$0xf] %v1208
        %1273 = vst [vmem:[%s311 + $0xe8] sm:$0xf] %v1209
        %1274 = vst [vmem:[%s311 + $0xec] sm:$0xf] %v1210
        %1275 = vst [vmem:[%s311 + $0xf0] sm:$0xf] %v1211
        %1276 = vst [vmem:[%s311 + $0xf4] sm:$0xf] %v1212
        %1277 = vst [vmem:[%s311 + $0xf8] sm:$0xf] %v1213
        %1278 = vst [vmem:[%s311 + $0xfc] sm:$0xf] %v1214
        %v1279 = vld [vmem:[%s320] sm:$0xff]
        %v1280 = vadd.f32 %v1087, %v1088
        %v1281 = vadd.f32 %v1280, %v1089
        %v1282 = vadd.f32 %v1281, %v1090
        %v1283 = vadd.f32 %v1282, %v1091
        %v1284 = vadd.f32 %v1283, %v1092
        %v1285 = vadd.f32 %v1284, %v1093
        %v1286 = vadd.f32 %v1285, %v1094
        %v1287 = vadd.f32 %v1286, %v1095
        %v1288 = vadd.f32 %v1287, %v1096
        %v1289 = vadd.f32 %v1288, %v1097
        %v1290 = vadd.f32 %v1289, %v1098
        %v1291 = vadd.f32 %v1290, %v1099
        %v1292 = vadd.f32 %v1291, %v1100
        %v1293 = vadd.f32 %v1292, %v1101
        %v1294 = vadd.f32 %v1293, %v1102
        %v1295 = vadd.f32 %v1294, %v1103
        %v1296 = vadd.f32 %v1295, %v1104
        %v1297 = vadd.f32 %v1296, %v1105
        %v1298 = vadd.f32 %v1297, %v1106
        %v1299 = vadd.f32 %v1298, %v1107
        %v1300 = vadd.f32 %v1299, %v1108
        %v1301 = vadd.f32 %v1300, %v1109
        %v1302 = vadd.f32 %v1301, %v1110
        %v1303 = vadd.f32 %v1302, %v1111
        %v1304 = vadd.f32 %v1303, %v1112
        %v1305 = vadd.f32 %v1304, %v1113
        %v1306 = vadd.f32 %v1305, %v1114
        %v1307 = vadd.f32 %v1306, %v1115
        %v1308 = vadd.f32 %v1307, %v1116
        %v1309 = vadd.f32 %v1308, %v1117
        %v1310 = vadd.f32 %v1309, %v1118
        %v1311 = vadd.f32 %v1310, %v1119
        %v1312 = vadd.f32 %v1311, %v1120
        %v1313 = vadd.f32 %v1312, %v1121
        %v1314 = vadd.f32 %v1313, %v1122
        %v1315 = vadd.f32 %v1314, %v1123
        %v1316 = vadd.f32 %v1315, %v1124
        %v1317 = vadd.f32 %v1316, %v1125
        %v1318 = vadd.f32 %v1317, %v1126
        %v1319 = vadd.f32 %v1318, %v1127
        %v1320 = vadd.f32 %v1319, %v1128
        %v1321 = vadd.f32 %v1320, %v1129
        %v1322 = vadd.f32 %v1321, %v1130
        %v1323 = vadd.f32 %v1322, %v1131
        %v1324 = vadd.f32 %v1323, %v1132
        %v1325 = vadd.f32 %v1324, %v1133
        %v1326 = vadd.f32 %v1325, %v1134
        %v1327 = vadd.f32 %v1326, %v1135
        %v1328 = vadd.f32 %v1327, %v1136
        %v1329 = vadd.f32 %v1328, %v1137
        %v1330 = vadd.f32 %v1329, %v1138
        %v1331 = vadd.f32 %v1330, %v1139
        %v1332 = vadd.f32 %v1331, %v1140
        %v1333 = vadd.f32 %v1332, %v1141
        %v1334 = vadd.f32 %v1333, %v1142
        %v1335 = vadd.f32 %v1334, %v1143
        %v1336 = vadd.f32 %v1335, %v1144
        %v1337 = vadd.f32 %v1336, %v1145
        %v1338 = vadd.f32 %v1337, %v1146
        %v1339 = vadd.f32 %v1338, %v1147
        %v1340 = vadd.f32 %v1339, %v1148
        %v1341 = vadd.f32 %v1340, %v1149
        %v1342 = vadd.f32 %v1341, %v1150
        %v1343 = vrot.slane %v1342, 4
        %v1344 = vadd.f32 %v1342, %v1343
        %v1345 = vrot.slane %v1344, 2
        %v1346 = vadd.f32 %v1344, %v1345
        %v1347 = vrot.slane %v1346, 1
        %v1348 = vadd.f32 %v1346, %v1347
        %v1349 = vadd.f32 %v1279, %v1348
        %1350 = vst [vmem:[%s320] sm:$0xff] %v1349
        %v1351 = vld [vmem:[%s327] sm:$0xff]
        %v1352 = vmul.f32 %v1087, %v1087
        %v1353 = vmul.f32 %v1088, %v1088
        %v1354 = vmul.f32 %v1089, %v1089
        %v1355 = vmul.f32 %v1090, %v1090
        %v1356 = vmul.f32 %v1091, %v1091
        %v1357 = vmul.f32 %v1092, %v1092
        %v1358 = vmul.f32 %v1093, %v1093
        %v1359 = vmul.f32 %v1094, %v1094
        %v1360 = vmul.f32 %v1095, %v1095
        %v1361 = vmul.f32 %v1096, %v1096
        %v1362 = vmul.f32 %v1097, %v1097
        %v1363 = vmul.f32 %v1098, %v1098
        %v1364 = vmul.f32 %v1099, %v1099
        %v1365 = vmul.f32 %v1100, %v1100
        %v1366 = vmul.f32 %v1101, %v1101
        %v1367 = vmul.f32 %v1102, %v1102
        %v1368 = vmul.f32 %v1103, %v1103
        %v1369 = vmul.f32 %v1104, %v1104
        %v1370 = vmul.f32 %v1105, %v1105
        %v1371 = vmul.f32 %v1106, %v1106
        %v1372 = vmul.f32 %v1107, %v1107
        %v1373 = vmul.f32 %v1108, %v1108
        %v1374 = vmul.f32 %v1109, %v1109
        %v1375 = vmul.f32 %v1110, %v1110
        %v1376 = vmul.f32 %v1111, %v1111
        %v1377 = vmul.f32 %v1112, %v1112
        %v1378 = vmul.f32 %v1113, %v1113
        %v1379 = vmul.f32 %v1114, %v1114
        %v1380 = vmul.f32 %v1115, %v1115
        %v1381 = vmul.f32 %v1116, %v1116
        %v1382 = vmul.f32 %v1117, %v1117
        %v1383 = vmul.f32 %v1118, %v1118
        %v1384 = vmul.f32 %v1119, %v1119
        %v1385 = vmul.f32 %v1120, %v1120
        %v1386 = vmul.f32 %v1121, %v1121
        %v1387 = vmul.f32 %v1122, %v1122
        %v1388 = vmul.f32 %v1123, %v1123
        %v1389 = vmul.f32 %v1124, %v1124
        %v1390 = vmul.f32 %v1125, %v1125
        %v1391 = vmul.f32 %v1126, %v1126
        %v1392 = vmul.f32 %v1127, %v1127
        %v1393 = vmul.f32 %v1128, %v1128
        %v1394 = vmul.f32 %v1129, %v1129
        %v1395 = vmul.f32 %v1130, %v1130
        %v1396 = vmul.f32 %v1131, %v1131
        %v1397 = vmul.f32 %v1132, %v1132
        %v1398 = vmul.f32 %v1133, %v1133
        %v1399 = vmul.f32 %v1134, %v1134
        %v1400 = vmul.f32 %v1135, %v1135
        %v1401 = vmul.f32 %v1136, %v1136
        %v1402 = vmul.f32 %v1137, %v1137
        %v1403 = vmul.f32 %v1138, %v1138
        %v1404 = vmul.f32 %v1139, %v1139
        %v1405 = vmul.f32 %v1140, %v1140
        %v1406 = vmul.f32 %v1141, %v1141
        %v1407 = vmul.f32 %v1142, %v1142
        %v1408 = vmul.f32 %v1143, %v1143
        %v1409 = vmul.f32 %v1144, %v1144
        %v1410 = vmul.f32 %v1145, %v1145
        %v1411 = vmul.f32 %v1146, %v1146
        %v1412 = vmul.f32 %v1147, %v1147
        %v1413 = vmul.f32 %v1148, %v1148
        %v1414 = vmul.f32 %v1149, %v1149
        %v1415 = vmul.f32 %v1150, %v1150
        %v1416 = vadd.f32 %v1352, %v1353
        %v1417 = vadd.f32 %v1416, %v1354
        %v1418 = vadd.f32 %v1417, %v1355
        %v1419 = vadd.f32 %v1418, %v1356
        %v1420 = vadd.f32 %v1419, %v1357
        %v1421 = vadd.f32 %v1420, %v1358
        %v1422 = vadd.f32 %v1421, %v1359
        %v1423 = vadd.f32 %v1422, %v1360
        %v1424 = vadd.f32 %v1423, %v1361
        %v1425 = vadd.f32 %v1424, %v1362
        %v1426 = vadd.f32 %v1425, %v1363
        %v1427 = vadd.f32 %v1426, %v1364
        %v1428 = vadd.f32 %v1427, %v1365
        %v1429 = vadd.f32 %v1428, %v1366
        %v1430 = vadd.f32 %v1429, %v1367
        %v1431 = vadd.f32 %v1430, %v1368
        %v1432 = vadd.f32 %v1431, %v1369
        %v1433 = vadd.f32 %v1432, %v1370
        %v1434 = vadd.f32 %v1433, %v1371
        %v1435 = vadd.f32 %v1434, %v1372
        %v1436 = vadd.f32 %v1435, %v1373
        %v1437 = vadd.f32 %v1436, %v1374
        %v1438 = vadd.f32 %v1437, %v1375
        %v1439 = vadd.f32 %v1438, %v1376
        %v1440 = vadd.f32 %v1439, %v1377
        %v1441 = vadd.f32 %v1440, %v1378
        %v1442 = vadd.f32 %v1441, %v1379
        %v1443 = vadd.f32 %v1442, %v1380
        %v1444 = vadd.f32 %v1443, %v1381
        %v1445 = vadd.f32 %v1444, %v1382
        %v1446 = vadd.f32 %v1445, %v1383
        %v1447 = vadd.f32 %v1446, %v1384
        %v1448 = vadd.f32 %v1447, %v1385
        %v1449 = vadd.f32 %v1448, %v1386
        %v1450 = vadd.f32 %v1449, %v1387
        %v1451 = vadd.f32 %v1450, %v1388
        %v1452 = vadd.f32 %v1451, %v1389
        %v1453 = vadd.f32 %v1452, %v1390
        %v1454 = vadd.f32 %v1453, %v1391
        %v1455 = vadd.f32 %v1454, %v1392
        %v1456 = vadd.f32 %v1455, %v1393
        %v1457 = vadd.f32 %v1456, %v1394
        %v1458 = vadd.f32 %v1457, %v1395
        %v1459 = vadd.f32 %v1458, %v1396
        %v1460 = vadd.f32 %v1459, %v1397
        %v1461 = vadd.f32 %v1460, %v1398
        %v1462 = vadd.f32 %v1461, %v1399
        %v1463 = vadd.f32 %v1462, %v1400
        %v1464 = vadd.f32 %v1463, %v1401
        %v1465 = vadd.f32 %v1464, %v1402
        %v1466 = vadd.f32 %v1465, %v1403
        %v1467 = vadd.f32 %v1466, %v1404
        %v1468 = vadd.f32 %v1467, %v1405
        %v1469 = vadd.f32 %v1468, %v1406
        %v1470 = vadd.f32 %v1469, %v1407
        %v1471 = vadd.f32 %v1470, %v1408
        %v1472 = vadd.f32 %v1471, %v1409
        %v1473 = vadd.f32 %v1472, %v1410
        %v1474 = vadd.f32 %v1473, %v1411
        %v1475 = vadd.f32 %v1474, %v1412
        %v1476 = vadd.f32 %v1475, %v1413
        %v1477 = vadd.f32 %v1476, %v1414
        %v1478 = vadd.f32 %v1477, %v1415
        %v1479 = vrot.slane %v1478, 4
        %v1480 = vadd.f32 %v1478, %v1479
        %v1481 = vrot.slane %v1480, 2
        %v1482 = vadd.f32 %v1480, %v1481
        %v1483 = vrot.slane %v1482, 1
        %v1484 = vadd.f32 %v1482, %v1483
        %v1485 = vadd.f32 %v1351, %v1484
        %1486 = vst [vmem:[%s327] sm:$0xff] %v1485
      $region40: #{encoder_forward.5} parent=27 // pred_fallthru
        _
      %s1487 = sadd.s32 %s22, %s24
      %s1488 = smul.u32 64, %s1487
      %p1489 = scmp.lt.s32.totalorder %s1488, 127
      %s1490 = scalar_select %p1489, %s1488, 127
      %p1491 = scmp.lt.s32.totalorder %s23, 0
      %s1492 = scalar_select %p1491, %s23, 0
      %s1493 = sadd.s32 %s1492, %s1490
      %s1494 = smul.addr %s1493, 4
      %s1495 = scalar_lea.vmem %s2, %s1494
      %p1496 = scmp.lt.s32.totalorder %s22, 1
      %s1497 = scalar_select %p1496, %s22, 1
      %p1498 = scmp.lt.s32.totalorder %s23, 0
      %s1499 = scalar_select %p1498, %s23, 0
      %s1500 = sadd.s32 %s1499, %s1497
      %s1501 = smul.addr %s1500, 8
      %s1502 = scalar_lea.vmem %s3, %s1501
      %p1503 = scmp.lt.s32.totalorder %s22, 1
      %s1504 = scalar_select %p1503, %s22, 1
      %p1505 = scmp.lt.s32.totalorder %s23, 0
      %s1506 = scalar_select %p1505, %s23, 0
      %s1507 = sadd.s32 %s1506, %s1504
      %s1508 = smul.addr %s1507, 8
      %s1509 = scalar_lea.vmem %s4, %s1508
      // Predicated region
      $region41: #{encoder_forward.5} parent=27 // pred_check
        %p1510 = pneg %p122
      $region42: #{encoder_forward.5} parent=27 // pred_check_branch
        %1512 = sbr.rel (%p1510) target = $region44
      $region43: #{encoder_forward.5} parent=27 // pred_region
        %s1513 = sadd.s32 %s22, %s24
        %s1514 = smul.u32 64, %s1513
      $region44: #{encoder_forward.5} parent=27 // pred_fallthru
        _
      // Predicated region
      $region45: #{encoder_forward.5} parent=27 // pred_check
        %p1515 = pneg %p150
      $region46: #{encoder_forward.5} parent=27 // pred_check_branch
        %1517 = sbr.rel (%p1515) target = $region48
      $region47: #{encoder_forward.5} parent=27 // pred_region
        _
      $region48: #{encoder_forward.5} parent=27 // pred_fallthru
        _
      // Predicated region
      $region49: #{encoder_forward.5} parent=27 // pred_check
        %p1518 = pneg %p178
      $region50: #{encoder_forward.5} parent=27 // pred_check_branch
        %1520 = sbr.rel (%p1518) target = $region52
      $region51: #{encoder_forward.5} parent=27 // pred_region
        _
      $region52: #{encoder_forward.5} parent=27 // pred_fallthru
        _
    $region28: #{encoder_forward.5} parent=5 // pred_fallthru
      _
    %p1521 = scmp.le.s32.totalorder 2, %s11
    // Predicated region
    $region53: #{encoder_forward.5} parent=5 // pred_check
      %p1522 = pneg %p1521
    $region54: #{encoder_forward.5} parent=5 // pred_check_branch
      %1524 = sbr.rel (%p1522) target = $region56
    $region55: #{encoder_forward.5} parent=5 // pred_region
      %s1525 = ssub.s32 %s11, 2
      // Predicated region
      $region57: #{encoder_forward.5} parent=55 // pred_check
        %p1526 = pneg %p128
      $region58: #{encoder_forward.5} parent=55 // pred_check_branch
        %1528 = sbr.rel (%p1526) target = $region60
      $region59: #{encoder_forward.5} parent=55 // pred_region
        %s1529 = sadd.s32 %s26, %s28
        %s1530 = smul.u32 64, %s1529
        %p1531 = scmp.lt.s32.totalorder %s1530, 127
        %s1532 = scalar_select %p1531, %s1530, 127
        %p1533 = scmp.lt.s32.totalorder %s27, 0
        %s1534 = scalar_select %p1533, %s27, 0
        %s1535 = sadd.s32 %s1534, %s1532
        %s1536 = smul.addr %s1535, 4
        %s1537 = scalar_lea.vmem %s2, %s1536
      $region60: #{encoder_forward.5} parent=55 // pred_fallthru
        _
      // Predicated region
      $region61: #{encoder_forward.5} parent=55 // pred_check
        %p1538 = pneg %p156
      $region62: #{encoder_forward.5} parent=55 // pred_check_branch
        %1540 = sbr.rel (%p1538) target = $region64
      $region63: #{encoder_forward.5} parent=55 // pred_region
        %p1541 = scmp.lt.s32.totalorder %s26, 1
        %s1542 = scalar_select %p1541, %s26, 1
        %p1543 = scmp.lt.s32.totalorder %s27, 0
        %s1544 = scalar_select %p1543, %s27, 0
        %s1545 = sadd.s32 %s1544, %s1542
        %s1546 = smul.addr %s1545, 8
        %s1547 = scalar_lea.vmem %s3, %s1546
      $region64: #{encoder_forward.5} parent=55 // pred_fallthru
        _
      // Predicated region
      $region65: #{encoder_forward.5} parent=55 // pred_check
        %p1548 = pneg %p184
      $region66: #{encoder_forward.5} parent=55 // pred_check_branch
        %1550 = sbr.rel (%p1548) target = $region68
      $region67: #{encoder_forward.5} parent=55 // pred_region
        %p1551 = scmp.lt.s32.totalorder %s26, 1
        %s1552 = scalar_select %p1551, %s26, 1
        %p1553 = scmp.lt.s32.totalorder %s27, 0
        %s1554 = scalar_select %p1553, %s27, 0
        %s1555 = sadd.s32 %s1554, %s1552
        %s1556 = smul.addr %s1555, 8
        %s1557 = scalar_lea.vmem %s4, %s1556
      $region68: #{encoder_forward.5} parent=55 // pred_fallthru
        _
    $region56: #{encoder_forward.5} parent=5 // pred_fallthru
      _
  $region6: #{encoder_forward.5} parent=0 // loop_footer
    %s15 = sadd.s32 1, %s11
  $region7: #{encoder_forward.5} parent=0 // loop_footer_branch
    %10 = sbr.rel target = $region3
  $region8: #{encoder_forward.5} parent=0 // loop_exit
    _

// kernel: encoder_forward.6
$region0: #{encoder_forward.6}
  #allocation0 [shape = 'u32[]', space=smem, size = 0x4, offset = 0x4, fixed_abs, tag = 'smem constant byte address 0x4 - core index']
  #allocation1 [shape = 'u32[72,128]{1,0:T(1,128)}', space=vmem, size = 0x9000, scoped, tag = 'internal scratch']
  #allocation2 [shape = 'f32[200,128]{1,0:T(8,128)}', space=vmem, size = 0x19000, scoped, tag = 'scratch operand']
  %s0 = inlined_call_operand.vmem [shape: bf16[200,256], index: 0, kind: input, shape index: {}]
  %s1 = inlined_call_operand.vmem [shape: bf16[256,128], index: 1, kind: input, shape index: {}]
  %s2 = inlined_call_operand.vmem [shape: bf16[200,128], index: 2, kind: output, shape index: {0}]
  %s3 = inlined_call_operand.vmem [shape: f32[1,8,128], index: 3, kind: output, shape index: {1}]
  %s4 = inlined_call_operand.vmem [shape: f32[1,8,128], index: 4, kind: output, shape index: {2}]
  %5 = xla_tuple %s2, %s3, %s4
  %s6 = sld [smem:[#allocation0]]
  $region46: #{encoder_forward.6} parent=0
    _
  %s8 = ssub.s32 1, %s6
  %s9 = scalar_select 0, %s8, %s6
  // Predicated region
  $region2: #{encoder_forward.6} parent=0 // pred_check
    _
  $region3: #{encoder_forward.6} parent=0 // pred_check_branch
    %11 = sbr.rel (0) target = $region5
  $region4: #{encoder_forward.6} parent=0 // pred_region
    %s12 = sadd.s32 0, 0
    %s13 = smul.u32 25, %s12
    %p14 = scmp.lt.s32.totalorder %s13, 24
    %s15 = scalar_select %p14, %s13, 24
    %s16 = smul.addr %s15, 2
    %s17 = smul.addr %s16, 4
    %s18 = scalar_lea.vmem %s0, %s17
    %s19 = sadd.s32 0, 0
    %s20 = smul.u32 25, %s19
  $region5: #{encoder_forward.6} parent=0 // pred_fallthru
    _
  // Predicated region
  $region6: #{encoder_forward.6} parent=0 // pred_check
    _
  $region7: #{encoder_forward.6} parent=0 // pred_check_branch
    %22 = sbr.rel (0) target = $region9
  $region8: #{encoder_forward.6} parent=0 // pred_region
    _
  $region9: #{encoder_forward.6} parent=0 // pred_fallthru
    _
  %s23 = sadd.s32 0, 0
  %s24 = smul.u32 25, %s23
  %p25 = scmp.lt.s32.totalorder %s24, 24
  %s26 = scalar_select %p25, %s24, 24
  %s27 = smul.addr %s26, 2
  %s28 = smul.addr %s27, 4
  %s29 = scalar_lea.vmem %s0, %s28
  %s30 = sadd.s32 0, 0
  %s31 = smul.u32 25, %s30
  %p32 = scmp.lt.s32.totalorder %s31, 24
  %s33 = scalar_select %p32, %s31, 24
  %s34 = smul.addr %s33, 4
  %s35 = scalar_lea.vmem %s2, %s34
  %s36 = sadd.s32 0, 0
  %s37 = smul.u32 25, %s36
  %p38 = scmp.lt.s32.totalorder %s37, 24
  %s39 = scalar_select %p38, %s37, 24
  %s40 = smul.addr %s39, 2
  %s41 = smul.addr %s40, 4
  %s42 = scalar_lea.vmem %s0, %s41
  %s43 = sadd.s32 0, 0
  %s44 = smul.u32 25, %s43
  %s45 = sadd.s32 0, 0
  %s46 = smul.u32 25, %s45
  %p47 = scmp.lt.s32.totalorder %s46, 24
  %s48 = scalar_select %p47, %s46, 24
  %s49 = smul.addr %s48, 4
  %s50 = scalar_lea.vmem %s2, %s49
  %s51 = sadd.s32 0, 0
  %s52 = smul.u32 25, %s51
  %p53 = scmp.eq.s32.totalorder 0, 0
  // Predicated region
  $region10: #{encoder_forward.6} parent=0 // pred_check
    %p54 = pneg %p53
  $region11: #{encoder_forward.6} parent=0 // pred_check_branch
    %56 = sbr.rel (%p54) target = $region13
  $region12: #{encoder_forward.6} parent=0 // pred_region
    %57 = vst [vmem:[#allocation2] sm:$0xff] 0.0
    %58 = vst [vmem:[#allocation2 + $0x8] sm:$0xff] 0.0
    %59 = vst [vmem:[#allocation2 + $0x10] sm:$0xff] 0.0
    %60 = vst [vmem:[#allocation2 + $0x18] sm:$0xff] 0.0
    %61 = vst [vmem:[#allocation2 + $0x20] sm:$0xff] 0.0
    %62 = vst [vmem:[#allocation2 + $0x28] sm:$0xff] 0.0
    %63 = vst [vmem:[#allocation2 + $0x30] sm:$0xff] 0.0
    %64 = vst [vmem:[#allocation2 + $0x38] sm:$0xff] 0.0
    %65 = vst [vmem:[#allocation2 + $0x40] sm:$0xff] 0.0
    %66 = vst [vmem:[#allocation2 + $0x48] sm:$0xff] 0.0
    %67 = vst [vmem:[#allocation2 + $0x50] sm:$0xff] 0.0
    %68 = vst [vmem:[#allocation2 + $0x58] sm:$0xff] 0.0
    %69 = vst [vmem:[#allocation2 + $0x60] sm:$0xff] 0.0
    %70 = vst [vmem:[#allocation2 + $0x68] sm:$0xff] 0.0
    %71 = vst [vmem:[#allocation2 + $0x70] sm:$0xff] 0.0
    %72 = vst [vmem:[#allocation2 + $0x78] sm:$0xff] 0.0
    %73 = vst [vmem:[#allocation2 + $0x80] sm:$0xff] 0.0
    %74 = vst [vmem:[#allocation2 + $0x88] sm:$0xff] 0.0
    %75 = vst [vmem:[#allocation2 + $0x90] sm:$0xff] 0.0
    %76 = vst [vmem:[#allocation2 + $0x98] sm:$0xff] 0.0
    %77 = vst [vmem:[#allocation2 + $0xa0] sm:$0xff] 0.0
    %78 = vst [vmem:[#allocation2 + $0xa8] sm:$0xff] 0.0
    %79 = vst [vmem:[#allocation2 + $0xb0] sm:$0xff] 0.0
    %80 = vst [vmem:[#allocation2 + $0xb8] sm:$0xff] 0.0
    %81 = vst [vmem:[#allocation2 + $0xc0] sm:$0xff] 0.0
  $region13: #{encoder_forward.6} parent=0 // pred_fallthru
    _
  %v82 = vld [vmem:[#allocation2] sm:$0xff]
  %v83 = vld [vmem:[#allocation2 + $0x8] sm:$0xff]
  %v84 = vld [vmem:[#allocation2 + $0x10] sm:$0xff]
  %v85 = vld [vmem:[#allocation2 + $0x18] sm:$0xff]
  %v86 = vld [vmem:[#allocation2 + $0x20] sm:$0xff]
  %v87 = vld [vmem:[#allocation2 + $0x28] sm:$0xff]
  %v88 = vld [vmem:[#allocation2 + $0x30] sm:$0xff]
  %v89 = vld [vmem:[#allocation2 + $0x38] sm:$0xff]
  %v90 = vld [vmem:[#allocation2 + $0x40] sm:$0xff]
  %v91 = vld [vmem:[#allocation2 + $0x48] sm:$0xff]
  %v92 = vld [vmem:[#allocation2 + $0x50] sm:$0xff]
  %v93 = vld [vmem:[#allocation2 + $0x58] sm:$0xff]
  %v94 = vld [vmem:[#allocation2 + $0x60] sm:$0xff]
  %v95 = vld [vmem:[#allocation2 + $0x68] sm:$0xff]
  %v96 = vld [vmem:[#allocation2 + $0x70] sm:$0xff]
  %v97 = vld [vmem:[#allocation2 + $0x78] sm:$0xff]
  %v98 = vld [vmem:[#allocation2 + $0x80] sm:$0xff]
  %v99 = vld [vmem:[#allocation2 + $0x88] sm:$0xff]
  %v100 = vld [vmem:[#allocation2 + $0x90] sm:$0xff]
  %v101 = vld [vmem:[#allocation2 + $0x98] sm:$0xff]
  %v102 = vld [vmem:[#allocation2 + $0xa0] sm:$0xff]
  %v103 = vld [vmem:[#allocation2 + $0xa8] sm:$0xff]
  %v104 = vld [vmem:[#allocation2 + $0xb0] sm:$0xff]
  %v105 = vld [vmem:[#allocation2 + $0xb8] sm:$0xff]
  %v106 = vld [vmem:[#allocation2 + $0xc0] sm:$0xff]
  %v107 = vld [vmem:[%s42] sm:$0xff]
  %v108 = vld [vmem:[%s42 + $0x8] sm:$0xff]
  %v109 = vld [vmem:[%s42 + $0x10] sm:$0xff]
  %v110 = vld [vmem:[%s42 + $0x18] sm:$0xff]
  %v111 = vld [vmem:[%s42 + $0x20] sm:$0xff]
  %v112 = vld [vmem:[%s42 + $0x28] sm:$0xff]
  %v113 = vld [vmem:[%s42 + $0x30] sm:$0xff]
  %v114 = vld [vmem:[%s42 + $0x38] sm:$0xff]
  %v115 = vld [vmem:[%s42 + $0x40] sm:$0xff]
  %v116 = vld [vmem:[%s42 + $0x48] sm:$0xff]
  %v117 = vld [vmem:[%s42 + $0x50] sm:$0xff]
  %v118 = vld [vmem:[%s42 + $0x58] sm:$0xff]
  %v119 = vld [vmem:[%s42 + $0x60] sm:$0xff]
  %v120 = vld [vmem:[%s42 + $0x68] sm:$0xff]
  %v121 = vld [vmem:[%s42 + $0x70] sm:$0xff]
  %v122 = vld [vmem:[%s42 + $0x78] sm:$0xff]
  %v123 = vld [vmem:[%s42 + $0x80] sm:$0xff]
  %v124 = vld [vmem:[%s42 + $0x88] sm:$0xff]
  %v125 = vld [vmem:[%s42 + $0x90] sm:$0xff]
  %v126 = vld [vmem:[%s42 + $0x98] sm:$0xff]
  %v127 = vld [vmem:[%s42 + $0xa0] sm:$0xff]
  %v128 = vld [vmem:[%s42 + $0xa8] sm:$0xff]
  %v129 = vld [vmem:[%s42 + $0xb0] sm:$0xff]
  %v130 = vld [vmem:[%s42 + $0xb8] sm:$0xff]
  %v131 = vld [vmem:[%s42 + $0xc0] sm:$0xff]
  %v132 = vld [vmem:[%s1] sm:$0xf]
  %v133 = vld [vmem:[%s1 + $0x4] sm:$0xf]
  %v134 = vld [vmem:[%s1 + $0x8] sm:$0xf]
  %v135 = vld [vmem:[%s1 + $0xc] sm:$0xf]
  %v136 = vld [vmem:[%s1 + $0x10] sm:$0xf]
  %v137 = vld [vmem:[%s1 + $0x14] sm:$0xf]
  %v138 = vld [vmem:[%s1 + $0x18] sm:$0xf]
  %v139 = vld [vmem:[%s1 + $0x1c] sm:$0xf]
  %v140 = vld [vmem:[%s1 + $0x20] sm:$0xf]
  %v141 = vld [vmem:[%s1 + $0x24] sm:$0xf]
  %v142 = vld [vmem:[%s1 + $0x28] sm:$0xf]
  %v143 = vld [vmem:[%s1 + $0x2c] sm:$0xf]
  %v144 = vld [vmem:[%s1 + $0x30] sm:$0xf]
  %v145 = vld [vmem:[%s1 + $0x34] sm:$0xf]
  %v146 = vld [vmem:[%s1 + $0x38] sm:$0xf]
  %v147 = vld [vmem:[%s1 + $0x3c] sm:$0xf]
  %v148 = vld [vmem:[%s1 + $0x40] sm:$0xf]
  %v149 = vld [vmem:[%s1 + $0x44] sm:$0xf]
  %v150 = vld [vmem:[%s1 + $0x48] sm:$0xf]
  %v151 = vld [vmem:[%s1 + $0x4c] sm:$0xf]
  %v152 = vld [vmem:[%s1 + $0x50] sm:$0xf]
  %v153 = vld [vmem:[%s1 + $0x54] sm:$0xf]
  %v154 = vld [vmem:[%s1 + $0x58] sm:$0xf]
  %v155 = vld [vmem:[%s1 + $0x5c] sm:$0xf]
  %v156 = vld [vmem:[%s1 + $0x60] sm:$0xf]
  %v157 = vld [vmem:[%s1 + $0x64] sm:$0xf]
  %v158 = vld [vmem:[%s1 + $0x68] sm:$0xf]
  %v159 = vld [vmem:[%s1 + $0x6c] sm:$0xf]
  %v160 = vld [vmem:[%s1 + $0x70] sm:$0xf]
  %v161 = vld [vmem:[%s1 + $0x74] sm:$0xf]
  %v162 = vld [vmem:[%s1 + $0x78] sm:$0xf]
  %v163 = vld [vmem:[%s1 + $0x7c] sm:$0xf]
  %v189 = vunpack.c.l.b16 %v107
  %v190 = vunpack.c.h.b16 %v107
  %v191 = vunpack.c.l.b16 %v108
  %v192 = vunpack.c.h.b16 %v108
  %v193 = vunpack.c.l.b16 %v109
  %v194 = vunpack.c.h.b16 %v109
  %v195 = vunpack.c.l.b16 %v110
  %v196 = vunpack.c.h.b16 %v110
  %v197 = vunpack.c.l.b16 %v111
  %v198 = vunpack.c.h.b16 %v111
  %v199 = vunpack.c.l.b16 %v112
  %v200 = vunpack.c.h.b16 %v112
  %v201 = vunpack.c.l.b16 %v113
  %v202 = vunpack.c.h.b16 %v113
  %v203 = vunpack.c.l.b16 %v114
  %v204 = vunpack.c.h.b16 %v114
  %v205 = vunpack.c.l.b16 %v115
  %v206 = vunpack.c.h.b16 %v115
  %v207 = vunpack.c.l.b16 %v116
  %v208 = vunpack.c.h.b16 %v116
  %v209 = vunpack.c.l.b16 %v117
  %v210 = vunpack.c.h.b16 %v117
  %v211 = vunpack.c.l.b16 %v118
  %v212 = vunpack.c.h.b16 %v118
  %v213 = vunpack.c.l.b16 %v119
  %v214 = vunpack.c.h.b16 %v119
  %v215 = vunpack.c.l.b16 %v120
  %v216 = vunpack.c.h.b16 %v120
  %v217 = vunpack.c.l.b16 %v121
  %v218 = vunpack.c.h.b16 %v121
  %v219 = vunpack.c.l.b16 %v122
  %v220 = vunpack.c.h.b16 %v122
  %v221 = vunpack.c.l.b16 %v123
  %v222 = vunpack.c.h.b16 %v123
  %v223 = vunpack.c.l.b16 %v124
  %v224 = vunpack.c.h.b16 %v124
  %v225 = vunpack.c.l.b16 %v125
  %v226 = vunpack.c.h.b16 %v125
  %v227 = vunpack.c.l.b16 %v126
  %v228 = vunpack.c.h.b16 %v126
  %v229 = vunpack.c.l.b16 %v127
  %v230 = vunpack.c.h.b16 %v127
  %v231 = vunpack.c.l.b16 %v128
  %v232 = vunpack.c.h.b16 %v128
  %v233 = vunpack.c.l.b16 %v129
  %v234 = vunpack.c.h.b16 %v129
  %v235 = vunpack.c.l.b16 %v130
  %v236 = vunpack.c.h.b16 %v130
  %v237 = vunpack.c.l.b16 %v131
  %v238 = vunpack.c.h.b16 %v131
  %v239 = vpack.c.b16 %v191, %v189
  %v240 = vpack.c.b16 %v192, %v190
  %v241 = vpack.c.b16 %v195, %v193
  %v242 = vpack.c.b16 %v196, %v194
  %v243 = vpack.c.b16 %v199, %v197
  %v244 = vpack.c.b16 %v200, %v198
  %v245 = vpack.c.b16 %v203, %v201
  %v246 = vpack.c.b16 %v204, %v202
  %v247 = vpack.c.b16 %v207, %v205
  %v248 = vpack.c.b16 %v208, %v206
  %v249 = vpack.c.b16 %v211, %v209
  %v250 = vpack.c.b16 %v212, %v210
  %v251 = vpack.c.b16 %v215, %v213
  %v252 = vpack.c.b16 %v216, %v214
  %v253 = vpack.c.b16 %v219, %v217
  %v254 = vpack.c.b16 %v220, %v218
  %v255 = vpack.c.b16 %v223, %v221
  %v256 = vpack.c.b16 %v224, %v222
  %v257 = vpack.c.b16 %v227, %v225
  %v258 = vpack.c.b16 %v228, %v226
  %v259 = vpack.c.b16 %v231, %v229
  %v260 = vpack.c.b16 %v232, %v230
  %v261 = vpack.c.b16 %v235, %v233
  %v262 = vpack.c.b16 %v236, %v234
  %v263 = vpack.c.b16 %v237, %v237
  %v264 = vpack.c.b16 %v238, %v238
  %v323 = vunpack.c.l.b16 %v132
  %v324 = vunpack.c.l.b16 %v133
  %v325 = vunpack.c.l.b16 %v134
  %v326 = vunpack.c.l.b16 %v135
  %v327 = vunpack.c.l.b16 %v136
  %v328 = vunpack.c.l.b16 %v137
  %v329 = vunpack.c.l.b16 %v138
  %v330 = vunpack.c.l.b16 %v139
  %v331 = vunpack.c.l.b16 %v140
  %v332 = vunpack.c.l.b16 %v141
  %v333 = vunpack.c.l.b16 %v142
  %v334 = vunpack.c.l.b16 %v143
  %v335 = vunpack.c.l.b16 %v144
  %v336 = vunpack.c.l.b16 %v145
  %v337 = vunpack.c.l.b16 %v146
  %v338 = vunpack.c.l.b16 %v147
  %v339 = vunpack.c.l.b16 %v148
  %v340 = vunpack.c.l.b16 %v149
  %v341 = vunpack.c.l.b16 %v150
  %v342 = vunpack.c.l.b16 %v151
  %v343 = vunpack.c.l.b16 %v152
  %v344 = vunpack.c.l.b16 %v153
  %v345 = vunpack.c.l.b16 %v154
  %v346 = vunpack.c.l.b16 %v155
  %v347 = vunpack.c.l.b16 %v156
  %v348 = vunpack.c.l.b16 %v157
  %v349 = vunpack.c.l.b16 %v158
  %v350 = vunpack.c.l.b16 %v159
  %v351 = vunpack.c.l.b16 %v160
  %v352 = vunpack.c.l.b16 %v161
  %v353 = vunpack.c.l.b16 %v162
  %v354 = vunpack.c.l.b16 %v163
  %v355 = vpack.c.b16 %v324, %v323
  %v356 = vpack.c.b16 %v326, %v325
  %v357 = vpack.c.b16 %v328, %v327
  %v358 = vpack.c.b16 %v330, %v329
  %v359 = vpack.c.b16 %v332, %v331
  %v360 = vpack.c.b16 %v334, %v333
  %v361 = vpack.c.b16 %v336, %v335
  %v362 = vpack.c.b16 %v338, %v337
  %v363 = vpack.c.b16 %v340, %v339
  %v364 = vpack.c.b16 %v342, %v341
  %v365 = vpack.c.b16 %v344, %v343
  %v366 = vpack.c.b16 %v346, %v345
  %v367 = vpack.c.b16 %v348, %v347
  %v368 = vpack.c.b16 %v350, %v349
  %v369 = vpack.c.b16 %v352, %v351
  %v370 = vpack.c.b16 %v354, %v353
  %387 = vmatpush.bf16.msra.mxu0 %v362
  %388 = vmatpush.bf16.msra.mxu0 %v361
  %389 = vmatpush.bf16.msra.mxu0 %v360
  %390 = vmatpush.bf16.msra.mxu0 %v359
  %391 = vmatpush.bf16.msra.mxu0 %v358
  %392 = vmatpush.bf16.msra.mxu0 %v357
  %393 = vmatpush.bf16.msra.mxu0 %v356
  %394 = vmatpush.bf16.msra.mxu0 %v355
  %395 = vmatmul.bf16.gmra.mxu0 %v239
  %v396 = vpop.f32.mrf.mxu0
  %v397 = vadd.f32 0.0, %v396
  %v398 = vpop.f32.mrf.mxu0
  %v399 = vadd.f32 0.0, %v398
  %400 = vmatmul.bf16.gmra.mxu0 %v241
  %v401 = vpop.f32.mrf.mxu0
  %v402 = vadd.f32 0.0, %v401
  %v403 = vpop.f32.mrf.mxu0
  %v404 = vadd.f32 0.0, %v403
  %405 = vmatmul.bf16.gmra.mxu0 %v243
  %v406 = vpop.f32.mrf.mxu0
  %v407 = vadd.f32 0.0, %v406
  %v408 = vpop.f32.mrf.mxu0
  %v409 = vadd.f32 0.0, %v408
  %410 = vmatmul.bf16.gmra.mxu0 %v245
  %v411 = vpop.f32.mrf.mxu0
  %v412 = vadd.f32 0.0, %v411
  %v413 = vpop.f32.mrf.mxu0
  %v414 = vadd.f32 0.0, %v413
  %415 = vmatmul.bf16.gmra.mxu0 %v247
  %v416 = vpop.f32.mrf.mxu0
  %v417 = vadd.f32 0.0, %v416
  %v418 = vpop.f32.mrf.mxu0
  %v419 = vadd.f32 0.0, %v418
  %420 = vmatmul.bf16.gmra.mxu0 %v249
  %v421 = vpop.f32.mrf.mxu0
  %v422 = vadd.f32 0.0, %v421
  %v423 = vpop.f32.mrf.mxu0
  %v424 = vadd.f32 0.0, %v423
  %425 = vmatmul.bf16.gmra.mxu0 %v251
  %v426 = vpop.f32.mrf.mxu0
  %v427 = vadd.f32 0.0, %v426
  %v428 = vpop.f32.mrf.mxu0
  %v429 = vadd.f32 0.0, %v428
  %430 = vmatmul.bf16.gmra.mxu0 %v253
  %v431 = vpop.f32.mrf.mxu0
  %v432 = vadd.f32 0.0, %v431
  %v433 = vpop.f32.mrf.mxu0
  %v434 = vadd.f32 0.0, %v433
  %435 = vmatmul.bf16.gmra.mxu0 %v255
  %v436 = vpop.f32.mrf.mxu0
  %v437 = vadd.f32 0.0, %v436
  %v438 = vpop.f32.mrf.mxu0
  %v439 = vadd.f32 0.0, %v438
  %440 = vmatmul.bf16.gmra.mxu0 %v257
  %v441 = vpop.f32.mrf.mxu0
  %v442 = vadd.f32 0.0, %v441
  %v443 = vpop.f32.mrf.mxu0
  %v444 = vadd.f32 0.0, %v443
  %445 = vmatmul.bf16.gmra.mxu0 %v259
  %v446 = vpop.f32.mrf.mxu0
  %v447 = vadd.f32 0.0, %v446
  %v448 = vpop.f32.mrf.mxu0
  %v449 = vadd.f32 0.0, %v448
  %450 = vmatmul.bf16.gmra.mxu0 %v261
  %v451 = vpop.f32.mrf.mxu0
  %v452 = vadd.f32 0.0, %v451
  %v453 = vpop.f32.mrf.mxu0
  %v454 = vadd.f32 0.0, %v453
  %455 = vmatmul.bf16.gmra.mxu0 %v263
  %v456 = vpop.f32.mrf.mxu0
  %v457 = vadd.f32 0.0, %v456
  %v458 = vpop.f32.mrf.mxu0
  %459 = vdwg.mxu0
  %460 = vmatpush.bf16.msra.mxu0 %v370
  %461 = vmatpush.bf16.msra.mxu0 %v369
  %462 = vmatpush.bf16.msra.mxu0 %v368
  %463 = vmatpush.bf16.msra.mxu0 %v367
  %464 = vmatpush.bf16.msra.mxu0 %v366
  %465 = vmatpush.bf16.msra.mxu0 %v365
  %466 = vmatpush.bf16.msra.mxu0 %v364
  %467 = vmatpush.bf16.msra.mxu0 %v363
  %468 = vmatmul.bf16.gmra.mxu0 %v240
  %v469 = vpop.f32.mrf.mxu0
  %v470 = vadd.f32 %v397, %v469
  %v471 = vpop.f32.mrf.mxu0
  %v472 = vadd.f32 %v399, %v471
  %473 = vmatmul.bf16.gmra.mxu0 %v242
  %v474 = vpop.f32.mrf.mxu0
  %v475 = vadd.f32 %v402, %v474
  %v476 = vpop.f32.mrf.mxu0
  %v477 = vadd.f32 %v404, %v476
  %478 = vmatmul.bf16.gmra.mxu0 %v244
  %v479 = vpop.f32.mrf.mxu0
  %v480 = vadd.f32 %v407, %v479
  %v481 = vpop.f32.mrf.mxu0
  %v482 = vadd.f32 %v409, %v481
  %483 = vmatmul.bf16.gmra.mxu0 %v246
  %v484 = vpop.f32.mrf.mxu0
  %v485 = vadd.f32 %v412, %v484
  %v486 = vpop.f32.mrf.mxu0
  %v487 = vadd.f32 %v414, %v486
  %488 = vmatmul.bf16.gmra.mxu0 %v248
  %v489 = vpop.f32.mrf.mxu0
  %v490 = vadd.f32 %v417, %v489
  %v491 = vpop.f32.mrf.mxu0
  %v492 = vadd.f32 %v419, %v491
  %493 = vmatmul.bf16.gmra.mxu0 %v250
  %v494 = vpop.f32.mrf.mxu0
  %v495 = vadd.f32 %v422, %v494
  %v496 = vpop.f32.mrf.mxu0
  %v497 = vadd.f32 %v424, %v496
  %498 = vmatmul.bf16.gmra.mxu0 %v252
  %v499 = vpop.f32.mrf.mxu0
  %v500 = vadd.f32 %v427, %v499
  %v501 = vpop.f32.mrf.mxu0
  %v502 = vadd.f32 %v429, %v501
  %503 = vmatmul.bf16.gmra.mxu0 %v254
  %v504 = vpop.f32.mrf.mxu0
  %v505 = vadd.f32 %v432, %v504
  %v506 = vpop.f32.mrf.mxu0
  %v507 = vadd.f32 %v434, %v506
  %508 = vmatmul.bf16.gmra.mxu0 %v256
  %v509 = vpop.f32.mrf.mxu0
  %v510 = vadd.f32 %v437, %v509
  %v511 = vpop.f32.mrf.mxu0
  %v512 = vadd.f32 %v439, %v511
  %513 = vmatmul.bf16.gmra.mxu0 %v258
  %v514 = vpop.f32.mrf.mxu0
  %v515 = vadd.f32 %v442, %v514
  %v516 = vpop.f32.mrf.mxu0
  %v517 = vadd.f32 %v444, %v516
  %518 = vmatmul.bf16.gmra.mxu0 %v260
  %v519 = vpop.f32.mrf.mxu0
  %v520 = vadd.f32 %v447, %v519
  %v521 = vpop.f32.mrf.mxu0
  %v522 = vadd.f32 %v449, %v521
  %523 = vmatmul.bf16.gmra.mxu0 %v262
  %v524 = vpop.f32.mrf.mxu0
  %v525 = vadd.f32 %v452, %v524
  %v526 = vpop.f32.mrf.mxu0
  %v527 = vadd.f32 %v454, %v526
  %528 = vmatmul.bf16.gmra.mxu0 %v264
  %v529 = vpop.f32.mrf.mxu0
  %v530 = vadd.f32 %v457, %v529
  %v531 = vpop.f32.mrf.mxu0
  %532 = vdwg.mxu0
  %v533 = vadd.f32 %v82, %v470
  %v534 = vadd.f32 %v83, %v472
  %v535 = vadd.f32 %v84, %v475
  %v536 = vadd.f32 %v85, %v477
  %v537 = vadd.f32 %v86, %v480
  %v538 = vadd.f32 %v87, %v482
  %v539 = vadd.f32 %v88, %v485
  %v540 = vadd.f32 %v89, %v487
  %v541 = vadd.f32 %v90, %v490
  %v542 = vadd.f32 %v91, %v492
  %v543 = vadd.f32 %v92, %v495
  %v544 = vadd.f32 %v93, %v497
  %v545 = vadd.f32 %v94, %v500
  %v546 = vadd.f32 %v95, %v502
  %v547 = vadd.f32 %v96, %v505
  %v548 = vadd.f32 %v97, %v507
  %v549 = vadd.f32 %v98, %v510
  %v550 = vadd.f32 %v99, %v512
  %v551 = vadd.f32 %v100, %v515
  %v552 = vadd.f32 %v101, %v517
  %v553 = vadd.f32 %v102, %v520
  %v554 = vadd.f32 %v103, %v522
  %v555 = vadd.f32 %v104, %v525
  %v556 = vadd.f32 %v105, %v527
  %v557 = vadd.f32 %v106, %v530
  %558 = vst [vmem:[#allocation2] sm:$0xff] %v533
  %559 = vst [vmem:[#allocation2 + $0x8] sm:$0xff] %v534
  %560 = vst [vmem:[#allocation2 + $0x10] sm:$0xff] %v535
  %561 = vst [vmem:[#allocation2 + $0x18] sm:$0xff] %v536
  %562 = vst [vmem:[#allocation2 + $0x20] sm:$0xff] %v537
  %563 = vst [vmem:[#allocation2 + $0x28] sm:$0xff] %v538
  %564 = vst [vmem:[#allocation2 + $0x30] sm:$0xff] %v539
  %565 = vst [vmem:[#allocation2 + $0x38] sm:$0xff] %v540
  %566 = vst [vmem:[#allocation2 + $0x40] sm:$0xff] %v541
  %567 = vst [vmem:[#allocation2 + $0x48] sm:$0xff] %v542
  %568 = vst [vmem:[#allocation2 + $0x50] sm:$0xff] %v543
  %569 = vst [vmem:[#allocation2 + $0x58] sm:$0xff] %v544
  %570 = vst [vmem:[#allocation2 + $0x60] sm:$0xff] %v545
  %571 = vst [vmem:[#allocation2 + $0x68] sm:$0xff] %v546
  %572 = vst [vmem:[#allocation2 + $0x70] sm:$0xff] %v547
  %573 = vst [vmem:[#allocation2 + $0x78] sm:$0xff] %v548
  %574 = vst [vmem:[#allocation2 + $0x80] sm:$0xff] %v549
  %575 = vst [vmem:[#allocation2 + $0x88] sm:$0xff] %v550
  %576 = vst [vmem:[#allocation2 + $0x90] sm:$0xff] %v551
  %577 = vst [vmem:[#allocation2 + $0x98] sm:$0xff] %v552
  %578 = vst [vmem:[#allocation2 + $0xa0] sm:$0xff] %v553
  %579 = vst [vmem:[#allocation2 + $0xa8] sm:$0xff] %v554
  %580 = vst [vmem:[#allocation2 + $0xb0] sm:$0xff] %v555
  %581 = vst [vmem:[#allocation2 + $0xb8] sm:$0xff] %v556
  %582 = vst [vmem:[#allocation2 + $0xc0] sm:$0xff] %v557
  %p583 = scmp.eq.s32.totalorder 0, 0
  %p584 = pnand %p583, %p53
  %p585 = pneg %p584
  // Predicated region
  $region14: #{encoder_forward.6} parent=0 // pred_check
    _
  $region15: #{encoder_forward.6} parent=0 // pred_check_branch
    %587 = sbr.rel (%p584) target = $region17
  $region16: #{encoder_forward.6} parent=0 // pred_region
    %588 = vst [vmem:[%s3] sm:$0xff] 0.0
    %589 = vst [vmem:[%s4] sm:$0xff] 0.0
  $region17: #{encoder_forward.6} parent=0 // pred_fallthru
    _
  // Predicated region
  $region18: #{encoder_forward.6} parent=0 // pred_check
    %p590 = pneg %p53
  $region19: #{encoder_forward.6} parent=0 // pred_check_branch
    %592 = sbr.rel (%p590) target = $region21
  $region20: #{encoder_forward.6} parent=0 // pred_region
    %v593 = vld [vmem:[#allocation2] sm:$0xff]
    %v594 = vld [vmem:[#allocation2 + $0x8] sm:$0xff]
    %v595 = vld [vmem:[#allocation2 + $0x10] sm:$0xff]
    %v596 = vld [vmem:[#allocation2 + $0x18] sm:$0xff]
    %v597 = vld [vmem:[#allocation2 + $0x20] sm:$0xff]
    %v598 = vld [vmem:[#allocation2 + $0x28] sm:$0xff]
    %v599 = vld [vmem:[#allocation2 + $0x30] sm:$0xff]
    %v600 = vld [vmem:[#allocation2 + $0x38] sm:$0xff]
    %v601 = vld [vmem:[#allocation2 + $0x40] sm:$0xff]
    %v602 = vld [vmem:[#allocation2 + $0x48] sm:$0xff]
    %v603 = vld [vmem:[#allocation2 + $0x50] sm:$0xff]
    %v604 = vld [vmem:[#allocation2 + $0x58] sm:$0xff]
    %v605 = vld [vmem:[#allocation2 + $0x60] sm:$0xff]
    %v606 = vld [vmem:[#allocation2 + $0x68] sm:$0xff]
    %v607 = vld [vmem:[#allocation2 + $0x70] sm:$0xff]
    %v608 = vld [vmem:[#allocation2 + $0x78] sm:$0xff]
    %v609 = vld [vmem:[#allocation2 + $0x80] sm:$0xff]
    %v610 = vld [vmem:[#allocation2 + $0x88] sm:$0xff]
    %v611 = vld [vmem:[#allocation2 + $0x90] sm:$0xff]
    %v612 = vld [vmem:[#allocation2 + $0x98] sm:$0xff]
    %v613 = vld [vmem:[#allocation2 + $0xa0] sm:$0xff]
    %v614 = vld [vmem:[#allocation2 + $0xa8] sm:$0xff]
    %v615 = vld [vmem:[#allocation2 + $0xb0] sm:$0xff]
    %v616 = vld [vmem:[#allocation2 + $0xb8] sm:$0xff]
    %v617 = vld [vmem:[#allocation2 + $0xc0] sm:$0xff]
    %v618 = vpack.c.bf16 %v593, %v593
    %v619 = vpack.c.bf16 %v594, %v594
    %v620 = vpack.c.bf16 %v595, %v595
    %v621 = vpack.c.bf16 %v596, %v596
    %v622 = vpack.c.bf16 %v597, %v597
    %v623 = vpack.c.bf16 %v598, %v598
    %v624 = vpack.c.bf16 %v599, %v599
    %v625 = vpack.c.bf16 %v600, %v600
    %v626 = vpack.c.bf16 %v601, %v601
    %v627 = vpack.c.bf16 %v602, %v602
    %v628 = vpack.c.bf16 %v603, %v603
    %v629 = vpack.c.bf16 %v604, %v604
    %v630 = vpack.c.bf16 %v605, %v605
    %v631 = vpack.c.bf16 %v606, %v606
    %v632 = vpack.c.bf16 %v607, %v607
    %v633 = vpack.c.bf16 %v608, %v608
    %v634 = vpack.c.bf16 %v609, %v609
    %v635 = vpack.c.bf16 %v610, %v610
    %v636 = vpack.c.bf16 %v611, %v611
    %v637 = vpack.c.bf16 %v612, %v612
    %v638 = vpack.c.bf16 %v613, %v613
    %v639 = vpack.c.bf16 %v614, %v614
    %v640 = vpack.c.bf16 %v615, %v615
    %v641 = vpack.c.bf16 %v616, %v616
    %v642 = vpack.c.bf16 %v617, %v617
    %643 = vst [vmem:[%s50] sm:$0xf] %v618
    %644 = vst [vmem:[%s50 + $0x4] sm:$0xf] %v619
    %645 = vst [vmem:[%s50 + $0x8] sm:$0xf] %v620
    %646 = vst [vmem:[%s50 + $0xc] sm:$0xf] %v621
    %647 = vst [vmem:[%s50 + $0x10] sm:$0xf] %v622
    %648 = vst [vmem:[%s50 + $0x14] sm:$0xf] %v623
    %649 = vst [vmem:[%s50 + $0x18] sm:$0xf] %v624
    %650 = vst [vmem:[%s50 + $0x1c] sm:$0xf] %v625
    %651 = vst [vmem:[%s50 + $0x20] sm:$0xf] %v626
    %652 = vst [vmem:[%s50 + $0x24] sm:$0xf] %v627
    %653 = vst [vmem:[%s50 + $0x28] sm:$0xf] %v628
    %654 = vst [vmem:[%s50 + $0x2c] sm:$0xf] %v629
    %655 = vst [vmem:[%s50 + $0x30] sm:$0xf] %v630
    %656 = vst [vmem:[%s50 + $0x34] sm:$0xf] %v631
    %657 = vst [vmem:[%s50 + $0x38] sm:$0xf] %v632
    %658 = vst [vmem:[%s50 + $0x3c] sm:$0xf] %v633
    %659 = vst [vmem:[%s50 + $0x40] sm:$0xf] %v634
    %660 = vst [vmem:[%s50 + $0x44] sm:$0xf] %v635
    %661 = vst [vmem:[%s50 + $0x48] sm:$0xf] %v636
    %662 = vst [vmem:[%s50 + $0x4c] sm:$0xf] %v637
    %663 = vst [vmem:[%s50 + $0x50] sm:$0xf] %v638
    %664 = vst [vmem:[%s50 + $0x54] sm:$0xf] %v639
    %665 = vst [vmem:[%s50 + $0x58] sm:$0xf] %v640
    %666 = vst [vmem:[%s50 + $0x5c] sm:$0xf] %v641
    %667 = vst [vmem:[%s50 + $0x60] sm:$0xf] %v642
    %v668 = vld [vmem:[%s3] sm:$0xff]
    %v669 = vadd.f32 %v593, %v594
    %v670 = vadd.f32 %v669, %v595
    %v671 = vadd.f32 %v670, %v596
    %v672 = vadd.f32 %v671, %v597
    %v673 = vadd.f32 %v672, %v598
    %v674 = vadd.f32 %v673, %v599
    %v675 = vadd.f32 %v674, %v600
    %v676 = vadd.f32 %v675, %v601
    %v677 = vadd.f32 %v676, %v602
    %v678 = vadd.f32 %v677, %v603
    %v679 = vadd.f32 %v678, %v604
    %v680 = vadd.f32 %v679, %v605
    %v681 = vadd.f32 %v680, %v606
    %v682 = vadd.f32 %v681, %v607
    %v683 = vadd.f32 %v682, %v608
    %v684 = vadd.f32 %v683, %v609
    %v685 = vadd.f32 %v684, %v610
    %v686 = vadd.f32 %v685, %v611
    %v687 = vadd.f32 %v686, %v612
    %v688 = vadd.f32 %v687, %v613
    %v689 = vadd.f32 %v688, %v614
    %v690 = vadd.f32 %v689, %v615
    %v691 = vadd.f32 %v690, %v616
    %v692 = vadd.f32 %v691, %v617
    %v693 = vrot.slane %v692, 4
    %v694 = vadd.f32 %v692, %v693
    %v695 = vrot.slane %v694, 2
    %v696 = vadd.f32 %v694, %v695
    %v697 = vrot.slane %v696, 1
    %v698 = vadd.f32 %v696, %v697
    %v699 = vadd.f32 %v668, %v698
    %700 = vst [vmem:[%s3] sm:$0xff] %v699
    %v701 = vld [vmem:[%s4] sm:$0xff]
    %v702 = vmul.f32 %v593, %v593
    %v703 = vmul.f32 %v594, %v594
    %v704 = vmul.f32 %v595, %v595
    %v705 = vmul.f32 %v596, %v596
    %v706 = vmul.f32 %v597, %v597
    %v707 = vmul.f32 %v598, %v598
    %v708 = vmul.f32 %v599, %v599
    %v709 = vmul.f32 %v600, %v600
    %v710 = vmul.f32 %v601, %v601
    %v711 = vmul.f32 %v602, %v602
    %v712 = vmul.f32 %v603, %v603
    %v713 = vmul.f32 %v604, %v604
    %v714 = vmul.f32 %v605, %v605
    %v715 = vmul.f32 %v606, %v606
    %v716 = vmul.f32 %v607, %v607
    %v717 = vmul.f32 %v608, %v608
    %v718 = vmul.f32 %v609, %v609
    %v719 = vmul.f32 %v610, %v610
    %v720 = vmul.f32 %v611, %v611
    %v721 = vmul.f32 %v612, %v612
    %v722 = vmul.f32 %v613, %v613
    %v723 = vmul.f32 %v614, %v614
    %v724 = vmul.f32 %v615, %v615
    %v725 = vmul.f32 %v616, %v616
    %v726 = vmul.f32 %v617, %v617
    %v727 = vadd.f32 %v702, %v703
    %v728 = vadd.f32 %v727, %v704
    %v729 = vadd.f32 %v728, %v705
    %v730 = vadd.f32 %v729, %v706
    %v731 = vadd.f32 %v730, %v707
    %v732 = vadd.f32 %v731, %v708
    %v733 = vadd.f32 %v732, %v709
    %v734 = vadd.f32 %v733, %v710
    %v735 = vadd.f32 %v734, %v711
    %v736 = vadd.f32 %v735, %v712
    %v737 = vadd.f32 %v736, %v713
    %v738 = vadd.f32 %v737, %v714
    %v739 = vadd.f32 %v738, %v715
    %v740 = vadd.f32 %v739, %v716
    %v741 = vadd.f32 %v740, %v717
    %v742 = vadd.f32 %v741, %v718
    %v743 = vadd.f32 %v742, %v719
    %v744 = vadd.f32 %v743, %v720
    %v745 = vadd.f32 %v744, %v721
    %v746 = vadd.f32 %v745, %v722
    %v747 = vadd.f32 %v746, %v723
    %v748 = vadd.f32 %v747, %v724
    %v749 = vadd.f32 %v748, %v725
    %v750 = vadd.f32 %v749, %v726
    %v751 = vrot.slane %v750, 4
    %v752 = vadd.f32 %v750, %v751
    %v753 = vrot.slane %v752, 2
    %v754 = vadd.f32 %v752, %v753
    %v755 = vrot.slane %v754, 1
    %v756 = vadd.f32 %v754, %v755
    %v757 = vadd.f32 %v701, %v756
    %758 = vst [vmem:[%s4] sm:$0xff] %v757
  $region21: #{encoder_forward.6} parent=0 // pred_fallthru
    _
  %s759 = sadd.s32 0, 0
  %s760 = smul.u32 25, %s759
  %p761 = scmp.lt.s32.totalorder %s760, 24
  %s762 = scalar_select %p761, %s760, 24
  %s763 = smul.addr %s762, 4
  %s764 = scalar_lea.vmem %s2, %s763
  // Predicated region
  $region22: #{encoder_forward.6} parent=0 // pred_check
    _
  $region23: #{encoder_forward.6} parent=0 // pred_check_branch
    %766 = sbr.rel (0) target = $region25
  $region24: #{encoder_forward.6} parent=0 // pred_region
    %s767 = sadd.s32 0, 0
    %s768 = smul.u32 25, %s767
  $region25: #{encoder_forward.6} parent=0 // pred_fallthru
    _
  // Predicated region
  $region26: #{encoder_forward.6} parent=0 // pred_check
    _
  $region27: #{encoder_forward.6} parent=0 // pred_check_branch
    %770 = sbr.rel (0) target = $region29
  $region28: #{encoder_forward.6} parent=0 // pred_region
    _
  $region29: #{encoder_forward.6} parent=0 // pred_fallthru
    _
  // Predicated region
  $region30: #{encoder_forward.6} parent=0 // pred_check
    _
  $region31: #{encoder_forward.6} parent=0 // pred_check_branch
    %772 = sbr.rel (0) target = $region33
  $region32: #{encoder_forward.6} parent=0 // pred_region
    _
  $region33: #{encoder_forward.6} parent=0 // pred_fallthru
    _
  // Predicated region
  $region34: #{encoder_forward.6} parent=0 // pred_check
    _
  $region35: #{encoder_forward.6} parent=0 // pred_check_branch
    %774 = sbr.rel (0) target = $region37
  $region36: #{encoder_forward.6} parent=0 // pred_region
    %s775 = sadd.s32 0, 0
    %s776 = smul.u32 25, %s775
    %p777 = scmp.lt.s32.totalorder %s776, 24
    %s778 = scalar_select %p777, %s776, 24
    %s779 = smul.addr %s778, 4
    %s780 = scalar_lea.vmem %s2, %s779
  $region37: #{encoder_forward.6} parent=0 // pred_fallthru
    _
  // Predicated region
  $region38: #{encoder_forward.6} parent=0 // pred_check
    _
  $region39: #{encoder_forward.6} parent=0 // pred_check_branch
    %782 = sbr.rel (0) target = $region41
  $region40: #{encoder_forward.6} parent=0 // pred_region
    _
  $region41: #{encoder_forward.6} parent=0 // pred_fallthru
    _
  // Predicated region
  $region42: #{encoder_forward.6} parent=0 // pred_check
    _
  $region43: #{encoder_forward.6} parent=0 // pred_check_branch
    %784 = sbr.rel (0) target = $region45
  $region44: #{encoder_forward.6} parent=0 // pred_region
    _
  $region45: #{encoder_forward.6} parent=0 // pred_fallthru
    _

// kernel: encoder_forward.7
$region0: #{encoder_forward.7}
  #allocation0 [shape = 'u32[]', space=smem, size = 0x4, offset = 0x4, fixed_abs, tag = 'smem constant byte address 0x4 - core index']
  #allocation1 [shape = 'u32[72,128]{1,0:T(1,128)}', space=vmem, size = 0x9000, scoped, tag = 'internal scratch']
  #allocation2 [shape = 'f32[32,128]{1,0:T(8,128)}', space=vmem, size = 0x4000, scoped, tag = 'scratch operand']
  %s0 = inlined_call_operand.vmem [shape: bf16[32,512], index: 0, kind: input, shape index: {}]
  %s1 = inlined_call_operand.vmem [shape: bf16[512,128], index: 1, kind: input, shape index: {}]
  %s2 = inlined_call_operand.vmem [shape: f32[1,128], index: 2, kind: input, shape index: {}]
  %s3 = inlined_call_operand.vmem [shape: bf16[32,128], index: 3, kind: output, shape index: {}]
  %s4 = sld [smem:[#allocation0]]
  $region30: #{encoder_forward.7} parent=0
    _
  %s6 = ssub.s32 1, %s4
  %s7 = scalar_select 0, %s6, %s4
  // Predicated region
  $region2: #{encoder_forward.7} parent=0 // pred_check
    _
  $region3: #{encoder_forward.7} parent=0 // pred_check_branch
    %9 = sbr.rel (0) target = $region5
  $region4: #{encoder_forward.7} parent=0 // pred_region
    _
  $region5: #{encoder_forward.7} parent=0 // pred_fallthru
    _
  // Predicated region
  $region6: #{encoder_forward.7} parent=0 // pred_check
    _
  $region7: #{encoder_forward.7} parent=0 // pred_check_branch
    %11 = sbr.rel (0) target = $region9
  $region8: #{encoder_forward.7} parent=0 // pred_region
    _
  $region9: #{encoder_forward.7} parent=0 // pred_fallthru
    _
  // Predicated region
  $region10: #{encoder_forward.7} parent=0 // pred_check
    _
  $region11: #{encoder_forward.7} parent=0 // pred_check_branch
    %13 = sbr.rel (0) target = $region13
  $region12: #{encoder_forward.7} parent=0 // pred_region
    _
  $region13: #{encoder_forward.7} parent=0 // pred_fallthru
    _
  %p14 = scmp.eq.s32.totalorder 0, 0
  // Predicated region
  $region14: #{encoder_forward.7} parent=0 // pred_check
    %p15 = pneg %p14
  $region15: #{encoder_forward.7} parent=0 // pred_check_branch
    %17 = sbr.rel (%p15) target = $region17
  $region16: #{encoder_forward.7} parent=0 // pred_region
    %18 = vst [vmem:[#allocation2] sm:$0xff] 0.0
    %19 = vst [vmem:[#allocation2 + $0x8] sm:$0xff] 0.0
    %20 = vst [vmem:[#allocation2 + $0x10] sm:$0xff] 0.0
    %21 = vst [vmem:[#allocation2 + $0x18] sm:$0xff] 0.0
  $region17: #{encoder_forward.7} parent=0 // pred_fallthru
    _
  %v22 = vld [vmem:[#allocation2] sm:$0xff]
  %v23 = vld [vmem:[#allocation2 + $0x8] sm:$0xff]
  %v24 = vld [vmem:[#allocation2 + $0x10] sm:$0xff]
  %v25 = vld [vmem:[#allocation2 + $0x18] sm:$0xff]
  %v26 = vld [vmem:[%s0] sm:$0xff]
  %v27 = vld [vmem:[%s0 + $0x8] sm:$0xff]
  %v28 = vld [vmem:[%s0 + $0x10] sm:$0xff]
  %v29 = vld [vmem:[%s0 + $0x18] sm:$0xff]
  %v30 = vld [vmem:[%s0 + $0x20] sm:$0xff]
  %v31 = vld [vmem:[%s0 + $0x28] sm:$0xff]
  %v32 = vld [vmem:[%s0 + $0x30] sm:$0xff]
  %v33 = vld [vmem:[%s0 + $0x38] sm:$0xff]
  %v34 = vld [vmem:[%s1] sm:$0xf]
  %v35 = vld [vmem:[%s1 + $0x4] sm:$0xf]
  %v36 = vld [vmem:[%s1 + $0x8] sm:$0xf]
  %v37 = vld [vmem:[%s1 + $0xc] sm:$0xf]
  %v38 = vld [vmem:[%s1 + $0x10] sm:$0xf]
  %v39 = vld [vmem:[%s1 + $0x14] sm:$0xf]
  %v40 = vld [vmem:[%s1 + $0x18] sm:$0xf]
  %v41 = vld [vmem:[%s1 + $0x1c] sm:$0xf]
  %v42 = vld [vmem:[%s1 + $0x20] sm:$0xf]
  %v43 = vld [vmem:[%s1 + $0x24] sm:$0xf]
  %v44 = vld [vmem:[%s1 + $0x28] sm:$0xf]
  %v45 = vld [vmem:[%s1 + $0x2c] sm:$0xf]
  %v46 = vld [vmem:[%s1 + $0x30] sm:$0xf]
  %v47 = vld [vmem:[%s1 + $0x34] sm:$0xf]
  %v48 = vld [vmem:[%s1 + $0x38] sm:$0xf]
  %v49 = vld [vmem:[%s1 + $0x3c] sm:$0xf]
  %v50 = vld [vmem:[%s1 + $0x40] sm:$0xf]
  %v51 = vld [vmem:[%s1 + $0x44] sm:$0xf]
  %v52 = vld [vmem:[%s1 + $0x48] sm:$0xf]
  %v53 = vld [vmem:[%s1 + $0x4c] sm:$0xf]
  %v54 = vld [vmem:[%s1 + $0x50] sm:$0xf]
  %v55 = vld [vmem:[%s1 + $0x54] sm:$0xf]
  %v56 = vld [vmem:[%s1 + $0x58] sm:$0xf]
  %v57 = vld [vmem:[%s1 + $0x5c] sm:$0xf]
  %v58 = vld [vmem:[%s1 + $0x60] sm:$0xf]
  %v59 = vld [vmem:[%s1 + $0x64] sm:$0xf]
  %v60 = vld [vmem:[%s1 + $0x68] sm:$0xf]
  %v61 = vld [vmem:[%s1 + $0x6c] sm:$0xf]
  %v62 = vld [vmem:[%s1 + $0x70] sm:$0xf]
  %v63 = vld [vmem:[%s1 + $0x74] sm:$0xf]
  %v64 = vld [vmem:[%s1 + $0x78] sm:$0xf]
  %v65 = vld [vmem:[%s1 + $0x7c] sm:$0xf]
  %v66 = vld [vmem:[%s1 + $0x80] sm:$0xf]
  %v67 = vld [vmem:[%s1 + $0x84] sm:$0xf]
  %v68 = vld [vmem:[%s1 + $0x88] sm:$0xf]
  %v69 = vld [vmem:[%s1 + $0x8c] sm:$0xf]
  %v70 = vld [vmem:[%s1 + $0x90] sm:$0xf]
  %v71 = vld [vmem:[%s1 + $0x94] sm:$0xf]
  %v72 = vld [vmem:[%s1 + $0x98] sm:$0xf]
  %v73 = vld [vmem:[%s1 + $0x9c] sm:$0xf]
  %v74 = vld [vmem:[%s1 + $0xa0] sm:$0xf]
  %v75 = vld [vmem:[%s1 + $0xa4] sm:$0xf]
  %v76 = vld [vmem:[%s1 + $0xa8] sm:$0xf]
  %v77 = vld [vmem:[%s1 + $0xac] sm:$0xf]
  %v78 = vld [vmem:[%s1 + $0xb0] sm:$0xf]
  %v79 = vld [vmem:[%s1 + $0xb4] sm:$0xf]
  %v80 = vld [vmem:[%s1 + $0xb8] sm:$0xf]
  %v81 = vld [vmem:[%s1 + $0xbc] sm:$0xf]
  %v82 = vld [vmem:[%s1 + $0xc0] sm:$0xf]
  %v83 = vld [vmem:[%s1 + $0xc4] sm:$0xf]
  %v84 = vld [vmem:[%s1 + $0xc8] sm:$0xf]
  %v85 = vld [vmem:[%s1 + $0xcc] sm:$0xf]
  %v86 = vld [vmem:[%s1 + $0xd0] sm:$0xf]
  %v87 = vld [vmem:[%s1 + $0xd4] sm:$0xf]
  %v88 = vld [vmem:[%s1 + $0xd8] sm:$0xf]
  %v89 = vld [vmem:[%s1 + $0xdc] sm:$0xf]
  %v90 = vld [vmem:[%s1 + $0xe0] sm:$0xf]
  %v91 = vld [vmem:[%s1 + $0xe4] sm:$0xf]
  %v92 = vld [vmem:[%s1 + $0xe8] sm:$0xf]
  %v93 = vld [vmem:[%s1 + $0xec] sm:$0xf]
  %v94 = vld [vmem:[%s1 + $0xf0] sm:$0xf]
  %v95 = vld [vmem:[%s1 + $0xf4] sm:$0xf]
  %v96 = vld [vmem:[%s1 + $0xf8] sm:$0xf]
  %v97 = vld [vmem:[%s1 + $0xfc] sm:$0xf]
  %v106 = vunpack.c.l.b16 %v26
  %v107 = vunpack.c.h.b16 %v26
  %v108 = vunpack.c.l.b16 %v27
  %v109 = vunpack.c.h.b16 %v27
  %v110 = vunpack.c.l.b16 %v28
  %v111 = vunpack.c.h.b16 %v28
  %v112 = vunpack.c.l.b16 %v29
  %v113 = vunpack.c.h.b16 %v29
  %v114 = vunpack.c.l.b16 %v30
  %v115 = vunpack.c.h.b16 %v30
  %v116 = vunpack.c.l.b16 %v31
  %v117 = vunpack.c.h.b16 %v31
  %v118 = vunpack.c.l.b16 %v32
  %v119 = vunpack.c.h.b16 %v32
  %v120 = vunpack.c.l.b16 %v33
  %v121 = vunpack.c.h.b16 %v33
  %v122 = vpack.c.b16 %v110, %v106
  %v123 = vpack.c.b16 %v111, %v107
  %v124 = vpack.c.b16 %v112, %v108
  %v125 = vpack.c.b16 %v113, %v109
  %v126 = vpack.c.b16 %v118, %v114
  %v127 = vpack.c.b16 %v119, %v115
  %v128 = vpack.c.b16 %v120, %v116
  %v129 = vpack.c.b16 %v121, %v117
  %v202 = vunpack.c.l.b16 %v34
  %v203 = vunpack.c.l.b16 %v35
  %v204 = vunpack.c.l.b16 %v36
  %v205 = vunpack.c.l.b16 %v37
  %v206 = vunpack.c.l.b16 %v38
  %v207 = vunpack.c.l.b16 %v39
  %v208 = vunpack.c.l.b16 %v40
  %v209 = vunpack.c.l.b16 %v41
  %v210 = vunpack.c.l.b16 %v42
  %v211 = vunpack.c.l.b16 %v43
  %v212 = vunpack.c.l.b16 %v44
  %v213 = vunpack.c.l.b16 %v45
  %v214 = vunpack.c.l.b16 %v46
  %v215 = vunpack.c.l.b16 %v47
  %v216 = vunpack.c.l.b16 %v48
  %v217 = vunpack.c.l.b16 %v49
  %v218 = vunpack.c.l.b16 %v50
  %v219 = vunpack.c.l.b16 %v51
  %v220 = vunpack.c.l.b16 %v52
  %v221 = vunpack.c.l.b16 %v53
  %v222 = vunpack.c.l.b16 %v54
  %v223 = vunpack.c.l.b16 %v55
  %v224 = vunpack.c.l.b16 %v56
  %v225 = vunpack.c.l.b16 %v57
  %v226 = vunpack.c.l.b16 %v58
  %v227 = vunpack.c.l.b16 %v59
  %v228 = vunpack.c.l.b16 %v60
  %v229 = vunpack.c.l.b16 %v61
  %v230 = vunpack.c.l.b16 %v62
  %v231 = vunpack.c.l.b16 %v63
  %v232 = vunpack.c.l.b16 %v64
  %v233 = vunpack.c.l.b16 %v65
  %v234 = vunpack.c.l.b16 %v66
  %v235 = vunpack.c.l.b16 %v67
  %v236 = vunpack.c.l.b16 %v68
  %v237 = vunpack.c.l.b16 %v69
  %v238 = vunpack.c.l.b16 %v70
  %v239 = vunpack.c.l.b16 %v71
  %v240 = vunpack.c.l.b16 %v72
  %v241 = vunpack.c.l.b16 %v73
  %v242 = vunpack.c.l.b16 %v74
  %v243 = vunpack.c.l.b16 %v75
  %v244 = vunpack.c.l.b16 %v76
  %v245 = vunpack.c.l.b16 %v77
  %v246 = vunpack.c.l.b16 %v78
  %v247 = vunpack.c.l.b16 %v79
  %v248 = vunpack.c.l.b16 %v80
  %v249 = vunpack.c.l.b16 %v81
  %v250 = vunpack.c.l.b16 %v82
  %v251 = vunpack.c.l.b16 %v83
  %v252 = vunpack.c.l.b16 %v84
  %v253 = vunpack.c.l.b16 %v85
  %v254 = vunpack.c.l.b16 %v86
  %v255 = vunpack.c.l.b16 %v87
  %v256 = vunpack.c.l.b16 %v88
  %v257 = vunpack.c.l.b16 %v89
  %v258 = vunpack.c.l.b16 %v90
  %v259 = vunpack.c.l.b16 %v91
  %v260 = vunpack.c.l.b16 %v92
  %v261 = vunpack.c.l.b16 %v93
  %v262 = vunpack.c.l.b16 %v94
  %v263 = vunpack.c.l.b16 %v95
  %v264 = vunpack.c.l.b16 %v96
  %v265 = vunpack.c.l.b16 %v97
  %v266 = vpack.c.b16 %v203, %v202
  %v267 = vpack.c.b16 %v205, %v204
  %v268 = vpack.c.b16 %v207, %v206
  %v269 = vpack.c.b16 %v209, %v208
  %v270 = vpack.c.b16 %v211, %v210
  %v271 = vpack.c.b16 %v213, %v212
  %v272 = vpack.c.b16 %v215, %v214
  %v273 = vpack.c.b16 %v217, %v216
  %v274 = vpack.c.b16 %v219, %v218
  %v275 = vpack.c.b16 %v221, %v220
  %v276 = vpack.c.b16 %v223, %v222
  %v277 = vpack.c.b16 %v225, %v224
  %v278 = vpack.c.b16 %v227, %v226
  %v279 = vpack.c.b16 %v229, %v228
  %v280 = vpack.c.b16 %v231, %v230
  %v281 = vpack.c.b16 %v233, %v232
  %v282 = vpack.c.b16 %v235, %v234
  %v283 = vpack.c.b16 %v237, %v236
  %v284 = vpack.c.b16 %v239, %v238
  %v285 = vpack.c.b16 %v241, %v240
  %v286 = vpack.c.b16 %v243, %v242
  %v287 = vpack.c.b16 %v245, %v244
  %v288 = vpack.c.b16 %v247, %v246
  %v289 = vpack.c.b16 %v249, %v248
  %v290 = vpack.c.b16 %v251, %v250
  %v291 = vpack.c.b16 %v253, %v252
  %v292 = vpack.c.b16 %v255, %v254
  %v293 = vpack.c.b16 %v257, %v256
  %v294 = vpack.c.b16 %v259, %v258
  %v295 = vpack.c.b16 %v261, %v260
  %v296 = vpack.c.b16 %v263, %v262
  %v297 = vpack.c.b16 %v265, %v264
  %330 = vmatpush.bf16.msra.mxu0 %v273
  %331 = vmatpush.bf16.msra.mxu0 %v272
  %332 = vmatpush.bf16.msra.mxu0 %v271
  %333 = vmatpush.bf16.msra.mxu0 %v270
  %334 = vmatpush.bf16.msra.mxu0 %v269
  %335 = vmatpush.bf16.msra.mxu0 %v268
  %336 = vmatpush.bf16.msra.mxu0 %v267
  %337 = vmatpush.bf16.msra.mxu0 %v266
  %338 = vmatmul.bf16.gmra.mxu0 %v122
  %v339 = vpop.f32.mrf.mxu0
  %v340 = vadd.f32 0.0, %v339
  %v341 = vpop.f32.mrf.mxu0
  %v342 = vadd.f32 0.0, %v341
  %343 = vmatmul.bf16.gmra.mxu0 %v126
  %v344 = vpop.f32.mrf.mxu0
  %v345 = vadd.f32 0.0, %v344
  %v346 = vpop.f32.mrf.mxu0
  %v347 = vadd.f32 0.0, %v346
  %348 = vdwg.mxu0
  %349 = vmatpush.bf16.msra.mxu0 %v281
  %350 = vmatpush.bf16.msra.mxu0 %v280
  %351 = vmatpush.bf16.msra.mxu0 %v279
  %352 = vmatpush.bf16.msra.mxu0 %v278
  %353 = vmatpush.bf16.msra.mxu0 %v277
  %354 = vmatpush.bf16.msra.mxu0 %v276
  %355 = vmatpush.bf16.msra.mxu0 %v275
  %356 = vmatpush.bf16.msra.mxu0 %v274
  %357 = vmatmul.bf16.gmra.mxu0 %v123
  %v358 = vpop.f32.mrf.mxu0
  %v359 = vadd.f32 %v340, %v358
  %v360 = vpop.f32.mrf.mxu0
  %v361 = vadd.f32 %v342, %v360
  %362 = vmatmul.bf16.gmra.mxu0 %v127
  %v363 = vpop.f32.mrf.mxu0
  %v364 = vadd.f32 %v345, %v363
  %v365 = vpop.f32.mrf.mxu0
  %v366 = vadd.f32 %v347, %v365
  %367 = vdwg.mxu0
  %368 = vmatpush.bf16.msra.mxu0 %v289
  %369 = vmatpush.bf16.msra.mxu0 %v288
  %370 = vmatpush.bf16.msra.mxu0 %v287
  %371 = vmatpush.bf16.msra.mxu0 %v286
  %372 = vmatpush.bf16.msra.mxu0 %v285
  %373 = vmatpush.bf16.msra.mxu0 %v284
  %374 = vmatpush.bf16.msra.mxu0 %v283
  %375 = vmatpush.bf16.msra.mxu0 %v282
  %376 = vmatmul.bf16.gmra.mxu0 %v124
  %v377 = vpop.f32.mrf.mxu0
  %v378 = vadd.f32 %v359, %v377
  %v379 = vpop.f32.mrf.mxu0
  %v380 = vadd.f32 %v361, %v379
  %381 = vmatmul.bf16.gmra.mxu0 %v128
  %v382 = vpop.f32.mrf.mxu0
  %v383 = vadd.f32 %v364, %v382
  %v384 = vpop.f32.mrf.mxu0
  %v385 = vadd.f32 %v366, %v384
  %386 = vdwg.mxu0
  %387 = vmatpush.bf16.msra.mxu0 %v297
  %388 = vmatpush.bf16.msra.mxu0 %v296
  %389 = vmatpush.bf16.msra.mxu0 %v295
  %390 = vmatpush.bf16.msra.mxu0 %v294
  %391 = vmatpush.bf16.msra.mxu0 %v293
  %392 = vmatpush.bf16.msra.mxu0 %v292
  %393 = vmatpush.bf16.msra.mxu0 %v291
  %394 = vmatpush.bf16.msra.mxu0 %v290
  %395 = vmatmul.bf16.gmra.mxu0 %v125
  %v396 = vpop.f32.mrf.mxu0
  %v397 = vadd.f32 %v378, %v396
  %v398 = vpop.f32.mrf.mxu0
  %v399 = vadd.f32 %v380, %v398
  %400 = vmatmul.bf16.gmra.mxu0 %v129
  %v401 = vpop.f32.mrf.mxu0
  %v402 = vadd.f32 %v383, %v401
  %v403 = vpop.f32.mrf.mxu0
  %v404 = vadd.f32 %v385, %v403
  %405 = vdwg.mxu0
  %v406 = vadd.f32 %v22, %v397
  %v407 = vadd.f32 %v23, %v399
  %v408 = vadd.f32 %v24, %v402
  %v409 = vadd.f32 %v25, %v404
  %410 = vst [vmem:[#allocation2] sm:$0xff] %v406
  %411 = vst [vmem:[#allocation2 + $0x8] sm:$0xff] %v407
  %412 = vst [vmem:[#allocation2 + $0x10] sm:$0xff] %v408
  %413 = vst [vmem:[#allocation2 + $0x18] sm:$0xff] %v409
  // Predicated region
  $region18: #{encoder_forward.7} parent=0 // pred_check
    %p414 = pneg %p14
  $region19: #{encoder_forward.7} parent=0 // pred_check_branch
    %416 = sbr.rel (%p414) target = $region21
  $region20: #{encoder_forward.7} parent=0 // pred_region
    %v417 = vld [vmem:[#allocation2] sm:$0xff]
    %v418 = vld [vmem:[#allocation2 + $0x8] sm:$0xff]
    %v419 = vld [vmem:[#allocation2 + $0x10] sm:$0xff]
    %v420 = vld [vmem:[#allocation2 + $0x18] sm:$0xff]
    %v421 = vld [vmem:[%s2] sm:$0x1]
    %v423 = vperm.slane %v421, 0
    %v425 = vadd.f32 %v417, %v423
    %v426 = vadd.f32 %v418, %v423
    %v427 = vadd.f32 %v419, %v423
    %v428 = vadd.f32 %v420, %v423
    %v429 = vmax.f32 %v425, 0.0
    %v430 = vmax.f32 %v426, 0.0
    %v431 = vmax.f32 %v427, 0.0
    %v432 = vmax.f32 %v428, 0.0
    %v433 = vpack.c.bf16 %v429, %v429
    %v434 = vpack.c.bf16 %v430, %v430
    %v435 = vpack.c.bf16 %v431, %v431
    %v436 = vpack.c.bf16 %v432, %v432
    %437 = vst [vmem:[%s3] sm:$0xf] %v433
    %438 = vst [vmem:[%s3 + $0x4] sm:$0xf] %v434
    %439 = vst [vmem:[%s3 + $0x8] sm:$0xf] %v435
    %440 = vst [vmem:[%s3 + $0xc] sm:$0xf] %v436
  $region21: #{encoder_forward.7} parent=0 // pred_fallthru
    _
  // Predicated region
  $region22: #{encoder_forward.7} parent=0 // pred_check
    _
  $region23: #{encoder_forward.7} parent=0 // pred_check_branch
    %442 = sbr.rel (0) target = $region25
  $region24: #{encoder_forward.7} parent=0 // pred_region
    _
  $region25: #{encoder_forward.7} parent=0 // pred_fallthru
    _
  // Predicated region
  $region26: #{encoder_forward.7} parent=0 // pred_check
    _
  $region27: #{encoder_forward.7} parent=0 // pred_check_branch
    %444 = sbr.rel (0) target = $region29
  $region28: #{encoder_forward.7} parent=0 // pred_region
    _
  $region29: #{encoder_forward.7} parent=0 // pred_fallthru
    _

</llo_original>
